<compile_context>
chip_gen: v7x
topology: tpu7x:2x2x1
jax: 0.10.0
libtpu: 0.0.40
codegen_flags: <defaults>
</compile_context>

<pallas_src>
import jax
import jax.numpy as jnp
import numpy as np
from jax.experimental import pallas as pl
from jax.experimental.pallas import tpu as pltpu

# Problem constants implied by the module (view(-1, 3*43*43) => 90x90 input).
H_IN = 90            # input spatial size
KH = 5               # conv kernel
OH = H_IN - KH + 1   # 86 conv output size
PH = OH // 2         # 43 pooled output size
NPIX = PH * PH       # 1849
C_OUT = 3
HALF = H_IN // 2     # 45 parity-plane size


def conv_pool_kernel(x_ref, w_ref, b_ref, o_ref):
    """x_ref: (4, 45, 45, B) VMEM parity planes (plane = 2*ra + rb,
              plane[p, q, i] == image[i, 2p+ra, 2q+rb]),
       w_ref: (75,) f32 SMEM (index c*25 + dy*5 + dx),
       b_ref: (3,)  f32 SMEM,
       o_ref: (3, 43, 43, B) VMEM."""
    # Hoist all scalar reads out of the per-row loop; Mosaic uses scalar-operand
    # vmul forms / CSEs the splats so they are not re-materialised per term.
    w = [[[w_ref[(c * KH + dy) * KH + dx] for dx in range(KH)]
          for dy in range(KH)] for c in range(C_OUT)]
    bias = [b_ref[c] for c in range(C_OUT)]

    @pl.loop(0, PH)                       # one pooled output row per iteration
    def _(p):
        pooled = [None] * C_OUT
        # (a, b) = position inside the 2x2 max-pool window.
        for a in range(2):
            for b in range(2):
                accs = [None] * C_OUT
                for dy in range(KH):
                    r = a + dy
                    sy, ra = r // 2, r % 2
                    for dx in range(KH):
                        s = b + dx
                        sx, rb = s // 2, s % 2
                        # Full-lane-width (43, B) slab; offsets only in the
                        # sublane axis (sx in {0,1,2}) and the row index.
                        win = x_ref[2 * ra + rb, p + sy, sx:sx + PH, :]
                        for c in range(C_OUT):
                            term = w[c][dy][dx] * win
                            accs[c] = term if accs[c] is None else accs[c] + term
                for c in range(C_OUT):
                    pooled[c] = (accs[c] if pooled[c] is None
                                 else jnp.maximum(pooled[c], accs[c]))
        # bias + relu commute with the pool max (per-channel constant bias).
        for c in range(C_OUT):
            o_ref[c, p, :, :] = jnp.maximum(pooled[c] + bias[c], 0.0)


def simple_cnn_forward(x, conv_w, conv_b, b_tile=None):
    """x: (N, 1, 90, 90) f32, conv_w: (3, 1, 5, 5), conv_b: (3,).
    Returns (N, 3*43*43) f32, matching torch's x.view(-1, 3*43*43)."""
    n = x.shape[0]
    if b_tile is None:
        # Lane-dense batch tiles: block minor dim must be a multiple of 128 or
        # the full array extent.  128-wide tiles also give >=2 grid steps for
        # large batches so both v7x TensorCores get work.
        b_tile = 128 if n >= 256 else n
    b_tile = max(1, min(b_tile, n))
    n_pad = -(-n // b_tile) * b_tile

    xs = x[:, 0].astype(jnp.float32)                      # (N, 90, 90)
    if n_pad != n:
        xs = jnp.pad(xs, ((0, n_pad - n), (0, 0), (0, 0)))

    # Raw-sized, lane-major parity regrouping:
    #   planes[2*ra+rb, p, q, i] = xs[i, 2p+ra, 2q+rb]
    planes = (xs.reshape(n_pad, HALF, 2, HALF, 2)
                .transpose(2, 4, 1, 3, 0)
                .reshape(4, HALF, HALF, n_pad))

    w_flat = conv_w.reshape(-1).astype(jnp.float32)       # (75,) c*25+dy*5+dx
    b_vec = conv_b.reshape(-1).astype(jnp.float32)        # (3,)

    out = pl.pallas_call(
        conv_pool_kernel,
        out_shape=jax.ShapeDtypeStruct((C_OUT, PH, PH, n_pad), jnp.float32),
        grid=(n_pad // b_tile,),
        in_specs=[
            pl.BlockSpec((4, HALF, HALF, b_tile), lambda i: (0, 0, 0, i)),
            pl.BlockSpec(memory_space=pltpu.MemorySpace.SMEM),   # weights
            pl.BlockSpec(memory_space=pltpu.MemorySpace.SMEM),   # bias
        ],
        out_specs=pl.BlockSpec((C_OUT, PH, PH, b_tile),
                               lambda i: (0, 0, 0, i)),
        compiler_params=pltpu.CompilerParams(
            dimension_semantics=("parallel",),
            vmem_limit_bytes=32 * 1024 * 1024),
    )(planes, w_flat, b_vec)

    # (3, 43, 43, N) -> (N, 3, 43, 43) -> (N, 3*43*43): channel-major flatten
    # == torch .view(-1, 3*43*43); one small lane->batch transpose in XLA.
    return jnp.transpose(out[..., :n], (3, 0, 1, 2)).reshape(n, C_OUT * NPIX)


def reference_forward(x, conv_w, conv_b):
    conv = jax.lax.conv_general_dilated(
        x, conv_w, window_strides=(1, 1), padding="VALID",
        dimension_numbers=("NCHW", "OIHW", "NCHW"),
        precision=jax.lax.Precision.HIGHEST)
    conv = conv + conv_b.reshape(1, C_OUT, 1, 1)
    act = jnp.maximum(conv, 0.0)
    pooled = jax.lax.reduce_window(
        act, -jnp.inf, jax.lax.max, (1, 1, 2, 2), (1, 1, 2, 2), "VALID")
    return pooled.reshape(x.shape[0], -1)


if __name__ == "__main__":
    key = jax.random.PRNGKey(0)
    kx, kw, kb = jax.random.split(key, 3)

    batch = 2
    x = jax.random.normal(kx, (batch, 1, H_IN, H_IN), dtype=jnp.float32)
    # Deterministic parameter init (shapes from nn.Conv2d(1, 3, 5)).
    fan_in = 1 * KH * KH
    bound = 1.0 / np.sqrt(fan_in)
    conv_w = jax.random.uniform(kw, (C_OUT, 1, KH, KH), jnp.float32,
                                minval=-bound, maxval=bound)
    conv_b = jax.random.uniform(kb, (C_OUT,), jnp.float32,
                                minval=-bound, maxval=bound)

    out = simple_cnn_forward(x, conv_w, conv_b)
    out = jax.block_until_ready(out)

    ref = jax.block_until_ready(reference_forward(x, conv_w, conv_b))
    assert out.shape == (batch, C_OUT * NPIX), out.shape
    np.testing.assert_allclose(np.asarray(out), np.asarray(ref),
                               rtol=1e-4, atol=1e-4)
    print("KERNEL_OK")
</pallas_src>

<mosaic_0001>
module attributes {stable_mosaic.version = 11 : i64} {
  func.func @conv_pool_kernel(%arg0: i32, %arg1: memref<4x45x45x2xf32, #tpu.memory_space<vmem>>, %arg2: memref<75xf32, #tpu.memory_space<smem>>, %arg3: memref<3xf32, #tpu.memory_space<smem>>, %arg4: memref<3x43x43x2xf32, #tpu.memory_space<vmem>>) attributes {dimension_semantics = [#tpu.dimension_semantics<parallel>], iteration_bounds = array<i64: 1>, scalar_prefetch = 0 : i64, scratch_operands = 0 : i64, tpu.core_type = #tpu.core_type<tc>, window_params = [{transform_indices = @transform_0, window_bounds = array<i64: 4, 45, 45, 2>}, {transform_indices = @transform_1, window_bounds = array<i64: 75>}, {transform_indices = @transform_2, window_bounds = array<i64: 3>}, {transform_indices = @transform_3, window_bounds = array<i64: 3, 43, 43, 2>}]} {
    %c0 = arith.constant 0 : index
    %0 = memref.load %arg2[%c0] : memref<75xf32, #tpu.memory_space<smem>>
    %c1 = arith.constant 1 : index
    %1 = memref.load %arg2[%c1] : memref<75xf32, #tpu.memory_space<smem>>
    %c2 = arith.constant 2 : index
    %2 = memref.load %arg2[%c2] : memref<75xf32, #tpu.memory_space<smem>>
    %c3 = arith.constant 3 : index
    %3 = memref.load %arg2[%c3] : memref<75xf32, #tpu.memory_space<smem>>
    %c4 = arith.constant 4 : index
    %4 = memref.load %arg2[%c4] : memref<75xf32, #tpu.memory_space<smem>>
    %c5 = arith.constant 5 : index
    %5 = memref.load %arg2[%c5] : memref<75xf32, #tpu.memory_space<smem>>
    %c6 = arith.constant 6 : index
    %6 = memref.load %arg2[%c6] : memref<75xf32, #tpu.memory_space<smem>>
    %c7 = arith.constant 7 : index
    %7 = memref.load %arg2[%c7] : memref<75xf32, #tpu.memory_space<smem>>
    %c8 = arith.constant 8 : index
    %8 = memref.load %arg2[%c8] : memref<75xf32, #tpu.memory_space<smem>>
    %c9 = arith.constant 9 : index
    %9 = memref.load %arg2[%c9] : memref<75xf32, #tpu.memory_space<smem>>
    %c10 = arith.constant 10 : index
    %10 = memref.load %arg2[%c10] : memref<75xf32, #tpu.memory_space<smem>>
    %c11 = arith.constant 11 : index
    %11 = memref.load %arg2[%c11] : memref<75xf32, #tpu.memory_space<smem>>
    %c12 = arith.constant 12 : index
    %12 = memref.load %arg2[%c12] : memref<75xf32, #tpu.memory_space<smem>>
    %c13 = arith.constant 13 : index
    %13 = memref.load %arg2[%c13] : memref<75xf32, #tpu.memory_space<smem>>
    %c14 = arith.constant 14 : index
    %14 = memref.load %arg2[%c14] : memref<75xf32, #tpu.memory_space<smem>>
    %c15 = arith.constant 15 : index
    %15 = memref.load %arg2[%c15] : memref<75xf32, #tpu.memory_space<smem>>
    %c16 = arith.constant 16 : index
    %16 = memref.load %arg2[%c16] : memref<75xf32, #tpu.memory_space<smem>>
    %c17 = arith.constant 17 : index
    %17 = memref.load %arg2[%c17] : memref<75xf32, #tpu.memory_space<smem>>
    %c18 = arith.constant 18 : index
    %18 = memref.load %arg2[%c18] : memref<75xf32, #tpu.memory_space<smem>>
    %c19 = arith.constant 19 : index
    %19 = memref.load %arg2[%c19] : memref<75xf32, #tpu.memory_space<smem>>
    %c20 = arith.constant 20 : index
    %20 = memref.load %arg2[%c20] : memref<75xf32, #tpu.memory_space<smem>>
    %c21 = arith.constant 21 : index
    %21 = memref.load %arg2[%c21] : memref<75xf32, #tpu.memory_space<smem>>
    %c22 = arith.constant 22 : index
    %22 = memref.load %arg2[%c22] : memref<75xf32, #tpu.memory_space<smem>>
    %c23 = arith.constant 23 : index
    %23 = memref.load %arg2[%c23] : memref<75xf32, #tpu.memory_space<smem>>
    %c24 = arith.constant 24 : index
    %24 = memref.load %arg2[%c24] : memref<75xf32, #tpu.memory_space<smem>>
    %c25 = arith.constant 25 : index
    %25 = memref.load %arg2[%c25] : memref<75xf32, #tpu.memory_space<smem>>
    %c26 = arith.constant 26 : index
    %26 = memref.load %arg2[%c26] : memref<75xf32, #tpu.memory_space<smem>>
    %c27 = arith.constant 27 : index
    %27 = memref.load %arg2[%c27] : memref<75xf32, #tpu.memory_space<smem>>
    %c28 = arith.constant 28 : index
    %28 = memref.load %arg2[%c28] : memref<75xf32, #tpu.memory_space<smem>>
    %c29 = arith.constant 29 : index
    %29 = memref.load %arg2[%c29] : memref<75xf32, #tpu.memory_space<smem>>
    %c30 = arith.constant 30 : index
    %30 = memref.load %arg2[%c30] : memref<75xf32, #tpu.memory_space<smem>>
    %c31 = arith.constant 31 : index
    %31 = memref.load %arg2[%c31] : memref<75xf32, #tpu.memory_space<smem>>
    %c32 = arith.constant 32 : index
    %32 = memref.load %arg2[%c32] : memref<75xf32, #tpu.memory_space<smem>>
    %c33 = arith.constant 33 : index
    %33 = memref.load %arg2[%c33] : memref<75xf32, #tpu.memory_space<smem>>
    %c34 = arith.constant 34 : index
    %34 = memref.load %arg2[%c34] : memref<75xf32, #tpu.memory_space<smem>>
    %c35 = arith.constant 35 : index
    %35 = memref.load %arg2[%c35] : memref<75xf32, #tpu.memory_space<smem>>
    %c36 = arith.constant 36 : index
    %36 = memref.load %arg2[%c36] : memref<75xf32, #tpu.memory_space<smem>>
    %c37 = arith.constant 37 : index
    %37 = memref.load %arg2[%c37] : memref<75xf32, #tpu.memory_space<smem>>
    %c38 = arith.constant 38 : index
    %38 = memref.load %arg2[%c38] : memref<75xf32, #tpu.memory_space<smem>>
    %c39 = arith.constant 39 : index
    %39 = memref.load %arg2[%c39] : memref<75xf32, #tpu.memory_space<smem>>
    %c40 = arith.constant 40 : index
    %40 = memref.load %arg2[%c40] : memref<75xf32, #tpu.memory_space<smem>>
    %c41 = arith.constant 41 : index
    %41 = memref.load %arg2[%c41] : memref<75xf32, #tpu.memory_space<smem>>
    %c42 = arith.constant 42 : index
    %42 = memref.load %arg2[%c42] : memref<75xf32, #tpu.memory_space<smem>>
    %c43 = arith.constant 43 : index
    %43 = memref.load %arg2[%c43] : memref<75xf32, #tpu.memory_space<smem>>
    %c44 = arith.constant 44 : index
    %44 = memref.load %arg2[%c44] : memref<75xf32, #tpu.memory_space<smem>>
    %c45 = arith.constant 45 : index
    %45 = memref.load %arg2[%c45] : memref<75xf32, #tpu.memory_space<smem>>
    %c46 = arith.constant 46 : index
    %46 = memref.load %arg2[%c46] : memref<75xf32, #tpu.memory_space<smem>>
    %c47 = arith.constant 47 : index
    %47 = memref.load %arg2[%c47] : memref<75xf32, #tpu.memory_space<smem>>
    %c48 = arith.constant 48 : index
    %48 = memref.load %arg2[%c48] : memref<75xf32, #tpu.memory_space<smem>>
    %c49 = arith.constant 49 : index
    %49 = memref.load %arg2[%c49] : memref<75xf32, #tpu.memory_space<smem>>
    %c50 = arith.constant 50 : index
    %50 = memref.load %arg2[%c50] : memref<75xf32, #tpu.memory_space<smem>>
    %c51 = arith.constant 51 : index
    %51 = memref.load %arg2[%c51] : memref<75xf32, #tpu.memory_space<smem>>
    %c52 = arith.constant 52 : index
    %52 = memref.load %arg2[%c52] : memref<75xf32, #tpu.memory_space<smem>>
    %c53 = arith.constant 53 : index
    %53 = memref.load %arg2[%c53] : memref<75xf32, #tpu.memory_space<smem>>
    %c54 = arith.constant 54 : index
    %54 = memref.load %arg2[%c54] : memref<75xf32, #tpu.memory_space<smem>>
    %c55 = arith.constant 55 : index
    %55 = memref.load %arg2[%c55] : memref<75xf32, #tpu.memory_space<smem>>
    %c56 = arith.constant 56 : index
    %56 = memref.load %arg2[%c56] : memref<75xf32, #tpu.memory_space<smem>>
    %c57 = arith.constant 57 : index
    %57 = memref.load %arg2[%c57] : memref<75xf32, #tpu.memory_space<smem>>
    %c58 = arith.constant 58 : index
    %58 = memref.load %arg2[%c58] : memref<75xf32, #tpu.memory_space<smem>>
    %c59 = arith.constant 59 : index
    %59 = memref.load %arg2[%c59] : memref<75xf32, #tpu.memory_space<smem>>
    %c60 = arith.constant 60 : index
    %60 = memref.load %arg2[%c60] : memref<75xf32, #tpu.memory_space<smem>>
    %c61 = arith.constant 61 : index
    %61 = memref.load %arg2[%c61] : memref<75xf32, #tpu.memory_space<smem>>
    %c62 = arith.constant 62 : index
    %62 = memref.load %arg2[%c62] : memref<75xf32, #tpu.memory_space<smem>>
    %c63 = arith.constant 63 : index
    %63 = memref.load %arg2[%c63] : memref<75xf32, #tpu.memory_space<smem>>
    %c64 = arith.constant 64 : index
    %64 = memref.load %arg2[%c64] : memref<75xf32, #tpu.memory_space<smem>>
    %c65 = arith.constant 65 : index
    %65 = memref.load %arg2[%c65] : memref<75xf32, #tpu.memory_space<smem>>
    %c66 = arith.constant 66 : index
    %66 = memref.load %arg2[%c66] : memref<75xf32, #tpu.memory_space<smem>>
    %c67 = arith.constant 67 : index
    %67 = memref.load %arg2[%c67] : memref<75xf32, #tpu.memory_space<smem>>
    %c68 = arith.constant 68 : index
    %68 = memref.load %arg2[%c68] : memref<75xf32, #tpu.memory_space<smem>>
    %c69 = arith.constant 69 : index
    %69 = memref.load %arg2[%c69] : memref<75xf32, #tpu.memory_space<smem>>
    %c70 = arith.constant 70 : index
    %70 = memref.load %arg2[%c70] : memref<75xf32, #tpu.memory_space<smem>>
    %c71 = arith.constant 71 : index
    %71 = memref.load %arg2[%c71] : memref<75xf32, #tpu.memory_space<smem>>
    %c72 = arith.constant 72 : index
    %72 = memref.load %arg2[%c72] : memref<75xf32, #tpu.memory_space<smem>>
    %c73 = arith.constant 73 : index
    %73 = memref.load %arg2[%c73] : memref<75xf32, #tpu.memory_space<smem>>
    %c74 = arith.constant 74 : index
    %74 = memref.load %arg2[%c74] : memref<75xf32, #tpu.memory_space<smem>>
    %c0_0 = arith.constant 0 : index
    %75 = memref.load %arg3[%c0_0] : memref<3xf32, #tpu.memory_space<smem>>
    %c1_1 = arith.constant 1 : index
    %76 = memref.load %arg3[%c1_1] : memref<3xf32, #tpu.memory_space<smem>>
    %c2_2 = arith.constant 2 : index
    %77 = memref.load %arg3[%c2_2] : memref<3xf32, #tpu.memory_space<smem>>
    %c0_i32 = arith.constant 0 : i32
    %c43_i32 = arith.constant 43 : i32
    %78 = arith.addi %c0_i32, %c43_i32 : i32
    %c1_i32 = arith.constant 1 : i32
    scf.for %arg5 = %c0_i32 to %78 step %c1_i32  : i32 {
      %c1_i32_4 = arith.constant 1 : i32
      %79 = arith.muli %arg5, %c1_i32_4 : i32
      %c0_i32_5 = arith.constant 0 : i32
      %80 = arith.addi %c0_i32_5, %79 : i32
      %c0_i32_6 = arith.constant 0 : i32
      %81 = arith.addi %80, %c0_i32_6 : i32
      %c0_7 = arith.constant 0 : index
      %82 = arith.index_cast %81 : i32 to index
      %c0_8 = arith.constant 0 : index
      %c0_9 = arith.constant 0 : index
      %83 = vector.load %arg1[%c0_7, %82, %c0_8, %c0_9] : memref<4x45x45x2xf32, #tpu.memory_space<vmem>>, vector<1x1x43x2xf32>
      %84 = vector.shape_cast %83 : vector<1x1x43x2xf32> to vector<43x2xf32>
      %85 = vector.broadcast %0 : f32 to vector<43x2xf32>
      %86 = arith.mulf %85, %84 : vector<43x2xf32>
      %87 = vector.broadcast %25 : f32 to vector<43x2xf32>
      %88 = arith.mulf %87, %84 : vector<43x2xf32>
      %89 = vector.broadcast %50 : f32 to vector<43x2xf32>
      %90 = arith.mulf %89, %84 : vector<43x2xf32>
      %c0_i32_10 = arith.constant 0 : i32
      %91 = arith.addi %80, %c0_i32_10 : i32
      %c1_11 = arith.constant 1 : index
      %92 = arith.index_cast %91 : i32 to index
      %c0_12 = arith.constant 0 : index
      %c0_13 = arith.constant 0 : index
      %93 = vector.load %arg1[%c1_11, %92, %c0_12, %c0_13] : memref<4x45x45x2xf32, #tpu.memory_space<vmem>>, vector<1x1x43x2xf32>
      %94 = vector.shape_cast %93 : vector<1x1x43x2xf32> to vector<43x2xf32>
      %95 = vector.broadcast %1 : f32 to vector<43x2xf32>
      %96 = arith.mulf %95, %94 : vector<43x2xf32>
      %97 = arith.addf %86, %96 : vector<43x2xf32>
      %98 = vector.broadcast %26 : f32 to vector<43x2xf32>
      %99 = arith.mulf %98, %94 : vector<43x2xf32>
      %100 = arith.addf %88, %99 : vector<43x2xf32>
      %101 = vector.broadcast %51 : f32 to vector<43x2xf32>
      %102 = arith.mulf %101, %94 : vector<43x2xf32>
      %103 = arith.addf %90, %102 : vector<43x2xf32>
      %c0_i32_14 = arith.constant 0 : i32
      %104 = arith.addi %80, %c0_i32_14 : i32
      %c0_15 = arith.constant 0 : index
      %105 = arith.index_cast %104 : i32 to index
      %c1_16 = arith.constant 1 : index
      %c0_17 = arith.constant 0 : index
      %106 = vector.load %arg1[%c0_15, %105, %c1_16, %c0_17] : memref<4x45x45x2xf32, #tpu.memory_space<vmem>>, vector<1x1x43x2xf32>
      %107 = vector.shape_cast %106 : vector<1x1x43x2xf32> to vector<43x2xf32>
      %108 = vector.broadcast %2 : f32 to vector<43x2xf32>
      %109 = arith.mulf %108, %107 : vector<43x2xf32>
      %110 = arith.addf %97, %109 : vector<43x2xf32>
      %111 = vector.broadcast %27 : f32 to vector<43x2xf32>
      %112 = arith.mulf %111, %107 : vector<43x2xf32>
      %113 = arith.addf %100, %112 : vector<43x2xf32>
      %114 = vector.broadcast %52 : f32 to vector<43x2xf32>
      %115 = arith.mulf %114, %107 : vector<43x2xf32>
      %116 = arith.addf %103, %115 : vector<43x2xf32>
      %c0_i32_18 = arith.constant 0 : i32
      %117 = arith.addi %80, %c0_i32_18 : i32
      %c1_19 = arith.constant 1 : index
      %118 = arith.index_cast %117 : i32 to index
      %c1_20 = arith.constant 1 : index
      %c0_21 = arith.constant 0 : index
      %119 = vector.load %arg1[%c1_19, %118, %c1_20, %c0_21] : memref<4x45x45x2xf32, #tpu.memory_space<vmem>>, vector<1x1x43x2xf32>
      %120 = vector.shape_cast %119 : vector<1x1x43x2xf32> to vector<43x2xf32>
      %121 = vector.broadcast %3 : f32 to vector<43x2xf32>
      %122 = arith.mulf %121, %120 : vector<43x2xf32>
      %123 = arith.addf %110, %122 : vector<43x2xf32>
      %124 = vector.broadcast %28 : f32 to vector<43x2xf32>
      %125 = arith.mulf %124, %120 : vector<43x2xf32>
      %126 = arith.addf %113, %125 : vector<43x2xf32>
      %127 = vector.broadcast %53 : f32 to vector<43x2xf32>
      %128 = arith.mulf %127, %120 : vector<43x2xf32>
      %129 = arith.addf %116, %128 : vector<43x2xf32>
      %c0_i32_22 = arith.constant 0 : i32
      %130 = arith.addi %80, %c0_i32_22 : i32
      %c0_23 = arith.constant 0 : index
      %131 = arith.index_cast %130 : i32 to index
      %c2_24 = arith.constant 2 : index
      %c0_25 = arith.constant 0 : index
      %132 = vector.load %arg1[%c0_23, %131, %c2_24, %c0_25] : memref<4x45x45x2xf32, #tpu.memory_space<vmem>>, vector<1x1x43x2xf32>
      %133 = vector.shape_cast %132 : vector<1x1x43x2xf32> to vector<43x2xf32>
      %134 = vector.broadcast %4 : f32 to vector<43x2xf32>
      %135 = arith.mulf %134, %133 : vector<43x2xf32>
      %136 = arith.addf %123, %135 : vector<43x2xf32>
      %137 = vector.broadcast %29 : f32 to vector<43x2xf32>
      %138 = arith.mulf %137, %133 : vector<43x2xf32>
      %139 = arith.addf %126, %138 : vector<43x2xf32>
      %140 = vector.broadcast %54 : f32 to vector<43x2xf32>
      %141 = arith.mulf %140, %133 : vector<43x2xf32>
      %142 = arith.addf %129, %141 : vector<43x2xf32>
      %c0_i32_26 = arith.constant 0 : i32
      %143 = arith.addi %80, %c0_i32_26 : i32
      %c2_27 = arith.constant 2 : index
      %144 = arith.index_cast %143 : i32 to index
      %c0_28 = arith.constant 0 : index
      %c0_29 = arith.constant 0 : index
      %145 = vector.load %arg1[%c2_27, %144, %c0_28, %c0_29] : memref<4x45x45x2xf32, #tpu.memory_space<vmem>>, vector<1x1x43x2xf32>
      %146 = vector.shape_cast %145 : vector<1x1x43x2xf32> to vector<43x2xf32>
      %147 = vector.broadcast %5 : f32 to vector<43x2xf32>
      %148 = arith.mulf %147, %146 : vector<43x2xf32>
      %149 = arith.addf %136, %148 : vector<43x2xf32>
      %150 = vector.broadcast %30 : f32 to vector<43x2xf32>
      %151 = arith.mulf %150, %146 : vector<43x2xf32>
      %152 = arith.addf %139, %151 : vector<43x2xf32>
      %153 = vector.broadcast %55 : f32 to vector<43x2xf32>
      %154 = arith.mulf %153, %146 : vector<43x2xf32>
      %155 = arith.addf %142, %154 : vector<43x2xf32>
      %c0_i32_30 = arith.constant 0 : i32
      %156 = arith.addi %80, %c0_i32_30 : i32
      %c3_31 = arith.constant 3 : index
      %157 = arith.index_cast %156 : i32 to index
      %c0_32 = arith.constant 0 : index
      %c0_33 = arith.constant 0 : index
      %158 = vector.load %arg1[%c3_31, %157, %c0_32, %c0_33] : memref<4x45x45x2xf32, #tpu.memory_space<vmem>>, vector<1x1x43x2xf32>
      %159 = vector.shape_cast %158 : vector<1x1x43x2xf32> to vector<43x2xf32>
      %160 = vector.broadcast %6 : f32 to vector<43x2xf32>
      %161 = arith.mulf %160, %159 : vector<43x2xf32>
      %162 = arith.addf %149, %161 : vector<43x2xf32>
      %163 = vector.broadcast %31 : f32 to vector<43x2xf32>
      %164 = arith.mulf %163, %159 : vector<43x2xf32>
      %165 = arith.addf %152, %164 : vector<43x2xf32>
      %166 = vector.broadcast %56 : f32 to vector<43x2xf32>
      %167 = arith.mulf %166, %159 : vector<43x2xf32>
      %168 = arith.addf %155, %167 : vector<43x2xf32>
      %c0_i32_34 = arith.constant 0 : i32
      %169 = arith.addi %80, %c0_i32_34 : i32
      %c2_35 = arith.constant 2 : index
      %170 = arith.index_cast %169 : i32 to index
      %c1_36 = arith.constant 1 : index
      %c0_37 = arith.constant 0 : index
      %171 = vector.load %arg1[%c2_35, %170, %c1_36, %c0_37] : memref<4x45x45x2xf32, #tpu.memory_space<vmem>>, vector<1x1x43x2xf32>
      %172 = vector.shape_cast %171 : vector<1x1x43x2xf32> to vector<43x2xf32>
      %173 = vector.broadcast %7 : f32 to vector<43x2xf32>
      %174 = arith.mulf %173, %172 : vector<43x2xf32>
      %175 = arith.addf %162, %174 : vector<43x2xf32>
      %176 = vector.broadcast %32 : f32 to vector<43x2xf32>
      %177 = arith.mulf %176, %172 : vector<43x2xf32>
      %178 = arith.addf %165, %177 : vector<43x2xf32>
      %179 = vector.broadcast %57 : f32 to vector<43x2xf32>
      %180 = arith.mulf %179, %172 : vector<43x2xf32>
      %181 = arith.addf %168, %180 : vector<43x2xf32>
      %c0_i32_38 = arith.constant 0 : i32
      %182 = arith.addi %80, %c0_i32_38 : i32
      %c3_39 = arith.constant 3 : index
      %183 = arith.index_cast %182 : i32 to index
      %c1_40 = arith.constant 1 : index
      %c0_41 = arith.constant 0 : index
      %184 = vector.load %arg1[%c3_39, %183, %c1_40, %c0_41] : memref<4x45x45x2xf32, #tpu.memory_space<vmem>>, vector<1x1x43x2xf32>
      %185 = vector.shape_cast %184 : vector<1x1x43x2xf32> to vector<43x2xf32>
      %186 = vector.broadcast %8 : f32 to vector<43x2xf32>
      %187 = arith.mulf %186, %185 : vector<43x2xf32>
      %188 = arith.addf %175, %187 : vector<43x2xf32>
      %189 = vector.broadcast %33 : f32 to vector<43x2xf32>
      %190 = arith.mulf %189, %185 : vector<43x2xf32>
      %191 = arith.addf %178, %190 : vector<43x2xf32>
      %192 = vector.broadcast %58 : f32 to vector<43x2xf32>
      %193 = arith.mulf %192, %185 : vector<43x2xf32>
      %194 = arith.addf %181, %193 : vector<43x2xf32>
      %c0_i32_42 = arith.constant 0 : i32
      %195 = arith.addi %80, %c0_i32_42 : i32
      %c2_43 = arith.constant 2 : index
      %196 = arith.index_cast %195 : i32 to index
      %c2_44 = arith.constant 2 : index
      %c0_45 = arith.constant 0 : index
      %197 = vector.load %arg1[%c2_43, %196, %c2_44, %c0_45] : memref<4x45x45x2xf32, #tpu.memory_space<vmem>>, vector<1x1x43x2xf32>
      %198 = vector.shape_cast %197 : vector<1x1x43x2xf32> to vector<43x2xf32>
      %199 = vector.broadcast %9 : f32 to vector<43x2xf32>
      %200 = arith.mulf %199, %198 : vector<43x2xf32>
      %201 = arith.addf %188, %200 : vector<43x2xf32>
      %202 = vector.broadcast %34 : f32 to vector<43x2xf32>
      %203 = arith.mulf %202, %198 : vector<43x2xf32>
      %204 = arith.addf %191, %203 : vector<43x2xf32>
      %205 = vector.broadcast %59 : f32 to vector<43x2xf32>
      %206 = arith.mulf %205, %198 : vector<43x2xf32>
      %207 = arith.addf %194, %206 : vector<43x2xf32>
      %c1_i32_46 = arith.constant 1 : i32
      %208 = arith.addi %80, %c1_i32_46 : i32
      %c0_47 = arith.constant 0 : index
      %209 = arith.index_cast %208 : i32 to index
      %c0_48 = arith.constant 0 : index
      %c0_49 = arith.constant 0 : index
      %210 = vector.load %arg1[%c0_47, %209, %c0_48, %c0_49] : memref<4x45x45x2xf32, #tpu.memory_space<vmem>>, vector<1x1x43x2xf32>
      %211 = vector.shape_cast %210 : vector<1x1x43x2xf32> to vector<43x2xf32>
      %212 = vector.broadcast %10 : f32 to vector<43x2xf32>
      %213 = arith.mulf %212, %211 : vector<43x2xf32>
      %214 = arith.addf %201, %213 : vector<43x2xf32>
      %215 = vector.broadcast %35 : f32 to vector<43x2xf32>
      %216 = arith.mulf %215, %211 : vector<43x2xf32>
      %217 = arith.addf %204, %216 : vector<43x2xf32>
      %218 = vector.broadcast %60 : f32 to vector<43x2xf32>
      %219 = arith.mulf %218, %211 : vector<43x2xf32>
      %220 = arith.addf %207, %219 : vector<43x2xf32>
      %c1_i32_50 = arith.constant 1 : i32
      %221 = arith.addi %80, %c1_i32_50 : i32
      %c1_51 = arith.constant 1 : index
      %222 = arith.index_cast %221 : i32 to index
      %c0_52 = arith.constant 0 : index
      %c0_53 = arith.constant 0 : index
      %223 = vector.load %arg1[%c1_51, %222, %c0_52, %c0_53] : memref<4x45x45x2xf32, #tpu.memory_space<vmem>>, vector<1x1x43x2xf32>
      %224 = vector.shape_cast %223 : vector<1x1x43x2xf32> to vector<43x2xf32>
      %225 = vector.broadcast %11 : f32 to vector<43x2xf32>
      %226 = arith.mulf %225, %224 : vector<43x2xf32>
      %227 = arith.addf %214, %226 : vector<43x2xf32>
      %228 = vector.broadcast %36 : f32 to vector<43x2xf32>
      %229 = arith.mulf %228, %224 : vector<43x2xf32>
      %230 = arith.addf %217, %229 : vector<43x2xf32>
      %231 = vector.broadcast %61 : f32 to vector<43x2xf32>
      %232 = arith.mulf %231, %224 : vector<43x2xf32>
      %233 = arith.addf %220, %232 : vector<43x2xf32>
      %c1_i32_54 = arith.constant 1 : i32
      %234 = arith.addi %80, %c1_i32_54 : i32
      %c0_55 = arith.constant 0 : index
      %235 = arith.index_cast %234 : i32 to index
      %c1_56 = arith.constant 1 : index
      %c0_57 = arith.constant 0 : index
      %236 = vector.load %arg1[%c0_55, %235, %c1_56, %c0_57] : memref<4x45x45x2xf32, #tpu.memory_space<vmem>>, vector<1x1x43x2xf32>
      %237 = vector.shape_cast %236 : vector<1x1x43x2xf32> to vector<43x2xf32>
      %238 = vector.broadcast %12 : f32 to vector<43x2xf32>
      %239 = arith.mulf %238, %237 : vector<43x2xf32>
      %240 = arith.addf %227, %239 : vector<43x2xf32>
      %241 = vector.broadcast %37 : f32 to vector<43x2xf32>
      %242 = arith.mulf %241, %237 : vector<43x2xf32>
      %243 = arith.addf %230, %242 : vector<43x2xf32>
      %244 = vector.broadcast %62 : f32 to vector<43x2xf32>
      %245 = arith.mulf %244, %237 : vector<43x2xf32>
      %246 = arith.addf %233, %245 : vector<43x2xf32>
      %c1_i32_58 = arith.constant 1 : i32
      %247 = arith.addi %80, %c1_i32_58 : i32
      %c1_59 = arith.constant 1 : index
      %248 = arith.index_cast %247 : i32 to index
      %c1_60 = arith.constant 1 : index
      %c0_61 = arith.constant 0 : index
      %249 = vector.load %arg1[%c1_59, %248, %c1_60, %c0_61] : memref<4x45x45x2xf32, #tpu.memory_space<vmem>>, vector<1x1x43x2xf32>
      %250 = vector.shape_cast %249 : vector<1x1x43x2xf32> to vector<43x2xf32>
      %251 = vector.broadcast %13 : f32 to vector<43x2xf32>
      %252 = arith.mulf %251, %250 : vector<43x2xf32>
      %253 = arith.addf %240, %252 : vector<43x2xf32>
      %254 = vector.broadcast %38 : f32 to vector<43x2xf32>
      %255 = arith.mulf %254, %250 : vector<43x2xf32>
      %256 = arith.addf %243, %255 : vector<43x2xf32>
      %257 = vector.broadcast %63 : f32 to vector<43x2xf32>
      %258 = arith.mulf %257, %250 : vector<43x2xf32>
      %259 = arith.addf %246, %258 : vector<43x2xf32>
      %c1_i32_62 = arith.constant 1 : i32
      %260 = arith.addi %80, %c1_i32_62 : i32
      %c0_63 = arith.constant 0 : index
      %261 = arith.index_cast %260 : i32 to index
      %c2_64 = arith.constant 2 : index
      %c0_65 = arith.constant 0 : index
      %262 = vector.load %arg1[%c0_63, %261, %c2_64, %c0_65] : memref<4x45x45x2xf32, #tpu.memory_space<vmem>>, vector<1x1x43x2xf32>
      %263 = vector.shape_cast %262 : vector<1x1x43x2xf32> to vector<43x2xf32>
      %264 = vector.broadcast %14 : f32 to vector<43x2xf32>
      %265 = arith.mulf %264, %263 : vector<43x2xf32>
      %266 = arith.addf %253, %265 : vector<43x2xf32>
      %267 = vector.broadcast %39 : f32 to vector<43x2xf32>
      %268 = arith.mulf %267, %263 : vector<43x2xf32>
      %269 = arith.addf %256, %268 : vector<43x2xf32>
      %270 = vector.broadcast %64 : f32 to vector<43x2xf32>
      %271 = arith.mulf %270, %263 : vector<43x2xf32>
      %272 = arith.addf %259, %271 : vector<43x2xf32>
      %c1_i32_66 = arith.constant 1 : i32
      %273 = arith.addi %80, %c1_i32_66 : i32
      %c2_67 = arith.constant 2 : index
      %274 = arith.index_cast %273 : i32 to index
      %c0_68 = arith.constant 0 : index
      %c0_69 = arith.constant 0 : index
      %275 = vector.load %arg1[%c2_67, %274, %c0_68, %c0_69] : memref<4x45x45x2xf32, #tpu.memory_space<vmem>>, vector<1x1x43x2xf32>
      %276 = vector.shape_cast %275 : vector<1x1x43x2xf32> to vector<43x2xf32>
      %277 = vector.broadcast %15 : f32 to vector<43x2xf32>
      %278 = arith.mulf %277, %276 : vector<43x2xf32>
      %279 = arith.addf %266, %278 : vector<43x2xf32>
      %280 = vector.broadcast %40 : f32 to vector<43x2xf32>
      %281 = arith.mulf %280, %276 : vector<43x2xf32>
      %282 = arith.addf %269, %281 : vector<43x2xf32>
      %283 = vector.broadcast %65 : f32 to vector<43x2xf32>
      %284 = arith.mulf %283, %276 : vector<43x2xf32>
      %285 = arith.addf %272, %284 : vector<43x2xf32>
      %c1_i32_70 = arith.constant 1 : i32
      %286 = arith.addi %80, %c1_i32_70 : i32
      %c3_71 = arith.constant 3 : index
      %287 = arith.index_cast %286 : i32 to index
      %c0_72 = arith.constant 0 : index
      %c0_73 = arith.constant 0 : index
      %288 = vector.load %arg1[%c3_71, %287, %c0_72, %c0_73] : memref<4x45x45x2xf32, #tpu.memory_space<vmem>>, vector<1x1x43x2xf32>
      %289 = vector.shape_cast %288 : vector<1x1x43x2xf32> to vector<43x2xf32>
      %290 = vector.broadcast %16 : f32 to vector<43x2xf32>
      %291 = arith.mulf %290, %289 : vector<43x2xf32>
      %292 = arith.addf %279, %291 : vector<43x2xf32>
      %293 = vector.broadcast %41 : f32 to vector<43x2xf32>
      %294 = arith.mulf %293, %289 : vector<43x2xf32>
      %295 = arith.addf %282, %294 : vector<43x2xf32>
      %296 = vector.broadcast %66 : f32 to vector<43x2xf32>
      %297 = arith.mulf %296, %289 : vector<43x2xf32>
      %298 = arith.addf %285, %297 : vector<43x2xf32>
      %c1_i32_74 = arith.constant 1 : i32
      %299 = arith.addi %80, %c1_i32_74 : i32
      %c2_75 = arith.constant 2 : index
      %300 = arith.index_cast %299 : i32 to index
      %c1_76 = arith.constant 1 : index
      %c0_77 = arith.constant 0 : index
      %301 = vector.load %arg1[%c2_75, %300, %c1_76, %c0_77] : memref<4x45x45x2xf32, #tpu.memory_space<vmem>>, vector<1x1x43x2xf32>
      %302 = vector.shape_cast %301 : vector<1x1x43x2xf32> to vector<43x2xf32>
      %303 = vector.broadcast %17 : f32 to vector<43x2xf32>
      %304 = arith.mulf %303, %302 : vector<43x2xf32>
      %305 = arith.addf %292, %304 : vector<43x2xf32>
      %306 = vector.broadcast %42 : f32 to vector<43x2xf32>
      %307 = arith.mulf %306, %302 : vector<43x2xf32>
      %308 = arith.addf %295, %307 : vector<43x2xf32>
      %309 = vector.broadcast %67 : f32 to vector<43x2xf32>
      %310 = arith.mulf %309, %302 : vector<43x2xf32>
      %311 = arith.addf %298, %310 : vector<43x2xf32>
      %c1_i32_78 = arith.constant 1 : i32
      %312 = arith.addi %80, %c1_i32_78 : i32
      %c3_79 = arith.constant 3 : index
      %313 = arith.index_cast %312 : i32 to index
      %c1_80 = arith.constant 1 : index
      %c0_81 = arith.constant 0 : index
      %314 = vector.load %arg1[%c3_79, %313, %c1_80, %c0_81] : memref<4x45x45x2xf32, #tpu.memory_space<vmem>>, vector<1x1x43x2xf32>
      %315 = vector.shape_cast %314 : vector<1x1x43x2xf32> to vector<43x2xf32>
      %316 = vector.broadcast %18 : f32 to vector<43x2xf32>
      %317 = arith.mulf %316, %315 : vector<43x2xf32>
      %318 = arith.addf %305, %317 : vector<43x2xf32>
      %319 = vector.broadcast %43 : f32 to vector<43x2xf32>
      %320 = arith.mulf %319, %315 : vector<43x2xf32>
      %321 = arith.addf %308, %320 : vector<43x2xf32>
      %322 = vector.broadcast %68 : f32 to vector<43x2xf32>
      %323 = arith.mulf %322, %315 : vector<43x2xf32>
      %324 = arith.addf %311, %323 : vector<43x2xf32>
      %c1_i32_82 = arith.constant 1 : i32
      %325 = arith.addi %80, %c1_i32_82 : i32
      %c2_83 = arith.constant 2 : index
      %326 = arith.index_cast %325 : i32 to index
      %c2_84 = arith.constant 2 : index
      %c0_85 = arith.constant 0 : index
      %327 = vector.load %arg1[%c2_83, %326, %c2_84, %c0_85] : memref<4x45x45x2xf32, #tpu.memory_space<vmem>>, vector<1x1x43x2xf32>
      %328 = vector.shape_cast %327 : vector<1x1x43x2xf32> to vector<43x2xf32>
      %329 = vector.broadcast %19 : f32 to vector<43x2xf32>
      %330 = arith.mulf %329, %328 : vector<43x2xf32>
      %331 = arith.addf %318, %330 : vector<43x2xf32>
      %332 = vector.broadcast %44 : f32 to vector<43x2xf32>
      %333 = arith.mulf %332, %328 : vector<43x2xf32>
      %334 = arith.addf %321, %333 : vector<43x2xf32>
      %335 = vector.broadcast %69 : f32 to vector<43x2xf32>
      %336 = arith.mulf %335, %328 : vector<43x2xf32>
      %337 = arith.addf %324, %336 : vector<43x2xf32>
      %c2_i32 = arith.constant 2 : i32
      %338 = arith.addi %80, %c2_i32 : i32
      %c0_86 = arith.constant 0 : index
      %339 = arith.index_cast %338 : i32 to index
      %c0_87 = arith.constant 0 : index
      %c0_88 = arith.constant 0 : index
      %340 = vector.load %arg1[%c0_86, %339, %c0_87, %c0_88] : memref<4x45x45x2xf32, #tpu.memory_space<vmem>>, vector<1x1x43x2xf32>
      %341 = vector.shape_cast %340 : vector<1x1x43x2xf32> to vector<43x2xf32>
      %342 = vector.broadcast %20 : f32 to vector<43x2xf32>
      %343 = arith.mulf %342, %341 : vector<43x2xf32>
      %344 = arith.addf %331, %343 : vector<43x2xf32>
      %345 = vector.broadcast %45 : f32 to vector<43x2xf32>
      %346 = arith.mulf %345, %341 : vector<43x2xf32>
      %347 = arith.addf %334, %346 : vector<43x2xf32>
      %348 = vector.broadcast %70 : f32 to vector<43x2xf32>
      %349 = arith.mulf %348, %341 : vector<43x2xf32>
      %350 = arith.addf %337, %349 : vector<43x2xf32>
      %c2_i32_89 = arith.constant 2 : i32
      %351 = arith.addi %80, %c2_i32_89 : i32
      %c1_90 = arith.constant 1 : index
      %352 = arith.index_cast %351 : i32 to index
      %c0_91 = arith.constant 0 : index
      %c0_92 = arith.constant 0 : index
      %353 = vector.load %arg1[%c1_90, %352, %c0_91, %c0_92] : memref<4x45x45x2xf32, #tpu.memory_space<vmem>>, vector<1x1x43x2xf32>
      %354 = vector.shape_cast %353 : vector<1x1x43x2xf32> to vector<43x2xf32>
      %355 = vector.broadcast %21 : f32 to vector<43x2xf32>
      %356 = arith.mulf %355, %354 : vector<43x2xf32>
      %357 = arith.addf %344, %356 : vector<43x2xf32>
      %358 = vector.broadcast %46 : f32 to vector<43x2xf32>
      %359 = arith.mulf %358, %354 : vector<43x2xf32>
      %360 = arith.addf %347, %359 : vector<43x2xf32>
      %361 = vector.broadcast %71 : f32 to vector<43x2xf32>
      %362 = arith.mulf %361, %354 : vector<43x2xf32>
      %363 = arith.addf %350, %362 : vector<43x2xf32>
      %c2_i32_93 = arith.constant 2 : i32
      %364 = arith.addi %80, %c2_i32_93 : i32
      %c0_94 = arith.constant 0 : index
      %365 = arith.index_cast %364 : i32 to index
      %c1_95 = arith.constant 1 : index
      %c0_96 = arith.constant 0 : index
      %366 = vector.load %arg1[%c0_94, %365, %c1_95, %c0_96] : memref<4x45x45x2xf32, #tpu.memory_space<vmem>>, vector<1x1x43x2xf32>
      %367 = vector.shape_cast %366 : vector<1x1x43x2xf32> to vector<43x2xf32>
      %368 = vector.broadcast %22 : f32 to vector<43x2xf32>
      %369 = arith.mulf %368, %367 : vector<43x2xf32>
      %370 = arith.addf %357, %369 : vector<43x2xf32>
      %371 = vector.broadcast %47 : f32 to vector<43x2xf32>
      %372 = arith.mulf %371, %367 : vector<43x2xf32>
      %373 = arith.addf %360, %372 : vector<43x2xf32>
      %374 = vector.broadcast %72 : f32 to vector<43x2xf32>
      %375 = arith.mulf %374, %367 : vector<43x2xf32>
      %376 = arith.addf %363, %375 : vector<43x2xf32>
      %c2_i32_97 = arith.constant 2 : i32
      %377 = arith.addi %80, %c2_i32_97 : i32
      %c1_98 = arith.constant 1 : index
      %378 = arith.index_cast %377 : i32 to index
      %c1_99 = arith.constant 1 : index
      %c0_100 = arith.constant 0 : index
      %379 = vector.load %arg1[%c1_98, %378, %c1_99, %c0_100] : memref<4x45x45x2xf32, #tpu.memory_space<vmem>>, vector<1x1x43x2xf32>
      %380 = vector.shape_cast %379 : vector<1x1x43x2xf32> to vector<43x2xf32>
      %381 = vector.broadcast %23 : f32 to vector<43x2xf32>
      %382 = arith.mulf %381, %380 : vector<43x2xf32>
      %383 = arith.addf %370, %382 : vector<43x2xf32>
      %384 = vector.broadcast %48 : f32 to vector<43x2xf32>
      %385 = arith.mulf %384, %380 : vector<43x2xf32>
      %386 = arith.addf %373, %385 : vector<43x2xf32>
      %387 = vector.broadcast %73 : f32 to vector<43x2xf32>
      %388 = arith.mulf %387, %380 : vector<43x2xf32>
      %389 = arith.addf %376, %388 : vector<43x2xf32>
      %c2_i32_101 = arith.constant 2 : i32
      %390 = arith.addi %80, %c2_i32_101 : i32
      %c0_102 = arith.constant 0 : index
      %391 = arith.index_cast %390 : i32 to index
      %c2_103 = arith.constant 2 : index
      %c0_104 = arith.constant 0 : index
      %392 = vector.load %arg1[%c0_102, %391, %c2_103, %c0_104] : memref<4x45x45x2xf32, #tpu.memory_space<vmem>>, vector<1x1x43x2xf32>
      %393 = vector.shape_cast %392 : vector<1x1x43x2xf32> to vector<43x2xf32>
      %394 = vector.broadcast %24 : f32 to vector<43x2xf32>
      %395 = arith.mulf %394, %393 : vector<43x2xf32>
      %396 = arith.addf %383, %395 : vector<43x2xf32>
      %397 = vector.broadcast %49 : f32 to vector<43x2xf32>
      %398 = arith.mulf %397, %393 : vector<43x2xf32>
      %399 = arith.addf %386, %398 : vector<43x2xf32>
      %400 = vector.broadcast %74 : f32 to vector<43x2xf32>
      %401 = arith.mulf %400, %393 : vector<43x2xf32>
      %402 = arith.addf %389, %401 : vector<43x2xf32>
      %c0_i32_105 = arith.constant 0 : i32
      %403 = arith.addi %80, %c0_i32_105 : i32
      %c1_106 = arith.constant 1 : index
      %404 = arith.index_cast %403 : i32 to index
      %c0_107 = arith.constant 0 : index
      %c0_108 = arith.constant 0 : index
      %405 = vector.load %arg1[%c1_106, %404, %c0_107, %c0_108] : memref<4x45x45x2xf32, #tpu.memory_space<vmem>>, vector<1x1x43x2xf32>
      %406 = vector.shape_cast %405 : vector<1x1x43x2xf32> to vector<43x2xf32>
      %407 = vector.broadcast %0 : f32 to vector<43x2xf32>
      %408 = arith.mulf %407, %406 : vector<43x2xf32>
      %409 = vector.broadcast %25 : f32 to vector<43x2xf32>
      %410 = arith.mulf %409, %406 : vector<43x2xf32>
      %411 = vector.broadcast %50 : f32 to vector<43x2xf32>
      %412 = arith.mulf %411, %406 : vector<43x2xf32>
      %c0_i32_109 = arith.constant 0 : i32
      %413 = arith.addi %80, %c0_i32_109 : i32
      %c0_110 = arith.constant 0 : index
      %414 = arith.index_cast %413 : i32 to index
      %c1_111 = arith.constant 1 : index
      %c0_112 = arith.constant 0 : index
      %415 = vector.load %arg1[%c0_110, %414, %c1_111, %c0_112] : memref<4x45x45x2xf32, #tpu.memory_space<vmem>>, vector<1x1x43x2xf32>
      %416 = vector.shape_cast %415 : vector<1x1x43x2xf32> to vector<43x2xf32>
      %417 = vector.broadcast %1 : f32 to vector<43x2xf32>
      %418 = arith.mulf %417, %416 : vector<43x2xf32>
      %419 = arith.addf %408, %418 : vector<43x2xf32>
      %420 = vector.broadcast %26 : f32 to vector<43x2xf32>
      %421 = arith.mulf %420, %416 : vector<43x2xf32>
      %422 = arith.addf %410, %421 : vector<43x2xf32>
      %423 = vector.broadcast %51 : f32 to vector<43x2xf32>
      %424 = arith.mulf %423, %416 : vector<43x2xf32>
      %425 = arith.addf %412, %424 : vector<43x2xf32>
      %c0_i32_113 = arith.constant 0 : i32
      %426 = arith.addi %80, %c0_i32_113 : i32
      %c1_114 = arith.constant 1 : index
      %427 = arith.index_cast %426 : i32 to index
      %c1_115 = arith.constant 1 : index
      %c0_116 = arith.constant 0 : index
      %428 = vector.load %arg1[%c1_114, %427, %c1_115, %c0_116] : memref<4x45x45x2xf32, #tpu.memory_space<vmem>>, vector<1x1x43x2xf32>
      %429 = vector.shape_cast %428 : vector<1x1x43x2xf32> to vector<43x2xf32>
      %430 = vector.broadcast %2 : f32 to vector<43x2xf32>
      %431 = arith.mulf %430, %429 : vector<43x2xf32>
      %432 = arith.addf %419, %431 : vector<43x2xf32>
      %433 = vector.broadcast %27 : f32 to vector<43x2xf32>
      %434 = arith.mulf %433, %429 : vector<43x2xf32>
      %435 = arith.addf %422, %434 : vector<43x2xf32>
      %436 = vector.broadcast %52 : f32 to vector<43x2xf32>
      %437 = arith.mulf %436, %429 : vector<43x2xf32>
      %438 = arith.addf %425, %437 : vector<43x2xf32>
      %c0_i32_117 = arith.constant 0 : i32
      %439 = arith.addi %80, %c0_i32_117 : i32
      %c0_118 = arith.constant 0 : index
      %440 = arith.index_cast %439 : i32 to index
      %c2_119 = arith.constant 2 : index
      %c0_120 = arith.constant 0 : index
      %441 = vector.load %arg1[%c0_118, %440, %c2_119, %c0_120] : memref<4x45x45x2xf32, #tpu.memory_space<vmem>>, vector<1x1x43x2xf32>
      %442 = vector.shape_cast %441 : vector<1x1x43x2xf32> to vector<43x2xf32>
      %443 = vector.broadcast %3 : f32 to vector<43x2xf32>
      %444 = arith.mulf %443, %442 : vector<43x2xf32>
      %445 = arith.addf %432, %444 : vector<43x2xf32>
      %446 = vector.broadcast %28 : f32 to vector<43x2xf32>
      %447 = arith.mulf %446, %442 : vector<43x2xf32>
      %448 = arith.addf %435, %447 : vector<43x2xf32>
      %449 = vector.broadcast %53 : f32 to vector<43x2xf32>
      %450 = arith.mulf %449, %442 : vector<43x2xf32>
      %451 = arith.addf %438, %450 : vector<43x2xf32>
      %c0_i32_121 = arith.constant 0 : i32
      %452 = arith.addi %80, %c0_i32_121 : i32
      %c1_122 = arith.constant 1 : index
      %453 = arith.index_cast %452 : i32 to index
      %c2_123 = arith.constant 2 : index
      %c0_124 = arith.constant 0 : index
      %454 = vector.load %arg1[%c1_122, %453, %c2_123, %c0_124] : memref<4x45x45x2xf32, #tpu.memory_space<vmem>>, vector<1x1x43x2xf32>
      %455 = vector.shape_cast %454 : vector<1x1x43x2xf32> to vector<43x2xf32>
      %456 = vector.broadcast %4 : f32 to vector<43x2xf32>
      %457 = arith.mulf %456, %455 : vector<43x2xf32>
      %458 = arith.addf %445, %457 : vector<43x2xf32>
      %459 = vector.broadcast %29 : f32 to vector<43x2xf32>
      %460 = arith.mulf %459, %455 : vector<43x2xf32>
      %461 = arith.addf %448, %460 : vector<43x2xf32>
      %462 = vector.broadcast %54 : f32 to vector<43x2xf32>
      %463 = arith.mulf %462, %455 : vector<43x2xf32>
      %464 = arith.addf %451, %463 : vector<43x2xf32>
      %c0_i32_125 = arith.constant 0 : i32
      %465 = arith.addi %80, %c0_i32_125 : i32
      %c3_126 = arith.constant 3 : index
      %466 = arith.index_cast %465 : i32 to index
      %c0_127 = arith.constant 0 : index
      %c0_128 = arith.constant 0 : index
      %467 = vector.load %arg1[%c3_126, %466, %c0_127, %c0_128] : memref<4x45x45x2xf32, #tpu.memory_space<vmem>>, vector<1x1x43x2xf32>
      %468 = vector.shape_cast %467 : vector<1x1x43x2xf32> to vector<43x2xf32>
      %469 = vector.broadcast %5 : f32 to vector<43x2xf32>
      %470 = arith.mulf %469, %468 : vector<43x2xf32>
      %471 = arith.addf %458, %470 : vector<43x2xf32>
      %472 = vector.broadcast %30 : f32 to vector<43x2xf32>
      %473 = arith.mulf %472, %468 : vector<43x2xf32>
      %474 = arith.addf %461, %473 : vector<43x2xf32>
      %475 = vector.broadcast %55 : f32 to vector<43x2xf32>
      %476 = arith.mulf %475, %468 : vector<43x2xf32>
      %477 = arith.addf %464, %476 : vector<43x2xf32>
      %c0_i32_129 = arith.constant 0 : i32
      %478 = arith.addi %80, %c0_i32_129 : i32
      %c2_130 = arith.constant 2 : index
      %479 = arith.index_cast %478 : i32 to index
      %c1_131 = arith.constant 1 : index
      %c0_132 = arith.constant 0 : index
      %480 = vector.load %arg1[%c2_130, %479, %c1_131, %c0_132] : memref<4x45x45x2xf32, #tpu.memory_space<vmem>>, vector<1x1x43x2xf32>
      %481 = vector.shape_cast %480 : vector<1x1x43x2xf32> to vector<43x2xf32>
      %482 = vector.broadcast %6 : f32 to vector<43x2xf32>
      %483 = arith.mulf %482, %481 : vector<43x2xf32>
      %484 = arith.addf %471, %483 : vector<43x2xf32>
      %485 = vector.broadcast %31 : f32 to vector<43x2xf32>
      %486 = arith.mulf %485, %481 : vector<43x2xf32>
      %487 = arith.addf %474, %486 : vector<43x2xf32>
      %488 = vector.broadcast %56 : f32 to vector<43x2xf32>
      %489 = arith.mulf %488, %481 : vector<43x2xf32>
      %490 = arith.addf %477, %489 : vector<43x2xf32>
      %c0_i32_133 = arith.constant 0 : i32
      %491 = arith.addi %80, %c0_i32_133 : i32
      %c3_134 = arith.constant 3 : index
      %492 = arith.index_cast %491 : i32 to index
      %c1_135 = arith.constant 1 : index
      %c0_136 = arith.constant 0 : index
      %493 = vector.load %arg1[%c3_134, %492, %c1_135, %c0_136] : memref<4x45x45x2xf32, #tpu.memory_space<vmem>>, vector<1x1x43x2xf32>
      %494 = vector.shape_cast %493 : vector<1x1x43x2xf32> to vector<43x2xf32>
      %495 = vector.broadcast %7 : f32 to vector<43x2xf32>
      %496 = arith.mulf %495, %494 : vector<43x2xf32>
      %497 = arith.addf %484, %496 : vector<43x2xf32>
      %498 = vector.broadcast %32 : f32 to vector<43x2xf32>
      %499 = arith.mulf %498, %494 : vector<43x2xf32>
      %500 = arith.addf %487, %499 : vector<43x2xf32>
      %501 = vector.broadcast %57 : f32 to vector<43x2xf32>
      %502 = arith.mulf %501, %494 : vector<43x2xf32>
      %503 = arith.addf %490, %502 : vector<43x2xf32>
      %c0_i32_137 = arith.constant 0 : i32
      %504 = arith.addi %80, %c0_i32_137 : i32
      %c2_138 = arith.constant 2 : index
      %505 = arith.index_cast %504 : i32 to index
      %c2_139 = arith.constant 2 : index
      %c0_140 = arith.constant 0 : index
      %506 = vector.load %arg1[%c2_138, %505, %c2_139, %c0_140] : memref<4x45x45x2xf32, #tpu.memory_space<vmem>>, vector<1x1x43x2xf32>
      %507 = vector.shape_cast %506 : vector<1x1x43x2xf32> to vector<43x2xf32>
      %508 = vector.broadcast %8 : f32 to vector<43x2xf32>
      %509 = arith.mulf %508, %507 : vector<43x2xf32>
      %510 = arith.addf %497, %509 : vector<43x2xf32>
      %511 = vector.broadcast %33 : f32 to vector<43x2xf32>
      %512 = arith.mulf %511, %507 : vector<43x2xf32>
      %513 = arith.addf %500, %512 : vector<43x2xf32>
      %514 = vector.broadcast %58 : f32 to vector<43x2xf32>
      %515 = arith.mulf %514, %507 : vector<43x2xf32>
      %516 = arith.addf %503, %515 : vector<43x2xf32>
      %c0_i32_141 = arith.constant 0 : i32
      %517 = arith.addi %80, %c0_i32_141 : i32
      %c3_142 = arith.constant 3 : index
      %518 = arith.index_cast %517 : i32 to index
      %c2_143 = arith.constant 2 : index
      %c0_144 = arith.constant 0 : index
      %519 = vector.load %arg1[%c3_142, %518, %c2_143, %c0_144] : memref<4x45x45x2xf32, #tpu.memory_space<vmem>>, vector<1x1x43x2xf32>
      %520 = vector.shape_cast %519 : vector<1x1x43x2xf32> to vector<43x2xf32>
      %521 = vector.broadcast %9 : f32 to vector<43x2xf32>
      %522 = arith.mulf %521, %520 : vector<43x2xf32>
      %523 = arith.addf %510, %522 : vector<43x2xf32>
      %524 = vector.broadcast %34 : f32 to vector<43x2xf32>
      %525 = arith.mulf %524, %520 : vector<43x2xf32>
      %526 = arith.addf %513, %525 : vector<43x2xf32>
      %527 = vector.broadcast %59 : f32 to vector<43x2xf32>
      %528 = arith.mulf %527, %520 : vector<43x2xf32>
      %529 = arith.addf %516, %528 : vector<43x2xf32>
      %c1_i32_145 = arith.constant 1 : i32
      %530 = arith.addi %80, %c1_i32_145 : i32
      %c1_146 = arith.constant 1 : index
      %531 = arith.index_cast %530 : i32 to index
      %c0_147 = arith.constant 0 : index
      %c0_148 = arith.constant 0 : index
      %532 = vector.load %arg1[%c1_146, %531, %c0_147, %c0_148] : memref<4x45x45x2xf32, #tpu.memory_space<vmem>>, vector<1x1x43x2xf32>
      %533 = vector.shape_cast %532 : vector<1x1x43x2xf32> to vector<43x2xf32>
      %534 = vector.broadcast %10 : f32 to vector<43x2xf32>
      %535 = arith.mulf %534, %533 : vector<43x2xf32>
      %536 = arith.addf %523, %535 : vector<43x2xf32>
      %537 = vector.broadcast %35 : f32 to vector<43x2xf32>
      %538 = arith.mulf %537, %533 : vector<43x2xf32>
      %539 = arith.addf %526, %538 : vector<43x2xf32>
      %540 = vector.broadcast %60 : f32 to vector<43x2xf32>
      %541 = arith.mulf %540, %533 : vector<43x2xf32>
      %542 = arith.addf %529, %541 : vector<43x2xf32>
      %c1_i32_149 = arith.constant 1 : i32
      %543 = arith.addi %80, %c1_i32_149 : i32
      %c0_150 = arith.constant 0 : index
      %544 = arith.index_cast %543 : i32 to index
      %c1_151 = arith.constant 1 : index
      %c0_152 = arith.constant 0 : index
      %545 = vector.load %arg1[%c0_150, %544, %c1_151, %c0_152] : memref<4x45x45x2xf32, #tpu.memory_space<vmem>>, vector<1x1x43x2xf32>
      %546 = vector.shape_cast %545 : vector<1x1x43x2xf32> to vector<43x2xf32>
      %547 = vector.broadcast %11 : f32 to vector<43x2xf32>
      %548 = arith.mulf %547, %546 : vector<43x2xf32>
      %549 = arith.addf %536, %548 : vector<43x2xf32>
      %550 = vector.broadcast %36 : f32 to vector<43x2xf32>
      %551 = arith.mulf %550, %546 : vector<43x2xf32>
      %552 = arith.addf %539, %551 : vector<43x2xf32>
      %553 = vector.broadcast %61 : f32 to vector<43x2xf32>
      %554 = arith.mulf %553, %546 : vector<43x2xf32>
      %555 = arith.addf %542, %554 : vector<43x2xf32>
      %c1_i32_153 = arith.constant 1 : i32
      %556 = arith.addi %80, %c1_i32_153 : i32
      %c1_154 = arith.constant 1 : index
      %557 = arith.index_cast %556 : i32 to index
      %c1_155 = arith.constant 1 : index
      %c0_156 = arith.constant 0 : index
      %558 = vector.load %arg1[%c1_154, %557, %c1_155, %c0_156] : memref<4x45x45x2xf32, #tpu.memory_space<vmem>>, vector<1x1x43x2xf32>
      %559 = vector.shape_cast %558 : vector<1x1x43x2xf32> to vector<43x2xf32>
      %560 = vector.broadcast %12 : f32 to vector<43x2xf32>
      %561 = arith.mulf %560, %559 : vector<43x2xf32>
      %562 = arith.addf %549, %561 : vector<43x2xf32>
      %563 = vector.broadcast %37 : f32 to vector<43x2xf32>
      %564 = arith.mulf %563, %559 : vector<43x2xf32>
      %565 = arith.addf %552, %564 : vector<43x2xf32>
      %566 = vector.broadcast %62 : f32 to vector<43x2xf32>
      %567 = arith.mulf %566, %559 : vector<43x2xf32>
      %568 = arith.addf %555, %567 : vector<43x2xf32>
      %c1_i32_157 = arith.constant 1 : i32
      %569 = arith.addi %80, %c1_i32_157 : i32
      %c0_158 = arith.constant 0 : index
      %570 = arith.index_cast %569 : i32 to index
      %c2_159 = arith.constant 2 : index
      %c0_160 = arith.constant 0 : index
      %571 = vector.load %arg1[%c0_158, %570, %c2_159, %c0_160] : memref<4x45x45x2xf32, #tpu.memory_space<vmem>>, vector<1x1x43x2xf32>
      %572 = vector.shape_cast %571 : vector<1x1x43x2xf32> to vector<43x2xf32>
      %573 = vector.broadcast %13 : f32 to vector<43x2xf32>
      %574 = arith.mulf %573, %572 : vector<43x2xf32>
      %575 = arith.addf %562, %574 : vector<43x2xf32>
      %576 = vector.broadcast %38 : f32 to vector<43x2xf32>
      %577 = arith.mulf %576, %572 : vector<43x2xf32>
      %578 = arith.addf %565, %577 : vector<43x2xf32>
      %579 = vector.broadcast %63 : f32 to vector<43x2xf32>
      %580 = arith.mulf %579, %572 : vector<43x2xf32>
      %581 = arith.addf %568, %580 : vector<43x2xf32>
      %c1_i32_161 = arith.constant 1 : i32
      %582 = arith.addi %80, %c1_i32_161 : i32
      %c1_162 = arith.constant 1 : index
      %583 = arith.index_cast %582 : i32 to index
      %c2_163 = arith.constant 2 : index
      %c0_164 = arith.constant 0 : index
      %584 = vector.load %arg1[%c1_162, %583, %c2_163, %c0_164] : memref<4x45x45x2xf32, #tpu.memory_space<vmem>>, vector<1x1x43x2xf32>
      %585 = vector.shape_cast %584 : vector<1x1x43x2xf32> to vector<43x2xf32>
      %586 = vector.broadcast %14 : f32 to vector<43x2xf32>
      %587 = arith.mulf %586, %585 : vector<43x2xf32>
      %588 = arith.addf %575, %587 : vector<43x2xf32>
      %589 = vector.broadcast %39 : f32 to vector<43x2xf32>
      %590 = arith.mulf %589, %585 : vector<43x2xf32>
      %591 = arith.addf %578, %590 : vector<43x2xf32>
      %592 = vector.broadcast %64 : f32 to vector<43x2xf32>
      %593 = arith.mulf %592, %585 : vector<43x2xf32>
      %594 = arith.addf %581, %593 : vector<43x2xf32>
      %c1_i32_165 = arith.constant 1 : i32
      %595 = arith.addi %80, %c1_i32_165 : i32
      %c3_166 = arith.constant 3 : index
      %596 = arith.index_cast %595 : i32 to index
      %c0_167 = arith.constant 0 : index
      %c0_168 = arith.constant 0 : index
      %597 = vector.load %arg1[%c3_166, %596, %c0_167, %c0_168] : memref<4x45x45x2xf32, #tpu.memory_space<vmem>>, vector<1x1x43x2xf32>
      %598 = vector.shape_cast %597 : vector<1x1x43x2xf32> to vector<43x2xf32>
      %599 = vector.broadcast %15 : f32 to vector<43x2xf32>
      %600 = arith.mulf %599, %598 : vector<43x2xf32>
      %601 = arith.addf %588, %600 : vector<43x2xf32>
      %602 = vector.broadcast %40 : f32 to vector<43x2xf32>
      %603 = arith.mulf %602, %598 : vector<43x2xf32>
      %604 = arith.addf %591, %603 : vector<43x2xf32>
      %605 = vector.broadcast %65 : f32 to vector<43x2xf32>
      %606 = arith.mulf %605, %598 : vector<43x2xf32>
      %607 = arith.addf %594, %606 : vector<43x2xf32>
      %c1_i32_169 = arith.constant 1 : i32
      %608 = arith.addi %80, %c1_i32_169 : i32
      %c2_170 = arith.constant 2 : index
      %609 = arith.index_cast %608 : i32 to index
      %c1_171 = arith.constant 1 : index
      %c0_172 = arith.constant 0 : index
      %610 = vector.load %arg1[%c2_170, %609, %c1_171, %c0_172] : memref<4x45x45x2xf32, #tpu.memory_space<vmem>>, vector<1x1x43x2xf32>
      %611 = vector.shape_cast %610 : vector<1x1x43x2xf32> to vector<43x2xf32>
      %612 = vector.broadcast %16 : f32 to vector<43x2xf32>
      %613 = arith.mulf %612, %611 : vector<43x2xf32>
      %614 = arith.addf %601, %613 : vector<43x2xf32>
      %615 = vector.broadcast %41 : f32 to vector<43x2xf32>
      %616 = arith.mulf %615, %611 : vector<43x2xf32>
      %617 = arith.addf %604, %616 : vector<43x2xf32>
      %618 = vector.broadcast %66 : f32 to vector<43x2xf32>
      %619 = arith.mulf %618, %611 : vector<43x2xf32>
      %620 = arith.addf %607, %619 : vector<43x2xf32>
      %c1_i32_173 = arith.constant 1 : i32
      %621 = arith.addi %80, %c1_i32_173 : i32
      %c3_174 = arith.constant 3 : index
      %622 = arith.index_cast %621 : i32 to index
      %c1_175 = arith.constant 1 : index
      %c0_176 = arith.constant 0 : index
      %623 = vector.load %arg1[%c3_174, %622, %c1_175, %c0_176] : memref<4x45x45x2xf32, #tpu.memory_space<vmem>>, vector<1x1x43x2xf32>
      %624 = vector.shape_cast %623 : vector<1x1x43x2xf32> to vector<43x2xf32>
      %625 = vector.broadcast %17 : f32 to vector<43x2xf32>
      %626 = arith.mulf %625, %624 : vector<43x2xf32>
      %627 = arith.addf %614, %626 : vector<43x2xf32>
      %628 = vector.broadcast %42 : f32 to vector<43x2xf32>
      %629 = arith.mulf %628, %624 : vector<43x2xf32>
      %630 = arith.addf %617, %629 : vector<43x2xf32>
      %631 = vector.broadcast %67 : f32 to vector<43x2xf32>
      %632 = arith.mulf %631, %624 : vector<43x2xf32>
      %633 = arith.addf %620, %632 : vector<43x2xf32>
      %c1_i32_177 = arith.constant 1 : i32
      %634 = arith.addi %80, %c1_i32_177 : i32
      %c2_178 = arith.constant 2 : index
      %635 = arith.index_cast %634 : i32 to index
      %c2_179 = arith.constant 2 : index
      %c0_180 = arith.constant 0 : index
      %636 = vector.load %arg1[%c2_178, %635, %c2_179, %c0_180] : memref<4x45x45x2xf32, #tpu.memory_space<vmem>>, vector<1x1x43x2xf32>
      %637 = vector.shape_cast %636 : vector<1x1x43x2xf32> to vector<43x2xf32>
      %638 = vector.broadcast %18 : f32 to vector<43x2xf32>
      %639 = arith.mulf %638, %637 : vector<43x2xf32>
      %640 = arith.addf %627, %639 : vector<43x2xf32>
      %641 = vector.broadcast %43 : f32 to vector<43x2xf32>
      %642 = arith.mulf %641, %637 : vector<43x2xf32>
      %643 = arith.addf %630, %642 : vector<43x2xf32>
      %644 = vector.broadcast %68 : f32 to vector<43x2xf32>
      %645 = arith.mulf %644, %637 : vector<43x2xf32>
      %646 = arith.addf %633, %645 : vector<43x2xf32>
      %c1_i32_181 = arith.constant 1 : i32
      %647 = arith.addi %80, %c1_i32_181 : i32
      %c3_182 = arith.constant 3 : index
      %648 = arith.index_cast %647 : i32 to index
      %c2_183 = arith.constant 2 : index
      %c0_184 = arith.constant 0 : index
      %649 = vector.load %arg1[%c3_182, %648, %c2_183, %c0_184] : memref<4x45x45x2xf32, #tpu.memory_space<vmem>>, vector<1x1x43x2xf32>
      %650 = vector.shape_cast %649 : vector<1x1x43x2xf32> to vector<43x2xf32>
      %651 = vector.broadcast %19 : f32 to vector<43x2xf32>
      %652 = arith.mulf %651, %650 : vector<43x2xf32>
      %653 = arith.addf %640, %652 : vector<43x2xf32>
      %654 = vector.broadcast %44 : f32 to vector<43x2xf32>
      %655 = arith.mulf %654, %650 : vector<43x2xf32>
      %656 = arith.addf %643, %655 : vector<43x2xf32>
      %657 = vector.broadcast %69 : f32 to vector<43x2xf32>
      %658 = arith.mulf %657, %650 : vector<43x2xf32>
      %659 = arith.addf %646, %658 : vector<43x2xf32>
      %c2_i32_185 = arith.constant 2 : i32
      %660 = arith.addi %80, %c2_i32_185 : i32
      %c1_186 = arith.constant 1 : index
      %661 = arith.index_cast %660 : i32 to index
      %c0_187 = arith.constant 0 : index
      %c0_188 = arith.constant 0 : index
      %662 = vector.load %arg1[%c1_186, %661, %c0_187, %c0_188] : memref<4x45x45x2xf32, #tpu.memory_space<vmem>>, vector<1x1x43x2xf32>
      %663 = vector.shape_cast %662 : vector<1x1x43x2xf32> to vector<43x2xf32>
      %664 = vector.broadcast %20 : f32 to vector<43x2xf32>
      %665 = arith.mulf %664, %663 : vector<43x2xf32>
      %666 = arith.addf %653, %665 : vector<43x2xf32>
      %667 = vector.broadcast %45 : f32 to vector<43x2xf32>
      %668 = arith.mulf %667, %663 : vector<43x2xf32>
      %669 = arith.addf %656, %668 : vector<43x2xf32>
      %670 = vector.broadcast %70 : f32 to vector<43x2xf32>
      %671 = arith.mulf %670, %663 : vector<43x2xf32>
      %672 = arith.addf %659, %671 : vector<43x2xf32>
      %c2_i32_189 = arith.constant 2 : i32
      %673 = arith.addi %80, %c2_i32_189 : i32
      %c0_190 = arith.constant 0 : index
      %674 = arith.index_cast %673 : i32 to index
      %c1_191 = arith.constant 1 : index
      %c0_192 = arith.constant 0 : index
      %675 = vector.load %arg1[%c0_190, %674, %c1_191, %c0_192] : memref<4x45x45x2xf32, #tpu.memory_space<vmem>>, vector<1x1x43x2xf32>
      %676 = vector.shape_cast %675 : vector<1x1x43x2xf32> to vector<43x2xf32>
      %677 = vector.broadcast %21 : f32 to vector<43x2xf32>
      %678 = arith.mulf %677, %676 : vector<43x2xf32>
      %679 = arith.addf %666, %678 : vector<43x2xf32>
      %680 = vector.broadcast %46 : f32 to vector<43x2xf32>
      %681 = arith.mulf %680, %676 : vector<43x2xf32>
      %682 = arith.addf %669, %681 : vector<43x2xf32>
      %683 = vector.broadcast %71 : f32 to vector<43x2xf32>
      %684 = arith.mulf %683, %676 : vector<43x2xf32>
      %685 = arith.addf %672, %684 : vector<43x2xf32>
      %c2_i32_193 = arith.constant 2 : i32
      %686 = arith.addi %80, %c2_i32_193 : i32
      %c1_194 = arith.constant 1 : index
      %687 = arith.index_cast %686 : i32 to index
      %c1_195 = arith.constant 1 : index
      %c0_196 = arith.constant 0 : index
      %688 = vector.load %arg1[%c1_194, %687, %c1_195, %c0_196] : memref<4x45x45x2xf32, #tpu.memory_space<vmem>>, vector<1x1x43x2xf32>
      %689 = vector.shape_cast %688 : vector<1x1x43x2xf32> to vector<43x2xf32>
      %690 = vector.broadcast %22 : f32 to vector<43x2xf32>
      %691 = arith.mulf %690, %689 : vector<43x2xf32>
      %692 = arith.addf %679, %691 : vector<43x2xf32>
      %693 = vector.broadcast %47 : f32 to vector<43x2xf32>
      %694 = arith.mulf %693, %689 : vector<43x2xf32>
      %695 = arith.addf %682, %694 : vector<43x2xf32>
      %696 = vector.broadcast %72 : f32 to vector<43x2xf32>
      %697 = arith.mulf %696, %689 : vector<43x2xf32>
      %698 = arith.addf %685, %697 : vector<43x2xf32>
      %c2_i32_197 = arith.constant 2 : i32
      %699 = arith.addi %80, %c2_i32_197 : i32
      %c0_198 = arith.constant 0 : index
      %700 = arith.index_cast %699 : i32 to index
      %c2_199 = arith.constant 2 : index
      %c0_200 = arith.constant 0 : index
      %701 = vector.load %arg1[%c0_198, %700, %c2_199, %c0_200] : memref<4x45x45x2xf32, #tpu.memory_space<vmem>>, vector<1x1x43x2xf32>
      %702 = vector.shape_cast %701 : vector<1x1x43x2xf32> to vector<43x2xf32>
      %703 = vector.broadcast %23 : f32 to vector<43x2xf32>
      %704 = arith.mulf %703, %702 : vector<43x2xf32>
      %705 = arith.addf %692, %704 : vector<43x2xf32>
      %706 = vector.broadcast %48 : f32 to vector<43x2xf32>
      %707 = arith.mulf %706, %702 : vector<43x2xf32>
      %708 = arith.addf %695, %707 : vector<43x2xf32>
      %709 = vector.broadcast %73 : f32 to vector<43x2xf32>
      %710 = arith.mulf %709, %702 : vector<43x2xf32>
      %711 = arith.addf %698, %710 : vector<43x2xf32>
      %c2_i32_201 = arith.constant 2 : i32
      %712 = arith.addi %80, %c2_i32_201 : i32
      %c1_202 = arith.constant 1 : index
      %713 = arith.index_cast %712 : i32 to index
      %c2_203 = arith.constant 2 : index
      %c0_204 = arith.constant 0 : index
      %714 = vector.load %arg1[%c1_202, %713, %c2_203, %c0_204] : memref<4x45x45x2xf32, #tpu.memory_space<vmem>>, vector<1x1x43x2xf32>
      %715 = vector.shape_cast %714 : vector<1x1x43x2xf32> to vector<43x2xf32>
      %716 = vector.broadcast %24 : f32 to vector<43x2xf32>
      %717 = arith.mulf %716, %715 : vector<43x2xf32>
      %718 = arith.addf %705, %717 : vector<43x2xf32>
      %719 = vector.broadcast %49 : f32 to vector<43x2xf32>
      %720 = arith.mulf %719, %715 : vector<43x2xf32>
      %721 = arith.addf %708, %720 : vector<43x2xf32>
      %722 = vector.broadcast %74 : f32 to vector<43x2xf32>
      %723 = arith.mulf %722, %715 : vector<43x2xf32>
      %724 = arith.addf %711, %723 : vector<43x2xf32>
      %725 = arith.maximumf %396, %718 : vector<43x2xf32>
      %726 = arith.maximumf %399, %721 : vector<43x2xf32>
      %727 = arith.maximumf %402, %724 : vector<43x2xf32>
      %c0_i32_205 = arith.constant 0 : i32
      %728 = arith.addi %80, %c0_i32_205 : i32
      %c2_206 = arith.constant 2 : index
      %729 = arith.index_cast %728 : i32 to index
      %c0_207 = arith.constant 0 : index
      %c0_208 = arith.constant 0 : index
      %730 = vector.load %arg1[%c2_206, %729, %c0_207, %c0_208] : memref<4x45x45x2xf32, #tpu.memory_space<vmem>>, vector<1x1x43x2xf32>
      %731 = vector.shape_cast %730 : vector<1x1x43x2xf32> to vector<43x2xf32>
      %732 = vector.broadcast %0 : f32 to vector<43x2xf32>
      %733 = arith.mulf %732, %731 : vector<43x2xf32>
      %734 = vector.broadcast %25 : f32 to vector<43x2xf32>
      %735 = arith.mulf %734, %731 : vector<43x2xf32>
      %736 = vector.broadcast %50 : f32 to vector<43x2xf32>
      %737 = arith.mulf %736, %731 : vector<43x2xf32>
      %c0_i32_209 = arith.constant 0 : i32
      %738 = arith.addi %80, %c0_i32_209 : i32
      %c3_210 = arith.constant 3 : index
      %739 = arith.index_cast %738 : i32 to index
      %c0_211 = arith.constant 0 : index
      %c0_212 = arith.constant 0 : index
      %740 = vector.load %arg1[%c3_210, %739, %c0_211, %c0_212] : memref<4x45x45x2xf32, #tpu.memory_space<vmem>>, vector<1x1x43x2xf32>
      %741 = vector.shape_cast %740 : vector<1x1x43x2xf32> to vector<43x2xf32>
      %742 = vector.broadcast %1 : f32 to vector<43x2xf32>
      %743 = arith.mulf %742, %741 : vector<43x2xf32>
      %744 = arith.addf %733, %743 : vector<43x2xf32>
      %745 = vector.broadcast %26 : f32 to vector<43x2xf32>
      %746 = arith.mulf %745, %741 : vector<43x2xf32>
      %747 = arith.addf %735, %746 : vector<43x2xf32>
      %748 = vector.broadcast %51 : f32 to vector<43x2xf32>
      %749 = arith.mulf %748, %741 : vector<43x2xf32>
      %750 = arith.addf %737, %749 : vector<43x2xf32>
      %c0_i32_213 = arith.constant 0 : i32
      %751 = arith.addi %80, %c0_i32_213 : i32
      %c2_214 = arith.constant 2 : index
      %752 = arith.index_cast %751 : i32 to index
      %c1_215 = arith.constant 1 : index
      %c0_216 = arith.constant 0 : index
      %753 = vector.load %arg1[%c2_214, %752, %c1_215, %c0_216] : memref<4x45x45x2xf32, #tpu.memory_space<vmem>>, vector<1x1x43x2xf32>
      %754 = vector.shape_cast %753 : vector<1x1x43x2xf32> to vector<43x2xf32>
      %755 = vector.broadcast %2 : f32 to vector<43x2xf32>
      %756 = arith.mulf %755, %754 : vector<43x2xf32>
      %757 = arith.addf %744, %756 : vector<43x2xf32>
      %758 = vector.broadcast %27 : f32 to vector<43x2xf32>
      %759 = arith.mulf %758, %754 : vector<43x2xf32>
      %760 = arith.addf %747, %759 : vector<43x2xf32>
      %761 = vector.broadcast %52 : f32 to vector<43x2xf32>
      %762 = arith.mulf %761, %754 : vector<43x2xf32>
      %763 = arith.addf %750, %762 : vector<43x2xf32>
      %c0_i32_217 = arith.constant 0 : i32
      %764 = arith.addi %80, %c0_i32_217 : i32
      %c3_218 = arith.constant 3 : index
      %765 = arith.index_cast %764 : i32 to index
      %c1_219 = arith.constant 1 : index
      %c0_220 = arith.constant 0 : index
      %766 = vector.load %arg1[%c3_218, %765, %c1_219, %c0_220] : memref<4x45x45x2xf32, #tpu.memory_space<vmem>>, vector<1x1x43x2xf32>
      %767 = vector.shape_cast %766 : vector<1x1x43x2xf32> to vector<43x2xf32>
      %768 = vector.broadcast %3 : f32 to vector<43x2xf32>
      %769 = arith.mulf %768, %767 : vector<43x2xf32>
      %770 = arith.addf %757, %769 : vector<43x2xf32>
      %771 = vector.broadcast %28 : f32 to vector<43x2xf32>
      %772 = arith.mulf %771, %767 : vector<43x2xf32>
      %773 = arith.addf %760, %772 : vector<43x2xf32>
      %774 = vector.broadcast %53 : f32 to vector<43x2xf32>
      %775 = arith.mulf %774, %767 : vector<43x2xf32>
      %776 = arith.addf %763, %775 : vector<43x2xf32>
      %c0_i32_221 = arith.constant 0 : i32
      %777 = arith.addi %80, %c0_i32_221 : i32
      %c2_222 = arith.constant 2 : index
      %778 = arith.index_cast %777 : i32 to index
      %c2_223 = arith.constant 2 : index
      %c0_224 = arith.constant 0 : index
      %779 = vector.load %arg1[%c2_222, %778, %c2_223, %c0_224] : memref<4x45x45x2xf32, #tpu.memory_space<vmem>>, vector<1x1x43x2xf32>
      %780 = vector.shape_cast %779 : vector<1x1x43x2xf32> to vector<43x2xf32>
      %781 = vector.broadcast %4 : f32 to vector<43x2xf32>
      %782 = arith.mulf %781, %780 : vector<43x2xf32>
      %783 = arith.addf %770, %782 : vector<43x2xf32>
      %784 = vector.broadcast %29 : f32 to vector<43x2xf32>
      %785 = arith.mulf %784, %780 : vector<43x2xf32>
      %786 = arith.addf %773, %785 : vector<43x2xf32>
      %787 = vector.broadcast %54 : f32 to vector<43x2xf32>
      %788 = arith.mulf %787, %780 : vector<43x2xf32>
      %789 = arith.addf %776, %788 : vector<43x2xf32>
      %c1_i32_225 = arith.constant 1 : i32
      %790 = arith.addi %80, %c1_i32_225 : i32
      %c0_226 = arith.constant 0 : index
      %791 = arith.index_cast %790 : i32 to index
      %c0_227 = arith.constant 0 : index
      %c0_228 = arith.constant 0 : index
      %792 = vector.load %arg1[%c0_226, %791, %c0_227, %c0_228] : memref<4x45x45x2xf32, #tpu.memory_space<vmem>>, vector<1x1x43x2xf32>
      %793 = vector.shape_cast %792 : vector<1x1x43x2xf32> to vector<43x2xf32>
      %794 = vector.broadcast %5 : f32 to vector<43x2xf32>
      %795 = arith.mulf %794, %793 : vector<43x2xf32>
      %796 = arith.addf %783, %795 : vector<43x2xf32>
      %797 = vector.broadcast %30 : f32 to vector<43x2xf32>
      %798 = arith.mulf %797, %793 : vector<43x2xf32>
      %799 = arith.addf %786, %798 : vector<43x2xf32>
      %800 = vector.broadcast %55 : f32 to vector<43x2xf32>
      %801 = arith.mulf %800, %793 : vector<43x2xf32>
      %802 = arith.addf %789, %801 : vector<43x2xf32>
      %c1_i32_229 = arith.constant 1 : i32
      %803 = arith.addi %80, %c1_i32_229 : i32
      %c1_230 = arith.constant 1 : index
      %804 = arith.index_cast %803 : i32 to index
      %c0_231 = arith.constant 0 : index
      %c0_232 = arith.constant 0 : index
      %805 = vector.load %arg1[%c1_230, %804, %c0_231, %c0_232] : memref<4x45x45x2xf32, #tpu.memory_space<vmem>>, vector<1x1x43x2xf32>
      %806 = vector.shape_cast %805 : vector<1x1x43x2xf32> to vector<43x2xf32>
      %807 = vector.broadcast %6 : f32 to vector<43x2xf32>
      %808 = arith.mulf %807, %806 : vector<43x2xf32>
      %809 = arith.addf %796, %808 : vector<43x2xf32>
      %810 = vector.broadcast %31 : f32 to vector<43x2xf32>
      %811 = arith.mulf %810, %806 : vector<43x2xf32>
      %812 = arith.addf %799, %811 : vector<43x2xf32>
      %813 = vector.broadcast %56 : f32 to vector<43x2xf32>
      %814 = arith.mulf %813, %806 : vector<43x2xf32>
      %815 = arith.addf %802, %814 : vector<43x2xf32>
      %c1_i32_233 = arith.constant 1 : i32
      %816 = arith.addi %80, %c1_i32_233 : i32
      %c0_234 = arith.constant 0 : index
      %817 = arith.index_cast %816 : i32 to index
      %c1_235 = arith.constant 1 : index
      %c0_236 = arith.constant 0 : index
      %818 = vector.load %arg1[%c0_234, %817, %c1_235, %c0_236] : memref<4x45x45x2xf32, #tpu.memory_space<vmem>>, vector<1x1x43x2xf32>
      %819 = vector.shape_cast %818 : vector<1x1x43x2xf32> to vector<43x2xf32>
      %820 = vector.broadcast %7 : f32 to vector<43x2xf32>
      %821 = arith.mulf %820, %819 : vector<43x2xf32>
      %822 = arith.addf %809, %821 : vector<43x2xf32>
      %823 = vector.broadcast %32 : f32 to vector<43x2xf32>
      %824 = arith.mulf %823, %819 : vector<43x2xf32>
      %825 = arith.addf %812, %824 : vector<43x2xf32>
      %826 = vector.broadcast %57 : f32 to vector<43x2xf32>
      %827 = arith.mulf %826, %819 : vector<43x2xf32>
      %828 = arith.addf %815, %827 : vector<43x2xf32>
      %c1_i32_237 = arith.constant 1 : i32
      %829 = arith.addi %80, %c1_i32_237 : i32
      %c1_238 = arith.constant 1 : index
      %830 = arith.index_cast %829 : i32 to index
      %c1_239 = arith.constant 1 : index
      %c0_240 = arith.constant 0 : index
      %831 = vector.load %arg1[%c1_238, %830, %c1_239, %c0_240] : memref<4x45x45x2xf32, #tpu.memory_space<vmem>>, vector<1x1x43x2xf32>
      %832 = vector.shape_cast %831 : vector<1x1x43x2xf32> to vector<43x2xf32>
      %833 = vector.broadcast %8 : f32 to vector<43x2xf32>
      %834 = arith.mulf %833, %832 : vector<43x2xf32>
      %835 = arith.addf %822, %834 : vector<43x2xf32>
      %836 = vector.broadcast %33 : f32 to vector<43x2xf32>
      %837 = arith.mulf %836, %832 : vector<43x2xf32>
      %838 = arith.addf %825, %837 : vector<43x2xf32>
      %839 = vector.broadcast %58 : f32 to vector<43x2xf32>
      %840 = arith.mulf %839, %832 : vector<43x2xf32>
      %841 = arith.addf %828, %840 : vector<43x2xf32>
      %c1_i32_241 = arith.constant 1 : i32
      %842 = arith.addi %80, %c1_i32_241 : i32
      %c0_242 = arith.constant 0 : index
      %843 = arith.index_cast %842 : i32 to index
      %c2_243 = arith.constant 2 : index
      %c0_244 = arith.constant 0 : index
      %844 = vector.load %arg1[%c0_242, %843, %c2_243, %c0_244] : memref<4x45x45x2xf32, #tpu.memory_space<vmem>>, vector<1x1x43x2xf32>
      %845 = vector.shape_cast %844 : vector<1x1x43x2xf32> to vector<43x2xf32>
      %846 = vector.broadcast %9 : f32 to vector<43x2xf32>
      %847 = arith.mulf %846, %845 : vector<43x2xf32>
      %848 = arith.addf %835, %847 : vector<43x2xf32>
      %849 = vector.broadcast %34 : f32 to vector<43x2xf32>
      %850 = arith.mulf %849, %845 : vector<43x2xf32>
      %851 = arith.addf %838, %850 : vector<43x2xf32>
      %852 = vector.broadcast %59 : f32 to vector<43x2xf32>
      %853 = arith.mulf %852, %845 : vector<43x2xf32>
      %854 = arith.addf %841, %853 : vector<43x2xf32>
      %c1_i32_245 = arith.constant 1 : i32
      %855 = arith.addi %80, %c1_i32_245 : i32
      %c2_246 = arith.constant 2 : index
      %856 = arith.index_cast %855 : i32 to index
      %c0_247 = arith.constant 0 : index
      %c0_248 = arith.constant 0 : index
      %857 = vector.load %arg1[%c2_246, %856, %c0_247, %c0_248] : memref<4x45x45x2xf32, #tpu.memory_space<vmem>>, vector<1x1x43x2xf32>
      %858 = vector.shape_cast %857 : vector<1x1x43x2xf32> to vector<43x2xf32>
      %859 = vector.broadcast %10 : f32 to vector<43x2xf32>
      %860 = arith.mulf %859, %858 : vector<43x2xf32>
      %861 = arith.addf %848, %860 : vector<43x2xf32>
      %862 = vector.broadcast %35 : f32 to vector<43x2xf32>
      %863 = arith.mulf %862, %858 : vector<43x2xf32>
      %864 = arith.addf %851, %863 : vector<43x2xf32>
      %865 = vector.broadcast %60 : f32 to vector<43x2xf32>
      %866 = arith.mulf %865, %858 : vector<43x2xf32>
      %867 = arith.addf %854, %866 : vector<43x2xf32>
      %c1_i32_249 = arith.constant 1 : i32
      %868 = arith.addi %80, %c1_i32_249 : i32
      %c3_250 = arith.constant 3 : index
      %869 = arith.index_cast %868 : i32 to index
      %c0_251 = arith.constant 0 : index
      %c0_252 = arith.constant 0 : index
      %870 = vector.load %arg1[%c3_250, %869, %c0_251, %c0_252] : memref<4x45x45x2xf32, #tpu.memory_space<vmem>>, vector<1x1x43x2xf32>
      %871 = vector.shape_cast %870 : vector<1x1x43x2xf32> to vector<43x2xf32>
      %872 = vector.broadcast %11 : f32 to vector<43x2xf32>
      %873 = arith.mulf %872, %871 : vector<43x2xf32>
      %874 = arith.addf %861, %873 : vector<43x2xf32>
      %875 = vector.broadcast %36 : f32 to vector<43x2xf32>
      %876 = arith.mulf %875, %871 : vector<43x2xf32>
      %877 = arith.addf %864, %876 : vector<43x2xf32>
      %878 = vector.broadcast %61 : f32 to vector<43x2xf32>
      %879 = arith.mulf %878, %871 : vector<43x2xf32>
      %880 = arith.addf %867, %879 : vector<43x2xf32>
      %c1_i32_253 = arith.constant 1 : i32
      %881 = arith.addi %80, %c1_i32_253 : i32
      %c2_254 = arith.constant 2 : index
      %882 = arith.index_cast %881 : i32 to index
      %c1_255 = arith.constant 1 : index
      %c0_256 = arith.constant 0 : index
      %883 = vector.load %arg1[%c2_254, %882, %c1_255, %c0_256] : memref<4x45x45x2xf32, #tpu.memory_space<vmem>>, vector<1x1x43x2xf32>
      %884 = vector.shape_cast %883 : vector<1x1x43x2xf32> to vector<43x2xf32>
      %885 = vector.broadcast %12 : f32 to vector<43x2xf32>
      %886 = arith.mulf %885, %884 : vector<43x2xf32>
      %887 = arith.addf %874, %886 : vector<43x2xf32>
      %888 = vector.broadcast %37 : f32 to vector<43x2xf32>
      %889 = arith.mulf %888, %884 : vector<43x2xf32>
      %890 = arith.addf %877, %889 : vector<43x2xf32>
      %891 = vector.broadcast %62 : f32 to vector<43x2xf32>
      %892 = arith.mulf %891, %884 : vector<43x2xf32>
      %893 = arith.addf %880, %892 : vector<43x2xf32>
      %c1_i32_257 = arith.constant 1 : i32
      %894 = arith.addi %80, %c1_i32_257 : i32
      %c3_258 = arith.constant 3 : index
      %895 = arith.index_cast %894 : i32 to index
      %c1_259 = arith.constant 1 : index
      %c0_260 = arith.constant 0 : index
      %896 = vector.load %arg1[%c3_258, %895, %c1_259, %c0_260] : memref<4x45x45x2xf32, #tpu.memory_space<vmem>>, vector<1x1x43x2xf32>
      %897 = vector.shape_cast %896 : vector<1x1x43x2xf32> to vector<43x2xf32>
      %898 = vector.broadcast %13 : f32 to vector<43x2xf32>
      %899 = arith.mulf %898, %897 : vector<43x2xf32>
      %900 = arith.addf %887, %899 : vector<43x2xf32>
      %901 = vector.broadcast %38 : f32 to vector<43x2xf32>
      %902 = arith.mulf %901, %897 : vector<43x2xf32>
      %903 = arith.addf %890, %902 : vector<43x2xf32>
      %904 = vector.broadcast %63 : f32 to vector<43x2xf32>
      %905 = arith.mulf %904, %897 : vector<43x2xf32>
      %906 = arith.addf %893, %905 : vector<43x2xf32>
      %c1_i32_261 = arith.constant 1 : i32
      %907 = arith.addi %80, %c1_i32_261 : i32
      %c2_262 = arith.constant 2 : index
      %908 = arith.index_cast %907 : i32 to index
      %c2_263 = arith.constant 2 : index
      %c0_264 = arith.constant 0 : index
      %909 = vector.load %arg1[%c2_262, %908, %c2_263, %c0_264] : memref<4x45x45x2xf32, #tpu.memory_space<vmem>>, vector<1x1x43x2xf32>
      %910 = vector.shape_cast %909 : vector<1x1x43x2xf32> to vector<43x2xf32>
      %911 = vector.broadcast %14 : f32 to vector<43x2xf32>
      %912 = arith.mulf %911, %910 : vector<43x2xf32>
      %913 = arith.addf %900, %912 : vector<43x2xf32>
      %914 = vector.broadcast %39 : f32 to vector<43x2xf32>
      %915 = arith.mulf %914, %910 : vector<43x2xf32>
      %916 = arith.addf %903, %915 : vector<43x2xf32>
      %917 = vector.broadcast %64 : f32 to vector<43x2xf32>
      %918 = arith.mulf %917, %910 : vector<43x2xf32>
      %919 = arith.addf %906, %918 : vector<43x2xf32>
      %c2_i32_265 = arith.constant 2 : i32
      %920 = arith.addi %80, %c2_i32_265 : i32
      %c0_266 = arith.constant 0 : index
      %921 = arith.index_cast %920 : i32 to index
      %c0_267 = arith.constant 0 : index
      %c0_268 = arith.constant 0 : index
      %922 = vector.load %arg1[%c0_266, %921, %c0_267, %c0_268] : memref<4x45x45x2xf32, #tpu.memory_space<vmem>>, vector<1x1x43x2xf32>
      %923 = vector.shape_cast %922 : vector<1x1x43x2xf32> to vector<43x2xf32>
      %924 = vector.broadcast %15 : f32 to vector<43x2xf32>
      %925 = arith.mulf %924, %923 : vector<43x2xf32>
      %926 = arith.addf %913, %925 : vector<43x2xf32>
      %927 = vector.broadcast %40 : f32 to vector<43x2xf32>
      %928 = arith.mulf %927, %923 : vector<43x2xf32>
      %929 = arith.addf %916, %928 : vector<43x2xf32>
      %930 = vector.broadcast %65 : f32 to vector<43x2xf32>
      %931 = arith.mulf %930, %923 : vector<43x2xf32>
      %932 = arith.addf %919, %931 : vector<43x2xf32>
      %c2_i32_269 = arith.constant 2 : i32
      %933 = arith.addi %80, %c2_i32_269 : i32
      %c1_270 = arith.constant 1 : index
      %934 = arith.index_cast %933 : i32 to index
      %c0_271 = arith.constant 0 : index
      %c0_272 = arith.constant 0 : index
      %935 = vector.load %arg1[%c1_270, %934, %c0_271, %c0_272] : memref<4x45x45x2xf32, #tpu.memory_space<vmem>>, vector<1x1x43x2xf32>
      %936 = vector.shape_cast %935 : vector<1x1x43x2xf32> to vector<43x2xf32>
      %937 = vector.broadcast %16 : f32 to vector<43x2xf32>
      %938 = arith.mulf %937, %936 : vector<43x2xf32>
      %939 = arith.addf %926, %938 : vector<43x2xf32>
      %940 = vector.broadcast %41 : f32 to vector<43x2xf32>
      %941 = arith.mulf %940, %936 : vector<43x2xf32>
      %942 = arith.addf %929, %941 : vector<43x2xf32>
      %943 = vector.broadcast %66 : f32 to vector<43x2xf32>
      %944 = arith.mulf %943, %936 : vector<43x2xf32>
      %945 = arith.addf %932, %944 : vector<43x2xf32>
      %c2_i32_273 = arith.constant 2 : i32
      %946 = arith.addi %80, %c2_i32_273 : i32
      %c0_274 = arith.constant 0 : index
      %947 = arith.index_cast %946 : i32 to index
      %c1_275 = arith.constant 1 : index
      %c0_276 = arith.constant 0 : index
      %948 = vector.load %arg1[%c0_274, %947, %c1_275, %c0_276] : memref<4x45x45x2xf32, #tpu.memory_space<vmem>>, vector<1x1x43x2xf32>
      %949 = vector.shape_cast %948 : vector<1x1x43x2xf32> to vector<43x2xf32>
      %950 = vector.broadcast %17 : f32 to vector<43x2xf32>
      %951 = arith.mulf %950, %949 : vector<43x2xf32>
      %952 = arith.addf %939, %951 : vector<43x2xf32>
      %953 = vector.broadcast %42 : f32 to vector<43x2xf32>
      %954 = arith.mulf %953, %949 : vector<43x2xf32>
      %955 = arith.addf %942, %954 : vector<43x2xf32>
      %956 = vector.broadcast %67 : f32 to vector<43x2xf32>
      %957 = arith.mulf %956, %949 : vector<43x2xf32>
      %958 = arith.addf %945, %957 : vector<43x2xf32>
      %c2_i32_277 = arith.constant 2 : i32
      %959 = arith.addi %80, %c2_i32_277 : i32
      %c1_278 = arith.constant 1 : index
      %960 = arith.index_cast %959 : i32 to index
      %c1_279 = arith.constant 1 : index
      %c0_280 = arith.constant 0 : index
      %961 = vector.load %arg1[%c1_278, %960, %c1_279, %c0_280] : memref<4x45x45x2xf32, #tpu.memory_space<vmem>>, vector<1x1x43x2xf32>
      %962 = vector.shape_cast %961 : vector<1x1x43x2xf32> to vector<43x2xf32>
      %963 = vector.broadcast %18 : f32 to vector<43x2xf32>
      %964 = arith.mulf %963, %962 : vector<43x2xf32>
      %965 = arith.addf %952, %964 : vector<43x2xf32>
      %966 = vector.broadcast %43 : f32 to vector<43x2xf32>
      %967 = arith.mulf %966, %962 : vector<43x2xf32>
      %968 = arith.addf %955, %967 : vector<43x2xf32>
      %969 = vector.broadcast %68 : f32 to vector<43x2xf32>
      %970 = arith.mulf %969, %962 : vector<43x2xf32>
      %971 = arith.addf %958, %970 : vector<43x2xf32>
      %c2_i32_281 = arith.constant 2 : i32
      %972 = arith.addi %80, %c2_i32_281 : i32
      %c0_282 = arith.constant 0 : index
      %973 = arith.index_cast %972 : i32 to index
      %c2_283 = arith.constant 2 : index
      %c0_284 = arith.constant 0 : index
      %974 = vector.load %arg1[%c0_282, %973, %c2_283, %c0_284] : memref<4x45x45x2xf32, #tpu.memory_space<vmem>>, vector<1x1x43x2xf32>
      %975 = vector.shape_cast %974 : vector<1x1x43x2xf32> to vector<43x2xf32>
      %976 = vector.broadcast %19 : f32 to vector<43x2xf32>
      %977 = arith.mulf %976, %975 : vector<43x2xf32>
      %978 = arith.addf %965, %977 : vector<43x2xf32>
      %979 = vector.broadcast %44 : f32 to vector<43x2xf32>
      %980 = arith.mulf %979, %975 : vector<43x2xf32>
      %981 = arith.addf %968, %980 : vector<43x2xf32>
      %982 = vector.broadcast %69 : f32 to vector<43x2xf32>
      %983 = arith.mulf %982, %975 : vector<43x2xf32>
      %984 = arith.addf %971, %983 : vector<43x2xf32>
      %c2_i32_285 = arith.constant 2 : i32
      %985 = arith.addi %80, %c2_i32_285 : i32
      %c2_286 = arith.constant 2 : index
      %986 = arith.index_cast %985 : i32 to index
      %c0_287 = arith.constant 0 : index
      %c0_288 = arith.constant 0 : index
      %987 = vector.load %arg1[%c2_286, %986, %c0_287, %c0_288] : memref<4x45x45x2xf32, #tpu.memory_space<vmem>>, vector<1x1x43x2xf32>
      %988 = vector.shape_cast %987 : vector<1x1x43x2xf32> to vector<43x2xf32>
      %989 = vector.broadcast %20 : f32 to vector<43x2xf32>
      %990 = arith.mulf %989, %988 : vector<43x2xf32>
      %991 = arith.addf %978, %990 : vector<43x2xf32>
      %992 = vector.broadcast %45 : f32 to vector<43x2xf32>
      %993 = arith.mulf %992, %988 : vector<43x2xf32>
      %994 = arith.addf %981, %993 : vector<43x2xf32>
      %995 = vector.broadcast %70 : f32 to vector<43x2xf32>
      %996 = arith.mulf %995, %988 : vector<43x2xf32>
      %997 = arith.addf %984, %996 : vector<43x2xf32>
      %c2_i32_289 = arith.constant 2 : i32
      %998 = arith.addi %80, %c2_i32_289 : i32
      %c3_290 = arith.constant 3 : index
      %999 = arith.index_cast %998 : i32 to index
      %c0_291 = arith.constant 0 : index
      %c0_292 = arith.constant 0 : index
      %1000 = vector.load %arg1[%c3_290, %999, %c0_291, %c0_292] : memref<4x45x45x2xf32, #tpu.memory_space<vmem>>, vector<1x1x43x2xf32>
      %1001 = vector.shape_cast %1000 : vector<1x1x43x2xf32> to vector<43x2xf32>
      %1002 = vector.broadcast %21 : f32 to vector<43x2xf32>
      %1003 = arith.mulf %1002, %1001 : vector<43x2xf32>
      %1004 = arith.addf %991, %1003 : vector<43x2xf32>
      %1005 = vector.broadcast %46 : f32 to vector<43x2xf32>
      %1006 = arith.mulf %1005, %1001 : vector<43x2xf32>
      %1007 = arith.addf %994, %1006 : vector<43x2xf32>
      %1008 = vector.broadcast %71 : f32 to vector<43x2xf32>
      %1009 = arith.mulf %1008, %1001 : vector<43x2xf32>
      %1010 = arith.addf %997, %1009 : vector<43x2xf32>
      %c2_i32_293 = arith.constant 2 : i32
      %1011 = arith.addi %80, %c2_i32_293 : i32
      %c2_294 = arith.constant 2 : index
      %1012 = arith.index_cast %1011 : i32 to index
      %c1_295 = arith.constant 1 : index
      %c0_296 = arith.constant 0 : index
      %1013 = vector.load %arg1[%c2_294, %1012, %c1_295, %c0_296] : memref<4x45x45x2xf32, #tpu.memory_space<vmem>>, vector<1x1x43x2xf32>
      %1014 = vector.shape_cast %1013 : vector<1x1x43x2xf32> to vector<43x2xf32>
      %1015 = vector.broadcast %22 : f32 to vector<43x2xf32>
      %1016 = arith.mulf %1015, %1014 : vector<43x2xf32>
      %1017 = arith.addf %1004, %1016 : vector<43x2xf32>
      %1018 = vector.broadcast %47 : f32 to vector<43x2xf32>
      %1019 = arith.mulf %1018, %1014 : vector<43x2xf32>
      %1020 = arith.addf %1007, %1019 : vector<43x2xf32>
      %1021 = vector.broadcast %72 : f32 to vector<43x2xf32>
      %1022 = arith.mulf %1021, %1014 : vector<43x2xf32>
      %1023 = arith.addf %1010, %1022 : vector<43x2xf32>
      %c2_i32_297 = arith.constant 2 : i32
      %1024 = arith.addi %80, %c2_i32_297 : i32
      %c3_298 = arith.constant 3 : index
      %1025 = arith.index_cast %1024 : i32 to index
      %c1_299 = arith.constant 1 : index
      %c0_300 = arith.constant 0 : index
      %1026 = vector.load %arg1[%c3_298, %1025, %c1_299, %c0_300] : memref<4x45x45x2xf32, #tpu.memory_space<vmem>>, vector<1x1x43x2xf32>
      %1027 = vector.shape_cast %1026 : vector<1x1x43x2xf32> to vector<43x2xf32>
      %1028 = vector.broadcast %23 : f32 to vector<43x2xf32>
      %1029 = arith.mulf %1028, %1027 : vector<43x2xf32>
      %1030 = arith.addf %1017, %1029 : vector<43x2xf32>
      %1031 = vector.broadcast %48 : f32 to vector<43x2xf32>
      %1032 = arith.mulf %1031, %1027 : vector<43x2xf32>
      %1033 = arith.addf %1020, %1032 : vector<43x2xf32>
      %1034 = vector.broadcast %73 : f32 to vector<43x2xf32>
      %1035 = arith.mulf %1034, %1027 : vector<43x2xf32>
      %1036 = arith.addf %1023, %1035 : vector<43x2xf32>
      %c2_i32_301 = arith.constant 2 : i32
      %1037 = arith.addi %80, %c2_i32_301 : i32
      %c2_302 = arith.constant 2 : index
      %1038 = arith.index_cast %1037 : i32 to index
      %c2_303 = arith.constant 2 : index
      %c0_304 = arith.constant 0 : index
      %1039 = vector.load %arg1[%c2_302, %1038, %c2_303, %c0_304] : memref<4x45x45x2xf32, #tpu.memory_space<vmem>>, vector<1x1x43x2xf32>
      %1040 = vector.shape_cast %1039 : vector<1x1x43x2xf32> to vector<43x2xf32>
      %1041 = vector.broadcast %24 : f32 to vector<43x2xf32>
      %1042 = arith.mulf %1041, %1040 : vector<43x2xf32>
      %1043 = arith.addf %1030, %1042 : vector<43x2xf32>
      %1044 = vector.broadcast %49 : f32 to vector<43x2xf32>
      %1045 = arith.mulf %1044, %1040 : vector<43x2xf32>
      %1046 = arith.addf %1033, %1045 : vector<43x2xf32>
      %1047 = vector.broadcast %74 : f32 to vector<43x2xf32>
      %1048 = arith.mulf %1047, %1040 : vector<43x2xf32>
      %1049 = arith.addf %1036, %1048 : vector<43x2xf32>
      %1050 = arith.maximumf %725, %1043 : vector<43x2xf32>
      %1051 = arith.maximumf %726, %1046 : vector<43x2xf32>
      %1052 = arith.maximumf %727, %1049 : vector<43x2xf32>
      %c0_i32_305 = arith.constant 0 : i32
      %1053 = arith.addi %80, %c0_i32_305 : i32
      %c3_306 = arith.constant 3 : index
      %1054 = arith.index_cast %1053 : i32 to index
      %c0_307 = arith.constant 0 : index
      %c0_308 = arith.constant 0 : index
      %1055 = vector.load %arg1[%c3_306, %1054, %c0_307, %c0_308] : memref<4x45x45x2xf32, #tpu.memory_space<vmem>>, vector<1x1x43x2xf32>
      %1056 = vector.shape_cast %1055 : vector<1x1x43x2xf32> to vector<43x2xf32>
      %1057 = vector.broadcast %0 : f32 to vector<43x2xf32>
      %1058 = arith.mulf %1057, %1056 : vector<43x2xf32>
      %1059 = vector.broadcast %25 : f32 to vector<43x2xf32>
      %1060 = arith.mulf %1059, %1056 : vector<43x2xf32>
      %1061 = vector.broadcast %50 : f32 to vector<43x2xf32>
      %1062 = arith.mulf %1061, %1056 : vector<43x2xf32>
      %c0_i32_309 = arith.constant 0 : i32
      %1063 = arith.addi %80, %c0_i32_309 : i32
      %c2_310 = arith.constant 2 : index
      %1064 = arith.index_cast %1063 : i32 to index
      %c1_311 = arith.constant 1 : index
      %c0_312 = arith.constant 0 : index
      %1065 = vector.load %arg1[%c2_310, %1064, %c1_311, %c0_312] : memref<4x45x45x2xf32, #tpu.memory_space<vmem>>, vector<1x1x43x2xf32>
      %1066 = vector.shape_cast %1065 : vector<1x1x43x2xf32> to vector<43x2xf32>
      %1067 = vector.broadcast %1 : f32 to vector<43x2xf32>
      %1068 = arith.mulf %1067, %1066 : vector<43x2xf32>
      %1069 = arith.addf %1058, %1068 : vector<43x2xf32>
      %1070 = vector.broadcast %26 : f32 to vector<43x2xf32>
      %1071 = arith.mulf %1070, %1066 : vector<43x2xf32>
      %1072 = arith.addf %1060, %1071 : vector<43x2xf32>
      %1073 = vector.broadcast %51 : f32 to vector<43x2xf32>
      %1074 = arith.mulf %1073, %1066 : vector<43x2xf32>
      %1075 = arith.addf %1062, %1074 : vector<43x2xf32>
      %c0_i32_313 = arith.constant 0 : i32
      %1076 = arith.addi %80, %c0_i32_313 : i32
      %c3_314 = arith.constant 3 : index
      %1077 = arith.index_cast %1076 : i32 to index
      %c1_315 = arith.constant 1 : index
      %c0_316 = arith.constant 0 : index
      %1078 = vector.load %arg1[%c3_314, %1077, %c1_315, %c0_316] : memref<4x45x45x2xf32, #tpu.memory_space<vmem>>, vector<1x1x43x2xf32>
      %1079 = vector.shape_cast %1078 : vector<1x1x43x2xf32> to vector<43x2xf32>
      %1080 = vector.broadcast %2 : f32 to vector<43x2xf32>
      %1081 = arith.mulf %1080, %1079 : vector<43x2xf32>
      %1082 = arith.addf %1069, %1081 : vector<43x2xf32>
      %1083 = vector.broadcast %27 : f32 to vector<43x2xf32>
      %1084 = arith.mulf %1083, %1079 : vector<43x2xf32>
      %1085 = arith.addf %1072, %1084 : vector<43x2xf32>
      %1086 = vector.broadcast %52 : f32 to vector<43x2xf32>
      %1087 = arith.mulf %1086, %1079 : vector<43x2xf32>
      %1088 = arith.addf %1075, %1087 : vector<43x2xf32>
      %c0_i32_317 = arith.constant 0 : i32
      %1089 = arith.addi %80, %c0_i32_317 : i32
      %c2_318 = arith.constant 2 : index
      %1090 = arith.index_cast %1089 : i32 to index
      %c2_319 = arith.constant 2 : index
      %c0_320 = arith.constant 0 : index
      %1091 = vector.load %arg1[%c2_318, %1090, %c2_319, %c0_320] : memref<4x45x45x2xf32, #tpu.memory_space<vmem>>, vector<1x1x43x2xf32>
      %1092 = vector.shape_cast %1091 : vector<1x1x43x2xf32> to vector<43x2xf32>
      %1093 = vector.broadcast %3 : f32 to vector<43x2xf32>
      %1094 = arith.mulf %1093, %1092 : vector<43x2xf32>
      %1095 = arith.addf %1082, %1094 : vector<43x2xf32>
      %1096 = vector.broadcast %28 : f32 to vector<43x2xf32>
      %1097 = arith.mulf %1096, %1092 : vector<43x2xf32>
      %1098 = arith.addf %1085, %1097 : vector<43x2xf32>
      %1099 = vector.broadcast %53 : f32 to vector<43x2xf32>
      %1100 = arith.mulf %1099, %1092 : vector<43x2xf32>
      %1101 = arith.addf %1088, %1100 : vector<43x2xf32>
      %c0_i32_321 = arith.constant 0 : i32
      %1102 = arith.addi %80, %c0_i32_321 : i32
      %c3_322 = arith.constant 3 : index
      %1103 = arith.index_cast %1102 : i32 to index
      %c2_323 = arith.constant 2 : index
      %c0_324 = arith.constant 0 : index
      %1104 = vector.load %arg1[%c3_322, %1103, %c2_323, %c0_324] : memref<4x45x45x2xf32, #tpu.memory_space<vmem>>, vector<1x1x43x2xf32>
      %1105 = vector.shape_cast %1104 : vector<1x1x43x2xf32> to vector<43x2xf32>
      %1106 = vector.broadcast %4 : f32 to vector<43x2xf32>
      %1107 = arith.mulf %1106, %1105 : vector<43x2xf32>
      %1108 = arith.addf %1095, %1107 : vector<43x2xf32>
      %1109 = vector.broadcast %29 : f32 to vector<43x2xf32>
      %1110 = arith.mulf %1109, %1105 : vector<43x2xf32>
      %1111 = arith.addf %1098, %1110 : vector<43x2xf32>
      %1112 = vector.broadcast %54 : f32 to vector<43x2xf32>
      %1113 = arith.mulf %1112, %1105 : vector<43x2xf32>
      %1114 = arith.addf %1101, %1113 : vector<43x2xf32>
      %c1_i32_325 = arith.constant 1 : i32
      %1115 = arith.addi %80, %c1_i32_325 : i32
      %c1_326 = arith.constant 1 : index
      %1116 = arith.index_cast %1115 : i32 to index
      %c0_327 = arith.constant 0 : index
      %c0_328 = arith.constant 0 : index
      %1117 = vector.load %arg1[%c1_326, %1116, %c0_327, %c0_328] : memref<4x45x45x2xf32, #tpu.memory_space<vmem>>, vector<1x1x43x2xf32>
      %1118 = vector.shape_cast %1117 : vector<1x1x43x2xf32> to vector<43x2xf32>
      %1119 = vector.broadcast %5 : f32 to vector<43x2xf32>
      %1120 = arith.mulf %1119, %1118 : vector<43x2xf32>
      %1121 = arith.addf %1108, %1120 : vector<43x2xf32>
      %1122 = vector.broadcast %30 : f32 to vector<43x2xf32>
      %1123 = arith.mulf %1122, %1118 : vector<43x2xf32>
      %1124 = arith.addf %1111, %1123 : vector<43x2xf32>
      %1125 = vector.broadcast %55 : f32 to vector<43x2xf32>
      %1126 = arith.mulf %1125, %1118 : vector<43x2xf32>
      %1127 = arith.addf %1114, %1126 : vector<43x2xf32>
      %c1_i32_329 = arith.constant 1 : i32
      %1128 = arith.addi %80, %c1_i32_329 : i32
      %c0_330 = arith.constant 0 : index
      %1129 = arith.index_cast %1128 : i32 to index
      %c1_331 = arith.constant 1 : index
      %c0_332 = arith.constant 0 : index
      %1130 = vector.load %arg1[%c0_330, %1129, %c1_331, %c0_332] : memref<4x45x45x2xf32, #tpu.memory_space<vmem>>, vector<1x1x43x2xf32>
      %1131 = vector.shape_cast %1130 : vector<1x1x43x2xf32> to vector<43x2xf32>
      %1132 = vector.broadcast %6 : f32 to vector<43x2xf32>
      %1133 = arith.mulf %1132, %1131 : vector<43x2xf32>
      %1134 = arith.addf %1121, %1133 : vector<43x2xf32>
      %1135 = vector.broadcast %31 : f32 to vector<43x2xf32>
      %1136 = arith.mulf %1135, %1131 : vector<43x2xf32>
      %1137 = arith.addf %1124, %1136 : vector<43x2xf32>
      %1138 = vector.broadcast %56 : f32 to vector<43x2xf32>
      %1139 = arith.mulf %1138, %1131 : vector<43x2xf32>
      %1140 = arith.addf %1127, %1139 : vector<43x2xf32>
      %c1_i32_333 = arith.constant 1 : i32
      %1141 = arith.addi %80, %c1_i32_333 : i32
      %c1_334 = arith.constant 1 : index
      %1142 = arith.index_cast %1141 : i32 to index
      %c1_335 = arith.constant 1 : index
      %c0_336 = arith.constant 0 : index
      %1143 = vector.load %arg1[%c1_334, %1142, %c1_335, %c0_336] : memref<4x45x45x2xf32, #tpu.memory_space<vmem>>, vector<1x1x43x2xf32>
      %1144 = vector.shape_cast %1143 : vector<1x1x43x2xf32> to vector<43x2xf32>
      %1145 = vector.broadcast %7 : f32 to vector<43x2xf32>
      %1146 = arith.mulf %1145, %1144 : vector<43x2xf32>
      %1147 = arith.addf %1134, %1146 : vector<43x2xf32>
      %1148 = vector.broadcast %32 : f32 to vector<43x2xf32>
      %1149 = arith.mulf %1148, %1144 : vector<43x2xf32>
      %1150 = arith.addf %1137, %1149 : vector<43x2xf32>
      %1151 = vector.broadcast %57 : f32 to vector<43x2xf32>
      %1152 = arith.mulf %1151, %1144 : vector<43x2xf32>
      %1153 = arith.addf %1140, %1152 : vector<43x2xf32>
      %c1_i32_337 = arith.constant 1 : i32
      %1154 = arith.addi %80, %c1_i32_337 : i32
      %c0_338 = arith.constant 0 : index
      %1155 = arith.index_cast %1154 : i32 to index
      %c2_339 = arith.constant 2 : index
      %c0_340 = arith.constant 0 : index
      %1156 = vector.load %arg1[%c0_338, %1155, %c2_339, %c0_340] : memref<4x45x45x2xf32, #tpu.memory_space<vmem>>, vector<1x1x43x2xf32>
      %1157 = vector.shape_cast %1156 : vector<1x1x43x2xf32> to vector<43x2xf32>
      %1158 = vector.broadcast %8 : f32 to vector<43x2xf32>
      %1159 = arith.mulf %1158, %1157 : vector<43x2xf32>
      %1160 = arith.addf %1147, %1159 : vector<43x2xf32>
      %1161 = vector.broadcast %33 : f32 to vector<43x2xf32>
      %1162 = arith.mulf %1161, %1157 : vector<43x2xf32>
      %1163 = arith.addf %1150, %1162 : vector<43x2xf32>
      %1164 = vector.broadcast %58 : f32 to vector<43x2xf32>
      %1165 = arith.mulf %1164, %1157 : vector<43x2xf32>
      %1166 = arith.addf %1153, %1165 : vector<43x2xf32>
      %c1_i32_341 = arith.constant 1 : i32
      %1167 = arith.addi %80, %c1_i32_341 : i32
      %c1_342 = arith.constant 1 : index
      %1168 = arith.index_cast %1167 : i32 to index
      %c2_343 = arith.constant 2 : index
      %c0_344 = arith.constant 0 : index
      %1169 = vector.load %arg1[%c1_342, %1168, %c2_343, %c0_344] : memref<4x45x45x2xf32, #tpu.memory_space<vmem>>, vector<1x1x43x2xf32>
      %1170 = vector.shape_cast %1169 : vector<1x1x43x2xf32> to vector<43x2xf32>
      %1171 = vector.broadcast %9 : f32 to vector<43x2xf32>
      %1172 = arith.mulf %1171, %1170 : vector<43x2xf32>
      %1173 = arith.addf %1160, %1172 : vector<43x2xf32>
      %1174 = vector.broadcast %34 : f32 to vector<43x2xf32>
      %1175 = arith.mulf %1174, %1170 : vector<43x2xf32>
      %1176 = arith.addf %1163, %1175 : vector<43x2xf32>
      %1177 = vector.broadcast %59 : f32 to vector<43x2xf32>
      %1178 = arith.mulf %1177, %1170 : vector<43x2xf32>
      %1179 = arith.addf %1166, %1178 : vector<43x2xf32>
      %c1_i32_345 = arith.constant 1 : i32
      %1180 = arith.addi %80, %c1_i32_345 : i32
      %c3_346 = arith.constant 3 : index
      %1181 = arith.index_cast %1180 : i32 to index
      %c0_347 = arith.constant 0 : index
      %c0_348 = arith.constant 0 : index
      %1182 = vector.load %arg1[%c3_346, %1181, %c0_347, %c0_348] : memref<4x45x45x2xf32, #tpu.memory_space<vmem>>, vector<1x1x43x2xf32>
      %1183 = vector.shape_cast %1182 : vector<1x1x43x2xf32> to vector<43x2xf32>
      %1184 = vector.broadcast %10 : f32 to vector<43x2xf32>
      %1185 = arith.mulf %1184, %1183 : vector<43x2xf32>
      %1186 = arith.addf %1173, %1185 : vector<43x2xf32>
      %1187 = vector.broadcast %35 : f32 to vector<43x2xf32>
      %1188 = arith.mulf %1187, %1183 : vector<43x2xf32>
      %1189 = arith.addf %1176, %1188 : vector<43x2xf32>
      %1190 = vector.broadcast %60 : f32 to vector<43x2xf32>
      %1191 = arith.mulf %1190, %1183 : vector<43x2xf32>
      %1192 = arith.addf %1179, %1191 : vector<43x2xf32>
      %c1_i32_349 = arith.constant 1 : i32
      %1193 = arith.addi %80, %c1_i32_349 : i32
      %c2_350 = arith.constant 2 : index
      %1194 = arith.index_cast %1193 : i32 to index
      %c1_351 = arith.constant 1 : index
      %c0_352 = arith.constant 0 : index
      %1195 = vector.load %arg1[%c2_350, %1194, %c1_351, %c0_352] : memref<4x45x45x2xf32, #tpu.memory_space<vmem>>, vector<1x1x43x2xf32>
      %1196 = vector.shape_cast %1195 : vector<1x1x43x2xf32> to vector<43x2xf32>
      %1197 = vector.broadcast %11 : f32 to vector<43x2xf32>
      %1198 = arith.mulf %1197, %1196 : vector<43x2xf32>
      %1199 = arith.addf %1186, %1198 : vector<43x2xf32>
      %1200 = vector.broadcast %36 : f32 to vector<43x2xf32>
      %1201 = arith.mulf %1200, %1196 : vector<43x2xf32>
      %1202 = arith.addf %1189, %1201 : vector<43x2xf32>
      %1203 = vector.broadcast %61 : f32 to vector<43x2xf32>
      %1204 = arith.mulf %1203, %1196 : vector<43x2xf32>
      %1205 = arith.addf %1192, %1204 : vector<43x2xf32>
      %c1_i32_353 = arith.constant 1 : i32
      %1206 = arith.addi %80, %c1_i32_353 : i32
      %c3_354 = arith.constant 3 : index
      %1207 = arith.index_cast %1206 : i32 to index
      %c1_355 = arith.constant 1 : index
      %c0_356 = arith.constant 0 : index
      %1208 = vector.load %arg1[%c3_354, %1207, %c1_355, %c0_356] : memref<4x45x45x2xf32, #tpu.memory_space<vmem>>, vector<1x1x43x2xf32>
      %1209 = vector.shape_cast %1208 : vector<1x1x43x2xf32> to vector<43x2xf32>
      %1210 = vector.broadcast %12 : f32 to vector<43x2xf32>
      %1211 = arith.mulf %1210, %1209 : vector<43x2xf32>
      %1212 = arith.addf %1199, %1211 : vector<43x2xf32>
      %1213 = vector.broadcast %37 : f32 to vector<43x2xf32>
      %1214 = arith.mulf %1213, %1209 : vector<43x2xf32>
      %1215 = arith.addf %1202, %1214 : vector<43x2xf32>
      %1216 = vector.broadcast %62 : f32 to vector<43x2xf32>
      %1217 = arith.mulf %1216, %1209 : vector<43x2xf32>
      %1218 = arith.addf %1205, %1217 : vector<43x2xf32>
      %c1_i32_357 = arith.constant 1 : i32
      %1219 = arith.addi %80, %c1_i32_357 : i32
      %c2_358 = arith.constant 2 : index
      %1220 = arith.index_cast %1219 : i32 to index
      %c2_359 = arith.constant 2 : index
      %c0_360 = arith.constant 0 : index
      %1221 = vector.load %arg1[%c2_358, %1220, %c2_359, %c0_360] : memref<4x45x45x2xf32, #tpu.memory_space<vmem>>, vector<1x1x43x2xf32>
      %1222 = vector.shape_cast %1221 : vector<1x1x43x2xf32> to vector<43x2xf32>
      %1223 = vector.broadcast %13 : f32 to vector<43x2xf32>
      %1224 = arith.mulf %1223, %1222 : vector<43x2xf32>
      %1225 = arith.addf %1212, %1224 : vector<43x2xf32>
      %1226 = vector.broadcast %38 : f32 to vector<43x2xf32>
      %1227 = arith.mulf %1226, %1222 : vector<43x2xf32>
      %1228 = arith.addf %1215, %1227 : vector<43x2xf32>
      %1229 = vector.broadcast %63 : f32 to vector<43x2xf32>
      %1230 = arith.mulf %1229, %1222 : vector<43x2xf32>
      %1231 = arith.addf %1218, %1230 : vector<43x2xf32>
      %c1_i32_361 = arith.constant 1 : i32
      %1232 = arith.addi %80, %c1_i32_361 : i32
      %c3_362 = arith.constant 3 : index
      %1233 = arith.index_cast %1232 : i32 to index
      %c2_363 = arith.constant 2 : index
      %c0_364 = arith.constant 0 : index
      %1234 = vector.load %arg1[%c3_362, %1233, %c2_363, %c0_364] : memref<4x45x45x2xf32, #tpu.memory_space<vmem>>, vector<1x1x43x2xf32>
      %1235 = vector.shape_cast %1234 : vector<1x1x43x2xf32> to vector<43x2xf32>
      %1236 = vector.broadcast %14 : f32 to vector<43x2xf32>
      %1237 = arith.mulf %1236, %1235 : vector<43x2xf32>
      %1238 = arith.addf %1225, %1237 : vector<43x2xf32>
      %1239 = vector.broadcast %39 : f32 to vector<43x2xf32>
      %1240 = arith.mulf %1239, %1235 : vector<43x2xf32>
      %1241 = arith.addf %1228, %1240 : vector<43x2xf32>
      %1242 = vector.broadcast %64 : f32 to vector<43x2xf32>
      %1243 = arith.mulf %1242, %1235 : vector<43x2xf32>
      %1244 = arith.addf %1231, %1243 : vector<43x2xf32>
      %c2_i32_365 = arith.constant 2 : i32
      %1245 = arith.addi %80, %c2_i32_365 : i32
      %c1_366 = arith.constant 1 : index
      %1246 = arith.index_cast %1245 : i32 to index
      %c0_367 = arith.constant 0 : index
      %c0_368 = arith.constant 0 : index
      %1247 = vector.load %arg1[%c1_366, %1246, %c0_367, %c0_368] : memref<4x45x45x2xf32, #tpu.memory_space<vmem>>, vector<1x1x43x2xf32>
      %1248 = vector.shape_cast %1247 : vector<1x1x43x2xf32> to vector<43x2xf32>
      %1249 = vector.broadcast %15 : f32 to vector<43x2xf32>
      %1250 = arith.mulf %1249, %1248 : vector<43x2xf32>
      %1251 = arith.addf %1238, %1250 : vector<43x2xf32>
      %1252 = vector.broadcast %40 : f32 to vector<43x2xf32>
      %1253 = arith.mulf %1252, %1248 : vector<43x2xf32>
      %1254 = arith.addf %1241, %1253 : vector<43x2xf32>
      %1255 = vector.broadcast %65 : f32 to vector<43x2xf32>
      %1256 = arith.mulf %1255, %1248 : vector<43x2xf32>
      %1257 = arith.addf %1244, %1256 : vector<43x2xf32>
      %c2_i32_369 = arith.constant 2 : i32
      %1258 = arith.addi %80, %c2_i32_369 : i32
      %c0_370 = arith.constant 0 : index
      %1259 = arith.index_cast %1258 : i32 to index
      %c1_371 = arith.constant 1 : index
      %c0_372 = arith.constant 0 : index
      %1260 = vector.load %arg1[%c0_370, %1259, %c1_371, %c0_372] : memref<4x45x45x2xf32, #tpu.memory_space<vmem>>, vector<1x1x43x2xf32>
      %1261 = vector.shape_cast %1260 : vector<1x1x43x2xf32> to vector<43x2xf32>
      %1262 = vector.broadcast %16 : f32 to vector<43x2xf32>
      %1263 = arith.mulf %1262, %1261 : vector<43x2xf32>
      %1264 = arith.addf %1251, %1263 : vector<43x2xf32>
      %1265 = vector.broadcast %41 : f32 to vector<43x2xf32>
      %1266 = arith.mulf %1265, %1261 : vector<43x2xf32>
      %1267 = arith.addf %1254, %1266 : vector<43x2xf32>
      %1268 = vector.broadcast %66 : f32 to vector<43x2xf32>
      %1269 = arith.mulf %1268, %1261 : vector<43x2xf32>
      %1270 = arith.addf %1257, %1269 : vector<43x2xf32>
      %c2_i32_373 = arith.constant 2 : i32
      %1271 = arith.addi %80, %c2_i32_373 : i32
      %c1_374 = arith.constant 1 : index
      %1272 = arith.index_cast %1271 : i32 to index
      %c1_375 = arith.constant 1 : index
      %c0_376 = arith.constant 0 : index
      %1273 = vector.load %arg1[%c1_374, %1272, %c1_375, %c0_376] : memref<4x45x45x2xf32, #tpu.memory_space<vmem>>, vector<1x1x43x2xf32>
      %1274 = vector.shape_cast %1273 : vector<1x1x43x2xf32> to vector<43x2xf32>
      %1275 = vector.broadcast %17 : f32 to vector<43x2xf32>
      %1276 = arith.mulf %1275, %1274 : vector<43x2xf32>
      %1277 = arith.addf %1264, %1276 : vector<43x2xf32>
      %1278 = vector.broadcast %42 : f32 to vector<43x2xf32>
      %1279 = arith.mulf %1278, %1274 : vector<43x2xf32>
      %1280 = arith.addf %1267, %1279 : vector<43x2xf32>
      %1281 = vector.broadcast %67 : f32 to vector<43x2xf32>
      %1282 = arith.mulf %1281, %1274 : vector<43x2xf32>
      %1283 = arith.addf %1270, %1282 : vector<43x2xf32>
      %c2_i32_377 = arith.constant 2 : i32
      %1284 = arith.addi %80, %c2_i32_377 : i32
      %c0_378 = arith.constant 0 : index
      %1285 = arith.index_cast %1284 : i32 to index
      %c2_379 = arith.constant 2 : index
      %c0_380 = arith.constant 0 : index
      %1286 = vector.load %arg1[%c0_378, %1285, %c2_379, %c0_380] : memref<4x45x45x2xf32, #tpu.memory_space<vmem>>, vector<1x1x43x2xf32>
      %1287 = vector.shape_cast %1286 : vector<1x1x43x2xf32> to vector<43x2xf32>
      %1288 = vector.broadcast %18 : f32 to vector<43x2xf32>
      %1289 = arith.mulf %1288, %1287 : vector<43x2xf32>
      %1290 = arith.addf %1277, %1289 : vector<43x2xf32>
      %1291 = vector.broadcast %43 : f32 to vector<43x2xf32>
      %1292 = arith.mulf %1291, %1287 : vector<43x2xf32>
      %1293 = arith.addf %1280, %1292 : vector<43x2xf32>
      %1294 = vector.broadcast %68 : f32 to vector<43x2xf32>
      %1295 = arith.mulf %1294, %1287 : vector<43x2xf32>
      %1296 = arith.addf %1283, %1295 : vector<43x2xf32>
      %c2_i32_381 = arith.constant 2 : i32
      %1297 = arith.addi %80, %c2_i32_381 : i32
      %c1_382 = arith.constant 1 : index
      %1298 = arith.index_cast %1297 : i32 to index
      %c2_383 = arith.constant 2 : index
      %c0_384 = arith.constant 0 : index
      %1299 = vector.load %arg1[%c1_382, %1298, %c2_383, %c0_384] : memref<4x45x45x2xf32, #tpu.memory_space<vmem>>, vector<1x1x43x2xf32>
      %1300 = vector.shape_cast %1299 : vector<1x1x43x2xf32> to vector<43x2xf32>
      %1301 = vector.broadcast %19 : f32 to vector<43x2xf32>
      %1302 = arith.mulf %1301, %1300 : vector<43x2xf32>
      %1303 = arith.addf %1290, %1302 : vector<43x2xf32>
      %1304 = vector.broadcast %44 : f32 to vector<43x2xf32>
      %1305 = arith.mulf %1304, %1300 : vector<43x2xf32>
      %1306 = arith.addf %1293, %1305 : vector<43x2xf32>
      %1307 = vector.broadcast %69 : f32 to vector<43x2xf32>
      %1308 = arith.mulf %1307, %1300 : vector<43x2xf32>
      %1309 = arith.addf %1296, %1308 : vector<43x2xf32>
      %c2_i32_385 = arith.constant 2 : i32
      %1310 = arith.addi %80, %c2_i32_385 : i32
      %c3_386 = arith.constant 3 : index
      %1311 = arith.index_cast %1310 : i32 to index
      %c0_387 = arith.constant 0 : index
      %c0_388 = arith.constant 0 : index
      %1312 = vector.load %arg1[%c3_386, %1311, %c0_387, %c0_388] : memref<4x45x45x2xf32, #tpu.memory_space<vmem>>, vector<1x1x43x2xf32>
      %1313 = vector.shape_cast %1312 : vector<1x1x43x2xf32> to vector<43x2xf32>
      %1314 = vector.broadcast %20 : f32 to vector<43x2xf32>
      %1315 = arith.mulf %1314, %1313 : vector<43x2xf32>
      %1316 = arith.addf %1303, %1315 : vector<43x2xf32>
      %1317 = vector.broadcast %45 : f32 to vector<43x2xf32>
      %1318 = arith.mulf %1317, %1313 : vector<43x2xf32>
      %1319 = arith.addf %1306, %1318 : vector<43x2xf32>
      %1320 = vector.broadcast %70 : f32 to vector<43x2xf32>
      %1321 = arith.mulf %1320, %1313 : vector<43x2xf32>
      %1322 = arith.addf %1309, %1321 : vector<43x2xf32>
      %c2_i32_389 = arith.constant 2 : i32
      %1323 = arith.addi %80, %c2_i32_389 : i32
      %c2_390 = arith.constant 2 : index
      %1324 = arith.index_cast %1323 : i32 to index
      %c1_391 = arith.constant 1 : index
      %c0_392 = arith.constant 0 : index
      %1325 = vector.load %arg1[%c2_390, %1324, %c1_391, %c0_392] : memref<4x45x45x2xf32, #tpu.memory_space<vmem>>, vector<1x1x43x2xf32>
      %1326 = vector.shape_cast %1325 : vector<1x1x43x2xf32> to vector<43x2xf32>
      %1327 = vector.broadcast %21 : f32 to vector<43x2xf32>
      %1328 = arith.mulf %1327, %1326 : vector<43x2xf32>
      %1329 = arith.addf %1316, %1328 : vector<43x2xf32>
      %1330 = vector.broadcast %46 : f32 to vector<43x2xf32>
      %1331 = arith.mulf %1330, %1326 : vector<43x2xf32>
      %1332 = arith.addf %1319, %1331 : vector<43x2xf32>
      %1333 = vector.broadcast %71 : f32 to vector<43x2xf32>
      %1334 = arith.mulf %1333, %1326 : vector<43x2xf32>
      %1335 = arith.addf %1322, %1334 : vector<43x2xf32>
      %c2_i32_393 = arith.constant 2 : i32
      %1336 = arith.addi %80, %c2_i32_393 : i32
      %c3_394 = arith.constant 3 : index
      %1337 = arith.index_cast %1336 : i32 to index
      %c1_395 = arith.constant 1 : index
      %c0_396 = arith.constant 0 : index
      %1338 = vector.load %arg1[%c3_394, %1337, %c1_395, %c0_396] : memref<4x45x45x2xf32, #tpu.memory_space<vmem>>, vector<1x1x43x2xf32>
      %1339 = vector.shape_cast %1338 : vector<1x1x43x2xf32> to vector<43x2xf32>
      %1340 = vector.broadcast %22 : f32 to vector<43x2xf32>
      %1341 = arith.mulf %1340, %1339 : vector<43x2xf32>
      %1342 = arith.addf %1329, %1341 : vector<43x2xf32>
      %1343 = vector.broadcast %47 : f32 to vector<43x2xf32>
      %1344 = arith.mulf %1343, %1339 : vector<43x2xf32>
      %1345 = arith.addf %1332, %1344 : vector<43x2xf32>
      %1346 = vector.broadcast %72 : f32 to vector<43x2xf32>
      %1347 = arith.mulf %1346, %1339 : vector<43x2xf32>
      %1348 = arith.addf %1335, %1347 : vector<43x2xf32>
      %c2_i32_397 = arith.constant 2 : i32
      %1349 = arith.addi %80, %c2_i32_397 : i32
      %c2_398 = arith.constant 2 : index
      %1350 = arith.index_cast %1349 : i32 to index
      %c2_399 = arith.constant 2 : index
      %c0_400 = arith.constant 0 : index
      %1351 = vector.load %arg1[%c2_398, %1350, %c2_399, %c0_400] : memref<4x45x45x2xf32, #tpu.memory_space<vmem>>, vector<1x1x43x2xf32>
      %1352 = vector.shape_cast %1351 : vector<1x1x43x2xf32> to vector<43x2xf32>
      %1353 = vector.broadcast %23 : f32 to vector<43x2xf32>
      %1354 = arith.mulf %1353, %1352 : vector<43x2xf32>
      %1355 = arith.addf %1342, %1354 : vector<43x2xf32>
      %1356 = vector.broadcast %48 : f32 to vector<43x2xf32>
      %1357 = arith.mulf %1356, %1352 : vector<43x2xf32>
      %1358 = arith.addf %1345, %1357 : vector<43x2xf32>
      %1359 = vector.broadcast %73 : f32 to vector<43x2xf32>
      %1360 = arith.mulf %1359, %1352 : vector<43x2xf32>
      %1361 = arith.addf %1348, %1360 : vector<43x2xf32>
      %c2_i32_401 = arith.constant 2 : i32
      %1362 = arith.addi %80, %c2_i32_401 : i32
      %c3_402 = arith.constant 3 : index
      %1363 = arith.index_cast %1362 : i32 to index
      %c2_403 = arith.constant 2 : index
      %c0_404 = arith.constant 0 : index
      %1364 = vector.load %arg1[%c3_402, %1363, %c2_403, %c0_404] : memref<4x45x45x2xf32, #tpu.memory_space<vmem>>, vector<1x1x43x2xf32>
      %1365 = vector.shape_cast %1364 : vector<1x1x43x2xf32> to vector<43x2xf32>
      %1366 = vector.broadcast %24 : f32 to vector<43x2xf32>
      %1367 = arith.mulf %1366, %1365 : vector<43x2xf32>
      %1368 = arith.addf %1355, %1367 : vector<43x2xf32>
      %1369 = vector.broadcast %49 : f32 to vector<43x2xf32>
      %1370 = arith.mulf %1369, %1365 : vector<43x2xf32>
      %1371 = arith.addf %1358, %1370 : vector<43x2xf32>
      %1372 = vector.broadcast %74 : f32 to vector<43x2xf32>
      %1373 = arith.mulf %1372, %1365 : vector<43x2xf32>
      %1374 = arith.addf %1361, %1373 : vector<43x2xf32>
      %1375 = arith.maximumf %1050, %1368 : vector<43x2xf32>
      %1376 = arith.maximumf %1051, %1371 : vector<43x2xf32>
      %1377 = arith.maximumf %1052, %1374 : vector<43x2xf32>
      %1378 = vector.broadcast %75 : f32 to vector<43x2xf32>
      %1379 = arith.addf %1375, %1378 : vector<43x2xf32>
      %cst = arith.constant 0.000000e+00 : f32
      %1380 = vector.broadcast %cst : f32 to vector<43x2xf32>
      %1381 = arith.maximumf %1379, %1380 : vector<43x2xf32>
      %c0_405 = arith.constant 0 : index
      %1382 = arith.index_cast %80 : i32 to index
      %c0_406 = arith.constant 0 : index
      %c0_407 = arith.constant 0 : index
      %1383 = vector.load %arg4[%c0_405, %1382, %c0_406, %c0_407] : memref<3x43x43x2xf32, #tpu.memory_space<vmem>>, vector<1x1x43x2xf32>
      %1384 = vector.shape_cast %1383 : vector<1x1x43x2xf32> to vector<43x2xf32>
      %1385 = vector.shape_cast %1381 : vector<43x2xf32> to vector<1x1x43x2xf32>
      tpu.vector_store %arg4[%c0_405, %1382, %c0_406, %c0_407], %1385 {strides = array<i32>} : memref<3x43x43x2xf32, #tpu.memory_space<vmem>>, vector<1x1x43x2xf32>,
      %1386 = vector.broadcast %76 : f32 to vector<43x2xf32>
      %1387 = arith.addf %1376, %1386 : vector<43x2xf32>
      %cst_408 = arith.constant 0.000000e+00 : f32
      %1388 = vector.broadcast %cst_408 : f32 to vector<43x2xf32>
      %1389 = arith.maximumf %1387, %1388 : vector<43x2xf32>
      %c1_409 = arith.constant 1 : index
      %1390 = arith.index_cast %80 : i32 to index
      %c0_410 = arith.constant 0 : index
      %c0_411 = arith.constant 0 : index
      %1391 = vector.load %arg4[%c1_409, %1390, %c0_410, %c0_411] : memref<3x43x43x2xf32, #tpu.memory_space<vmem>>, vector<1x1x43x2xf32>
      %1392 = vector.shape_cast %1391 : vector<1x1x43x2xf32> to vector<43x2xf32>
      %1393 = vector.shape_cast %1389 : vector<43x2xf32> to vector<1x1x43x2xf32>
      tpu.vector_store %arg4[%c1_409, %1390, %c0_410, %c0_411], %1393 {strides = array<i32>} : memref<3x43x43x2xf32, #tpu.memory_space<vmem>>, vector<1x1x43x2xf32>,
      %1394 = vector.broadcast %77 : f32 to vector<43x2xf32>
      %1395 = arith.addf %1377, %1394 : vector<43x2xf32>
      %cst_412 = arith.constant 0.000000e+00 : f32
      %1396 = vector.broadcast %cst_412 : f32 to vector<43x2xf32>
      %1397 = arith.maximumf %1395, %1396 : vector<43x2xf32>
      %c2_413 = arith.constant 2 : index
      %1398 = arith.index_cast %80 : i32 to index
      %c0_414 = arith.constant 0 : index
      %c0_415 = arith.constant 0 : index
      %1399 = vector.load %arg4[%c2_413, %1398, %c0_414, %c0_415] : memref<3x43x43x2xf32, #tpu.memory_space<vmem>>, vector<1x1x43x2xf32>
      %1400 = vector.shape_cast %1399 : vector<1x1x43x2xf32> to vector<43x2xf32>
      %1401 = vector.shape_cast %1397 : vector<43x2xf32> to vector<1x1x43x2xf32>
      tpu.vector_store %arg4[%c2_413, %1398, %c0_414, %c0_415], %1401 {strides = array<i32>} : memref<3x43x43x2xf32, #tpu.memory_space<vmem>>, vector<1x1x43x2xf32>,
    }
    %c43_i32_3 = arith.constant 43 : i32
    return
  }
  func.func @transform_0(%arg0: i32) -> (i32, i32, i32, i32) {
    %c0_i32 = arith.constant 0 : i32
    %c0_i32_0 = arith.constant 0 : i32
    %c0_i32_1 = arith.constant 0 : i32
    %c0_i32_2 = arith.constant 0 : i32
    return %c0_i32, %c0_i32_0, %c0_i32_1, %arg0 : i32, i32, i32, i32
  }
  func.func @transform_1(%arg0: i32) -> i32 {
    %c0_i32 = arith.constant 0 : i32
    %c0_i32_0 = arith.constant 0 : i32
    return %c0_i32 : i32
  }
  func.func @transform_2(%arg0: i32) -> i32 {
    %c0_i32 = arith.constant 0 : i32
    %c0_i32_0 = arith.constant 0 : i32
    return %c0_i32 : i32
  }
  func.func @transform_3(%arg0: i32) -> (i32, i32, i32, i32) {
    %c0_i32 = arith.constant 0 : i32
    %c0_i32_0 = arith.constant 0 : i32
    %c0_i32_1 = arith.constant 0 : i32
    %c0_i32_2 = arith.constant 0 : i32
    return %c0_i32, %c0_i32_0, %c0_i32_1, %arg0 : i32, i32, i32, i32
  }
}

</mosaic_0001>

<llo_original>
// kernel: tpu_custom_call.1
$region0: #{tpu_custom_call.1}
  #allocation0 [shape = 'u32[]', space=smem, size = 0x4, offset = 0x4, fixed_abs, tag = 'smem constant byte address 0x4 - core index']
  #allocation1 [shape = 'u32[144,128]{1,0:T(1,128)}', space=vmem, size = 0x12000, scoped, tag = 'internal scratch']
  %s0 = inlined_call_operand.vmem [shape: f32[4,45,45,2], index: 0, kind: input, shape index: {}]
  %s1 = inlined_call_operand.vmem [shape: f32[75], index: 1, kind: input, shape index: {}]
  %s2 = inlined_call_operand.vmem [shape: f32[3], index: 2, kind: input, shape index: {}]
  %s3 = inlined_call_operand.vmem [shape: f32[3,43,43,2], index: 3, kind: output, shape index: {}]
  %s4 = sld [smem:[#allocation0]]
  $region37: #{tpu_custom_call.1} parent=0
    _
  %s6 = ssub.s32 1, %s4
  %s7 = scalar_select 0, %s6, %s4
  $region1: #{tpu_custom_call.1} parent=0
    #allocation2 [shape = 'u8[512]{0}', space=smem, size = 0x200, scoped, tag = 'input window, operand 1, single buffered']
    #allocation3 [shape = 's32[1]{0}', space=sflag, size = 0x4, scoped, tag = 'scoped memory for tpu_custom_call.1']
    #allocation4 [shape = 'u8[512]{0}', space=smem, size = 0x200, scoped, tag = 'input window, operand 2, single buffered']
    #allocation5 [shape = 's32[1]{0}', space=sflag, size = 0x4, scoped, tag = 'scoped memory for tpu_custom_call.1']
    %8 = vsyncpa [#allocation3], 0
    %9 = vsyncpa [#allocation5], 0
    // Predicated region
    $region2: #{tpu_custom_call.1} parent=1 // pred_check
      _
    $region3: #{tpu_custom_call.1} parent=1 // pred_check_branch
      %11 = sbr.rel (0) target = $region5
    $region4: #{tpu_custom_call.1} parent=1 // pred_region
      _
    $region5: #{tpu_custom_call.1} parent=1 // pred_fallthru
      _
    // Predicated region
    $region6: #{tpu_custom_call.1} parent=1 // pred_check
      _
    $region7: #{tpu_custom_call.1} parent=1 // pred_check_branch
      %13 = sbr.rel (0) target = $region9
    $region8: #{tpu_custom_call.1} parent=1 // pred_region
      %s15 = ssub.s32 16, 16
      %16 = vsyncadd [#allocation3], %s15
      %s18 = sshll.u32 %s1, 4
      %s19 = int_to_ptr.vmem [resolvable:$true] %s18
      %21 = dma.vmem_to_smem %s19, 16, [#allocation2], [#allocation3]
    $region9: #{tpu_custom_call.1} parent=1 // pred_fallthru
      _
    // Predicated region
    $region10: #{tpu_custom_call.1} parent=1 // pred_check
      _
    $region11: #{tpu_custom_call.1} parent=1 // pred_check_branch
      %23 = sbr.rel (0) target = $region13
    $region12: #{tpu_custom_call.1} parent=1 // pred_region
      %s25 = ssub.s32 16, 16
      %26 = vsyncadd [#allocation5], %s25
      %s28 = sshll.u32 %s2, 4
      %s29 = int_to_ptr.vmem [resolvable:$true] %s28
      %31 = dma.vmem_to_smem %s29, 16, [#allocation4], [#allocation5]
    $region13: #{tpu_custom_call.1} parent=1 // pred_fallthru
      _
    // Predicated region
    $region14: #{tpu_custom_call.1} parent=1 // pred_check
      _
    $region15: #{tpu_custom_call.1} parent=1 // pred_check_branch
      %33 = sbr.rel (0) target = $region17
    $region16: #{tpu_custom_call.1} parent=1 // pred_region
      %34 = dma.done [#allocation3], 16
    $region17: #{tpu_custom_call.1} parent=1 // pred_fallthru
      _
    // Predicated region
    $region18: #{tpu_custom_call.1} parent=1 // pred_check
      _
    $region19: #{tpu_custom_call.1} parent=1 // pred_check_branch
      %36 = sbr.rel (0) target = $region21
    $region20: #{tpu_custom_call.1} parent=1 // pred_region
      %37 = dma.done [#allocation5], 16
    $region21: #{tpu_custom_call.1} parent=1 // pred_fallthru
      _
    %38 = sfence
    %s39 = sld [smem:[#allocation2]]
    %s40 = sld [smem:[#allocation2 + $0x1]]
    %s41 = sld [smem:[#allocation2 + $0x2]]
    %s42 = sld [smem:[#allocation2 + $0x3]]
    %s43 = sld [smem:[#allocation2 + $0x4]]
    %s44 = sld [smem:[#allocation2 + $0x5]]
    %s45 = sld [smem:[#allocation2 + $0x6]]
    %s46 = sld [smem:[#allocation2 + $0x7]]
    %s47 = sld [smem:[#allocation2 + $0x8]]
    %s48 = sld [smem:[#allocation2 + $0x9]]
    %s49 = sld [smem:[#allocation2 + $0xa]]
    %s50 = sld [smem:[#allocation2 + $0xb]]
    %s51 = sld [smem:[#allocation2 + $0xc]]
    %s52 = sld [smem:[#allocation2 + $0xd]]
    %s53 = sld [smem:[#allocation2 + $0xe]]
    %s54 = sld [smem:[#allocation2 + $0xf]]
    %s55 = sld [smem:[#allocation2 + $0x10]]
    %s56 = sld [smem:[#allocation2 + $0x11]]
    %s57 = sld [smem:[#allocation2 + $0x12]]
    %s58 = sld [smem:[#allocation2 + $0x13]]
    %s59 = sld [smem:[#allocation2 + $0x14]]
    %s60 = sld [smem:[#allocation2 + $0x15]]
    %s61 = sld [smem:[#allocation2 + $0x16]]
    %s62 = sld [smem:[#allocation2 + $0x17]]
    %s63 = sld [smem:[#allocation2 + $0x18]]
    %s64 = sld [smem:[#allocation2 + $0x19]]
    %s65 = sld [smem:[#allocation2 + $0x1a]]
    %s66 = sld [smem:[#allocation2 + $0x1b]]
    %s67 = sld [smem:[#allocation2 + $0x1c]]
    %s68 = sld [smem:[#allocation2 + $0x1d]]
    %s69 = sld [smem:[#allocation2 + $0x1e]]
    %s70 = sld [smem:[#allocation2 + $0x1f]]
    %s71 = sld [smem:[#allocation2 + $0x20]]
    %s72 = sld [smem:[#allocation2 + $0x21]]
    %s73 = sld [smem:[#allocation2 + $0x22]]
    %s74 = sld [smem:[#allocation2 + $0x23]]
    %s75 = sld [smem:[#allocation2 + $0x24]]
    %s76 = sld [smem:[#allocation2 + $0x25]]
    %s77 = sld [smem:[#allocation2 + $0x26]]
    %s78 = sld [smem:[#allocation2 + $0x27]]
    %s79 = sld [smem:[#allocation2 + $0x28]]
    %s80 = sld [smem:[#allocation2 + $0x29]]
    %s81 = sld [smem:[#allocation2 + $0x2a]]
    %s82 = sld [smem:[#allocation2 + $0x2b]]
    %s83 = sld [smem:[#allocation2 + $0x2c]]
    %s84 = sld [smem:[#allocation2 + $0x2d]]
    %s85 = sld [smem:[#allocation2 + $0x2e]]
    %s86 = sld [smem:[#allocation2 + $0x2f]]
    %s87 = sld [smem:[#allocation2 + $0x30]]
    %s88 = sld [smem:[#allocation2 + $0x31]]
    %s89 = sld [smem:[#allocation2 + $0x32]]
    %s90 = sld [smem:[#allocation2 + $0x33]]
    %s91 = sld [smem:[#allocation2 + $0x34]]
    %s92 = sld [smem:[#allocation2 + $0x35]]
    %s93 = sld [smem:[#allocation2 + $0x36]]
    %s94 = sld [smem:[#allocation2 + $0x37]]
    %s95 = sld [smem:[#allocation2 + $0x38]]
    %s96 = sld [smem:[#allocation2 + $0x39]]
    %s97 = sld [smem:[#allocation2 + $0x3a]]
    %s98 = sld [smem:[#allocation2 + $0x3b]]
    %s99 = sld [smem:[#allocation2 + $0x3c]]
    %s100 = sld [smem:[#allocation2 + $0x3d]]
    %s101 = sld [smem:[#allocation2 + $0x3e]]
    %s102 = sld [smem:[#allocation2 + $0x3f]]
    %s103 = sld [smem:[#allocation2 + $0x40]]
    %s104 = sld [smem:[#allocation2 + $0x41]]
    %s105 = sld [smem:[#allocation2 + $0x42]]
    %s106 = sld [smem:[#allocation2 + $0x43]]
    %s107 = sld [smem:[#allocation2 + $0x44]]
    %s108 = sld [smem:[#allocation2 + $0x45]]
    %s109 = sld [smem:[#allocation2 + $0x46]]
    %s110 = sld [smem:[#allocation2 + $0x47]]
    %s111 = sld [smem:[#allocation2 + $0x48]]
    %s112 = sld [smem:[#allocation2 + $0x49]]
    %s113 = sld [smem:[#allocation2 + $0x4a]]
    %s114 = sld [smem:[#allocation4]]
    %s115 = sld [smem:[#allocation4 + $0x1]]
    %s116 = sld [smem:[#allocation4 + $0x2]]
    loop: start=0, step=1, limit=43
    $region22: #{tpu_custom_call.1} parent=1 // loop_pre_header
      _
    $region23: #{tpu_custom_call.1} parent=1 // loop_header
      %s118 = sphi 0, %s122
      %p119 = scmp.ge.s32.totalorder %s118, 43
    $region24: #{tpu_custom_call.1} parent=1 // loop_header_branch
      %121 = sbr.rel (%p119) target = $region28
    $region25: #{tpu_custom_call.1} parent=1 // loop_body
      %s123 = smul.u32 %s118, 48
      %s124 = scalar_lea.vmem %s0, %s123
      %v125 = vld [vmem:[%s124] sm:$0xff]
      %v126 = vld [vmem:[%s124 + $0x8] sm:$0xff]
      %v127 = vld [vmem:[%s124 + $0x10] sm:$0xff]
      %v128 = vld [vmem:[%s124 + $0x18] sm:$0xff]
      %v129 = vld [vmem:[%s124 + $0x20] sm:$0xff]
      %v130 = vld [vmem:[%s124 + $0x28] sm:$0x7]
      %v131 = vstv %s39
      %v132 = vmul.f32 %v131, %v125
      %v133 = vmul.f32 %v131, %v126
      %v134 = vmul.f32 %v131, %v127
      %v135 = vmul.f32 %v131, %v128
      %v136 = vmul.f32 %v131, %v129
      %v137 = vmul.f32 %v131, %v130
      %v138 = vstv %s64
      %v139 = vmul.f32 %v138, %v125
      %v140 = vmul.f32 %v138, %v126
      %v141 = vmul.f32 %v138, %v127
      %v142 = vmul.f32 %v138, %v128
      %v143 = vmul.f32 %v138, %v129
      %v144 = vmul.f32 %v138, %v130
      %v145 = vstv %s89
      %v146 = vmul.f32 %v145, %v125
      %v147 = vmul.f32 %v145, %v126
      %v148 = vmul.f32 %v145, %v127
      %v149 = vmul.f32 %v145, %v128
      %v150 = vmul.f32 %v145, %v129
      %v151 = vmul.f32 %v145, %v130
      %s152 = sadd.s32 %s123, 2160
      %s153 = scalar_lea.vmem %s0, %s152
      %v154 = vld [vmem:[%s153] sm:$0xff]
      %v155 = vld [vmem:[%s153 + $0x8] sm:$0xff]
      %v156 = vld [vmem:[%s153 + $0x10] sm:$0xff]
      %v157 = vld [vmem:[%s153 + $0x18] sm:$0xff]
      %v158 = vld [vmem:[%s153 + $0x20] sm:$0xff]
      %v159 = vld [vmem:[%s153 + $0x28] sm:$0x7]
      %v160 = vstv %s40
      %v161 = vmul.f32 %v160, %v154
      %v162 = vmul.f32 %v160, %v155
      %v163 = vmul.f32 %v160, %v156
      %v164 = vmul.f32 %v160, %v157
      %v165 = vmul.f32 %v160, %v158
      %v166 = vmul.f32 %v160, %v159
      %v167 = vadd.f32 %v132, %v161
      %v168 = vadd.f32 %v133, %v162
      %v169 = vadd.f32 %v134, %v163
      %v170 = vadd.f32 %v135, %v164
      %v171 = vadd.f32 %v136, %v165
      %v172 = vadd.f32 %v137, %v166
      %v173 = vstv %s65
      %v174 = vmul.f32 %v173, %v154
      %v175 = vmul.f32 %v173, %v155
      %v176 = vmul.f32 %v173, %v156
      %v177 = vmul.f32 %v173, %v157
      %v178 = vmul.f32 %v173, %v158
      %v179 = vmul.f32 %v173, %v159
      %v180 = vadd.f32 %v139, %v174
      %v181 = vadd.f32 %v140, %v175
      %v182 = vadd.f32 %v141, %v176
      %v183 = vadd.f32 %v142, %v177
      %v184 = vadd.f32 %v143, %v178
      %v185 = vadd.f32 %v144, %v179
      %v186 = vstv %s90
      %v187 = vmul.f32 %v186, %v154
      %v188 = vmul.f32 %v186, %v155
      %v189 = vmul.f32 %v186, %v156
      %v190 = vmul.f32 %v186, %v157
      %v191 = vmul.f32 %v186, %v158
      %v192 = vmul.f32 %v186, %v159
      %v193 = vadd.f32 %v146, %v187
      %v194 = vadd.f32 %v147, %v188
      %v195 = vadd.f32 %v148, %v189
      %v196 = vadd.f32 %v149, %v190
      %v197 = vadd.f32 %v150, %v191
      %v198 = vadd.f32 %v151, %v192
      %v199 = vld [vmem:[%s124 + $0x1] sm:$0xff]
      %v200 = vld [vmem:[%s124 + $0x9] sm:$0xff]
      %v201 = vld [vmem:[%s124 + $0x11] sm:$0xff]
      %v202 = vld [vmem:[%s124 + $0x19] sm:$0xff]
      %v203 = vld [vmem:[%s124 + $0x21] sm:$0xff]
      %v204 = vld [vmem:[%s124 + $0x29] sm:$0x7]
      %v205 = vstv %s41
      %v206 = vmul.f32 %v205, %v199
      %v207 = vmul.f32 %v205, %v200
      %v208 = vmul.f32 %v205, %v201
      %v209 = vmul.f32 %v205, %v202
      %v210 = vmul.f32 %v205, %v203
      %v211 = vmul.f32 %v205, %v204
      %v212 = vadd.f32 %v167, %v206
      %v213 = vadd.f32 %v168, %v207
      %v214 = vadd.f32 %v169, %v208
      %v215 = vadd.f32 %v170, %v209
      %v216 = vadd.f32 %v171, %v210
      %v217 = vadd.f32 %v172, %v211
      %v218 = vstv %s66
      %v219 = vmul.f32 %v218, %v199
      %v220 = vmul.f32 %v218, %v200
      %v221 = vmul.f32 %v218, %v201
      %v222 = vmul.f32 %v218, %v202
      %v223 = vmul.f32 %v218, %v203
      %v224 = vmul.f32 %v218, %v204
      %v225 = vadd.f32 %v180, %v219
      %v226 = vadd.f32 %v181, %v220
      %v227 = vadd.f32 %v182, %v221
      %v228 = vadd.f32 %v183, %v222
      %v229 = vadd.f32 %v184, %v223
      %v230 = vadd.f32 %v185, %v224
      %v231 = vstv %s91
      %v232 = vmul.f32 %v231, %v199
      %v233 = vmul.f32 %v231, %v200
      %v234 = vmul.f32 %v231, %v201
      %v235 = vmul.f32 %v231, %v202
      %v236 = vmul.f32 %v231, %v203
      %v237 = vmul.f32 %v231, %v204
      %v238 = vadd.f32 %v193, %v232
      %v239 = vadd.f32 %v194, %v233
      %v240 = vadd.f32 %v195, %v234
      %v241 = vadd.f32 %v196, %v235
      %v242 = vadd.f32 %v197, %v236
      %v243 = vadd.f32 %v198, %v237
      %v244 = vld [vmem:[%s153 + $0x1] sm:$0xff]
      %v245 = vld [vmem:[%s153 + $0x9] sm:$0xff]
      %v246 = vld [vmem:[%s153 + $0x11] sm:$0xff]
      %v247 = vld [vmem:[%s153 + $0x19] sm:$0xff]
      %v248 = vld [vmem:[%s153 + $0x21] sm:$0xff]
      %v249 = vld [vmem:[%s153 + $0x29] sm:$0x7]
      %v250 = vstv %s42
      %v251 = vmul.f32 %v250, %v244
      %v252 = vmul.f32 %v250, %v245
      %v253 = vmul.f32 %v250, %v246
      %v254 = vmul.f32 %v250, %v247
      %v255 = vmul.f32 %v250, %v248
      %v256 = vmul.f32 %v250, %v249
      %v257 = vadd.f32 %v212, %v251
      %v258 = vadd.f32 %v213, %v252
      %v259 = vadd.f32 %v214, %v253
      %v260 = vadd.f32 %v215, %v254
      %v261 = vadd.f32 %v216, %v255
      %v262 = vadd.f32 %v217, %v256
      %v263 = vstv %s67
      %v264 = vmul.f32 %v263, %v244
      %v265 = vmul.f32 %v263, %v245
      %v266 = vmul.f32 %v263, %v246
      %v267 = vmul.f32 %v263, %v247
      %v268 = vmul.f32 %v263, %v248
      %v269 = vmul.f32 %v263, %v249
      %v270 = vadd.f32 %v225, %v264
      %v271 = vadd.f32 %v226, %v265
      %v272 = vadd.f32 %v227, %v266
      %v273 = vadd.f32 %v228, %v267
      %v274 = vadd.f32 %v229, %v268
      %v275 = vadd.f32 %v230, %v269
      %v276 = vstv %s92
      %v277 = vmul.f32 %v276, %v244
      %v278 = vmul.f32 %v276, %v245
      %v279 = vmul.f32 %v276, %v246
      %v280 = vmul.f32 %v276, %v247
      %v281 = vmul.f32 %v276, %v248
      %v282 = vmul.f32 %v276, %v249
      %v283 = vadd.f32 %v238, %v277
      %v284 = vadd.f32 %v239, %v278
      %v285 = vadd.f32 %v240, %v279
      %v286 = vadd.f32 %v241, %v280
      %v287 = vadd.f32 %v242, %v281
      %v288 = vadd.f32 %v243, %v282
      %v289 = vld [vmem:[%s124 + $0x2] sm:$0xff]
      %v290 = vld [vmem:[%s124 + $0xa] sm:$0xff]
      %v291 = vld [vmem:[%s124 + $0x12] sm:$0xff]
      %v292 = vld [vmem:[%s124 + $0x1a] sm:$0xff]
      %v293 = vld [vmem:[%s124 + $0x22] sm:$0xff]
      %v294 = vld [vmem:[%s124 + $0x2a] sm:$0x7]
      %v295 = vstv %s43
      %v296 = vmul.f32 %v295, %v289
      %v297 = vmul.f32 %v295, %v290
      %v298 = vmul.f32 %v295, %v291
      %v299 = vmul.f32 %v295, %v292
      %v300 = vmul.f32 %v295, %v293
      %v301 = vmul.f32 %v295, %v294
      %v302 = vadd.f32 %v257, %v296
      %v303 = vadd.f32 %v258, %v297
      %v304 = vadd.f32 %v259, %v298
      %v305 = vadd.f32 %v260, %v299
      %v306 = vadd.f32 %v261, %v300
      %v307 = vadd.f32 %v262, %v301
      %v308 = vstv %s68
      %v309 = vmul.f32 %v308, %v289
      %v310 = vmul.f32 %v308, %v290
      %v311 = vmul.f32 %v308, %v291
      %v312 = vmul.f32 %v308, %v292
      %v313 = vmul.f32 %v308, %v293
      %v314 = vmul.f32 %v308, %v294
      %v315 = vadd.f32 %v270, %v309
      %v316 = vadd.f32 %v271, %v310
      %v317 = vadd.f32 %v272, %v311
      %v318 = vadd.f32 %v273, %v312
      %v319 = vadd.f32 %v274, %v313
      %v320 = vadd.f32 %v275, %v314
      %v321 = vstv %s93
      %v322 = vmul.f32 %v321, %v289
      %v323 = vmul.f32 %v321, %v290
      %v324 = vmul.f32 %v321, %v291
      %v325 = vmul.f32 %v321, %v292
      %v326 = vmul.f32 %v321, %v293
      %v327 = vmul.f32 %v321, %v294
      %v328 = vadd.f32 %v283, %v322
      %v329 = vadd.f32 %v284, %v323
      %v330 = vadd.f32 %v285, %v324
      %v331 = vadd.f32 %v286, %v325
      %v332 = vadd.f32 %v287, %v326
      %v333 = vadd.f32 %v288, %v327
      %s334 = sadd.s32 %s123, 4320
      %s335 = scalar_lea.vmem %s0, %s334
      %v336 = vld [vmem:[%s335] sm:$0xff]
      %v337 = vld [vmem:[%s335 + $0x8] sm:$0xff]
      %v338 = vld [vmem:[%s335 + $0x10] sm:$0xff]
      %v339 = vld [vmem:[%s335 + $0x18] sm:$0xff]
      %v340 = vld [vmem:[%s335 + $0x20] sm:$0xff]
      %v341 = vld [vmem:[%s335 + $0x28] sm:$0x7]
      %v342 = vstv %s44
      %v343 = vmul.f32 %v342, %v336
      %v344 = vmul.f32 %v342, %v337
      %v345 = vmul.f32 %v342, %v338
      %v346 = vmul.f32 %v342, %v339
      %v347 = vmul.f32 %v342, %v340
      %v348 = vmul.f32 %v342, %v341
      %v349 = vadd.f32 %v302, %v343
      %v350 = vadd.f32 %v303, %v344
      %v351 = vadd.f32 %v304, %v345
      %v352 = vadd.f32 %v305, %v346
      %v353 = vadd.f32 %v306, %v347
      %v354 = vadd.f32 %v307, %v348
      %v355 = vstv %s69
      %v356 = vmul.f32 %v355, %v336
      %v357 = vmul.f32 %v355, %v337
      %v358 = vmul.f32 %v355, %v338
      %v359 = vmul.f32 %v355, %v339
      %v360 = vmul.f32 %v355, %v340
      %v361 = vmul.f32 %v355, %v341
      %v362 = vadd.f32 %v315, %v356
      %v363 = vadd.f32 %v316, %v357
      %v364 = vadd.f32 %v317, %v358
      %v365 = vadd.f32 %v318, %v359
      %v366 = vadd.f32 %v319, %v360
      %v367 = vadd.f32 %v320, %v361
      %v368 = vstv %s94
      %v369 = vmul.f32 %v368, %v336
      %v370 = vmul.f32 %v368, %v337
      %v371 = vmul.f32 %v368, %v338
      %v372 = vmul.f32 %v368, %v339
      %v373 = vmul.f32 %v368, %v340
      %v374 = vmul.f32 %v368, %v341
      %v375 = vadd.f32 %v328, %v369
      %v376 = vadd.f32 %v329, %v370
      %v377 = vadd.f32 %v330, %v371
      %v378 = vadd.f32 %v331, %v372
      %v379 = vadd.f32 %v332, %v373
      %v380 = vadd.f32 %v333, %v374
      %s381 = sadd.s32 %s123, 6480
      %s382 = scalar_lea.vmem %s0, %s381
      %v383 = vld [vmem:[%s382] sm:$0xff]
      %v384 = vld [vmem:[%s382 + $0x8] sm:$0xff]
      %v385 = vld [vmem:[%s382 + $0x10] sm:$0xff]
      %v386 = vld [vmem:[%s382 + $0x18] sm:$0xff]
      %v387 = vld [vmem:[%s382 + $0x20] sm:$0xff]
      %v388 = vld [vmem:[%s382 + $0x28] sm:$0x7]
      %v389 = vstv %s45
      %v390 = vmul.f32 %v389, %v383
      %v391 = vmul.f32 %v389, %v384
      %v392 = vmul.f32 %v389, %v385
      %v393 = vmul.f32 %v389, %v386
      %v394 = vmul.f32 %v389, %v387
      %v395 = vmul.f32 %v389, %v388
      %v396 = vadd.f32 %v349, %v390
      %v397 = vadd.f32 %v350, %v391
      %v398 = vadd.f32 %v351, %v392
      %v399 = vadd.f32 %v352, %v393
      %v400 = vadd.f32 %v353, %v394
      %v401 = vadd.f32 %v354, %v395
      %v402 = vstv %s70
      %v403 = vmul.f32 %v402, %v383
      %v404 = vmul.f32 %v402, %v384
      %v405 = vmul.f32 %v402, %v385
      %v406 = vmul.f32 %v402, %v386
      %v407 = vmul.f32 %v402, %v387
      %v408 = vmul.f32 %v402, %v388
      %v409 = vadd.f32 %v362, %v403
      %v410 = vadd.f32 %v363, %v404
      %v411 = vadd.f32 %v364, %v405
      %v412 = vadd.f32 %v365, %v406
      %v413 = vadd.f32 %v366, %v407
      %v414 = vadd.f32 %v367, %v408
      %v415 = vstv %s95
      %v416 = vmul.f32 %v415, %v383
      %v417 = vmul.f32 %v415, %v384
      %v418 = vmul.f32 %v415, %v385
      %v419 = vmul.f32 %v415, %v386
      %v420 = vmul.f32 %v415, %v387
      %v421 = vmul.f32 %v415, %v388
      %v422 = vadd.f32 %v375, %v416
      %v423 = vadd.f32 %v376, %v417
      %v424 = vadd.f32 %v377, %v418
      %v425 = vadd.f32 %v378, %v419
      %v426 = vadd.f32 %v379, %v420
      %v427 = vadd.f32 %v380, %v421
      %v428 = vld [vmem:[%s335 + $0x1] sm:$0xff]
      %v429 = vld [vmem:[%s335 + $0x9] sm:$0xff]
      %v430 = vld [vmem:[%s335 + $0x11] sm:$0xff]
      %v431 = vld [vmem:[%s335 + $0x19] sm:$0xff]
      %v432 = vld [vmem:[%s335 + $0x21] sm:$0xff]
      %v433 = vld [vmem:[%s335 + $0x29] sm:$0x7]
      %v434 = vstv %s46
      %v435 = vmul.f32 %v434, %v428
      %v436 = vmul.f32 %v434, %v429
      %v437 = vmul.f32 %v434, %v430
      %v438 = vmul.f32 %v434, %v431
      %v439 = vmul.f32 %v434, %v432
      %v440 = vmul.f32 %v434, %v433
      %v441 = vadd.f32 %v396, %v435
      %v442 = vadd.f32 %v397, %v436
      %v443 = vadd.f32 %v398, %v437
      %v444 = vadd.f32 %v399, %v438
      %v445 = vadd.f32 %v400, %v439
      %v446 = vadd.f32 %v401, %v440
      %v447 = vstv %s71
      %v448 = vmul.f32 %v447, %v428
      %v449 = vmul.f32 %v447, %v429
      %v450 = vmul.f32 %v447, %v430
      %v451 = vmul.f32 %v447, %v431
      %v452 = vmul.f32 %v447, %v432
      %v453 = vmul.f32 %v447, %v433
      %v454 = vadd.f32 %v409, %v448
      %v455 = vadd.f32 %v410, %v449
      %v456 = vadd.f32 %v411, %v450
      %v457 = vadd.f32 %v412, %v451
      %v458 = vadd.f32 %v413, %v452
      %v459 = vadd.f32 %v414, %v453
      %v460 = vstv %s96
      %v461 = vmul.f32 %v460, %v428
      %v462 = vmul.f32 %v460, %v429
      %v463 = vmul.f32 %v460, %v430
      %v464 = vmul.f32 %v460, %v431
      %v465 = vmul.f32 %v460, %v432
      %v466 = vmul.f32 %v460, %v433
      %v467 = vadd.f32 %v422, %v461
      %v468 = vadd.f32 %v423, %v462
      %v469 = vadd.f32 %v424, %v463
      %v470 = vadd.f32 %v425, %v464
      %v471 = vadd.f32 %v426, %v465
      %v472 = vadd.f32 %v427, %v466
      %v473 = vld [vmem:[%s382 + $0x1] sm:$0xff]
      %v474 = vld [vmem:[%s382 + $0x9] sm:$0xff]
      %v475 = vld [vmem:[%s382 + $0x11] sm:$0xff]
      %v476 = vld [vmem:[%s382 + $0x19] sm:$0xff]
      %v477 = vld [vmem:[%s382 + $0x21] sm:$0xff]
      %v478 = vld [vmem:[%s382 + $0x29] sm:$0x7]
      %v479 = vstv %s47
      %v480 = vmul.f32 %v479, %v473
      %v481 = vmul.f32 %v479, %v474
      %v482 = vmul.f32 %v479, %v475
      %v483 = vmul.f32 %v479, %v476
      %v484 = vmul.f32 %v479, %v477
      %v485 = vmul.f32 %v479, %v478
      %v486 = vadd.f32 %v441, %v480
      %v487 = vadd.f32 %v442, %v481
      %v488 = vadd.f32 %v443, %v482
      %v489 = vadd.f32 %v444, %v483
      %v490 = vadd.f32 %v445, %v484
      %v491 = vadd.f32 %v446, %v485
      %v492 = vstv %s72
      %v493 = vmul.f32 %v492, %v473
      %v494 = vmul.f32 %v492, %v474
      %v495 = vmul.f32 %v492, %v475
      %v496 = vmul.f32 %v492, %v476
      %v497 = vmul.f32 %v492, %v477
      %v498 = vmul.f32 %v492, %v478
      %v499 = vadd.f32 %v454, %v493
      %v500 = vadd.f32 %v455, %v494
      %v501 = vadd.f32 %v456, %v495
      %v502 = vadd.f32 %v457, %v496
      %v503 = vadd.f32 %v458, %v497
      %v504 = vadd.f32 %v459, %v498
      %v505 = vstv %s97
      %v506 = vmul.f32 %v505, %v473
      %v507 = vmul.f32 %v505, %v474
      %v508 = vmul.f32 %v505, %v475
      %v509 = vmul.f32 %v505, %v476
      %v510 = vmul.f32 %v505, %v477
      %v511 = vmul.f32 %v505, %v478
      %v512 = vadd.f32 %v467, %v506
      %v513 = vadd.f32 %v468, %v507
      %v514 = vadd.f32 %v469, %v508
      %v515 = vadd.f32 %v470, %v509
      %v516 = vadd.f32 %v471, %v510
      %v517 = vadd.f32 %v472, %v511
      %v518 = vld [vmem:[%s335 + $0x2] sm:$0xff]
      %v519 = vld [vmem:[%s335 + $0xa] sm:$0xff]
      %v520 = vld [vmem:[%s335 + $0x12] sm:$0xff]
      %v521 = vld [vmem:[%s335 + $0x1a] sm:$0xff]
      %v522 = vld [vmem:[%s335 + $0x22] sm:$0xff]
      %v523 = vld [vmem:[%s335 + $0x2a] sm:$0x7]
      %v524 = vstv %s48
      %v525 = vmul.f32 %v524, %v518
      %v526 = vmul.f32 %v524, %v519
      %v527 = vmul.f32 %v524, %v520
      %v528 = vmul.f32 %v524, %v521
      %v529 = vmul.f32 %v524, %v522
      %v530 = vmul.f32 %v524, %v523
      %v531 = vadd.f32 %v486, %v525
      %v532 = vadd.f32 %v487, %v526
      %v533 = vadd.f32 %v488, %v527
      %v534 = vadd.f32 %v489, %v528
      %v535 = vadd.f32 %v490, %v529
      %v536 = vadd.f32 %v491, %v530
      %v537 = vstv %s73
      %v538 = vmul.f32 %v537, %v518
      %v539 = vmul.f32 %v537, %v519
      %v540 = vmul.f32 %v537, %v520
      %v541 = vmul.f32 %v537, %v521
      %v542 = vmul.f32 %v537, %v522
      %v543 = vmul.f32 %v537, %v523
      %v544 = vadd.f32 %v499, %v538
      %v545 = vadd.f32 %v500, %v539
      %v546 = vadd.f32 %v501, %v540
      %v547 = vadd.f32 %v502, %v541
      %v548 = vadd.f32 %v503, %v542
      %v549 = vadd.f32 %v504, %v543
      %v550 = vstv %s98
      %v551 = vmul.f32 %v550, %v518
      %v552 = vmul.f32 %v550, %v519
      %v553 = vmul.f32 %v550, %v520
      %v554 = vmul.f32 %v550, %v521
      %v555 = vmul.f32 %v550, %v522
      %v556 = vmul.f32 %v550, %v523
      %v557 = vadd.f32 %v512, %v551
      %v558 = vadd.f32 %v513, %v552
      %v559 = vadd.f32 %v514, %v553
      %v560 = vadd.f32 %v515, %v554
      %v561 = vadd.f32 %v516, %v555
      %v562 = vadd.f32 %v517, %v556
      %s563 = sadd.s32 %s118, 1
      %s564 = smul.u32 %s563, 48
      %s565 = scalar_lea.vmem %s0, %s564
      %v566 = vld [vmem:[%s565] sm:$0xff]
      %v567 = vld [vmem:[%s565 + $0x8] sm:$0xff]
      %v568 = vld [vmem:[%s565 + $0x10] sm:$0xff]
      %v569 = vld [vmem:[%s565 + $0x18] sm:$0xff]
      %v570 = vld [vmem:[%s565 + $0x20] sm:$0xff]
      %v571 = vld [vmem:[%s565 + $0x28] sm:$0x7]
      %v572 = vstv %s49
      %v573 = vmul.f32 %v572, %v566
      %v574 = vmul.f32 %v572, %v567
      %v575 = vmul.f32 %v572, %v568
      %v576 = vmul.f32 %v572, %v569
      %v577 = vmul.f32 %v572, %v570
      %v578 = vmul.f32 %v572, %v571
      %v579 = vadd.f32 %v531, %v573
      %v580 = vadd.f32 %v532, %v574
      %v581 = vadd.f32 %v533, %v575
      %v582 = vadd.f32 %v534, %v576
      %v583 = vadd.f32 %v535, %v577
      %v584 = vadd.f32 %v536, %v578
      %v585 = vstv %s74
      %v586 = vmul.f32 %v585, %v566
      %v587 = vmul.f32 %v585, %v567
      %v588 = vmul.f32 %v585, %v568
      %v589 = vmul.f32 %v585, %v569
      %v590 = vmul.f32 %v585, %v570
      %v591 = vmul.f32 %v585, %v571
      %v592 = vadd.f32 %v544, %v586
      %v593 = vadd.f32 %v545, %v587
      %v594 = vadd.f32 %v546, %v588
      %v595 = vadd.f32 %v547, %v589
      %v596 = vadd.f32 %v548, %v590
      %v597 = vadd.f32 %v549, %v591
      %v598 = vstv %s99
      %v599 = vmul.f32 %v598, %v566
      %v600 = vmul.f32 %v598, %v567
      %v601 = vmul.f32 %v598, %v568
      %v602 = vmul.f32 %v598, %v569
      %v603 = vmul.f32 %v598, %v570
      %v604 = vmul.f32 %v598, %v571
      %v605 = vadd.f32 %v557, %v599
      %v606 = vadd.f32 %v558, %v600
      %v607 = vadd.f32 %v559, %v601
      %v608 = vadd.f32 %v560, %v602
      %v609 = vadd.f32 %v561, %v603
      %v610 = vadd.f32 %v562, %v604
      %s611 = sadd.s32 %s564, 2160
      %s612 = scalar_lea.vmem %s0, %s611
      %v613 = vld [vmem:[%s612] sm:$0xff]
      %v614 = vld [vmem:[%s612 + $0x8] sm:$0xff]
      %v615 = vld [vmem:[%s612 + $0x10] sm:$0xff]
      %v616 = vld [vmem:[%s612 + $0x18] sm:$0xff]
      %v617 = vld [vmem:[%s612 + $0x20] sm:$0xff]
      %v618 = vld [vmem:[%s612 + $0x28] sm:$0x7]
      %v619 = vstv %s50
      %v620 = vmul.f32 %v619, %v613
      %v621 = vmul.f32 %v619, %v614
      %v622 = vmul.f32 %v619, %v615
      %v623 = vmul.f32 %v619, %v616
      %v624 = vmul.f32 %v619, %v617
      %v625 = vmul.f32 %v619, %v618
      %v626 = vadd.f32 %v579, %v620
      %v627 = vadd.f32 %v580, %v621
      %v628 = vadd.f32 %v581, %v622
      %v629 = vadd.f32 %v582, %v623
      %v630 = vadd.f32 %v583, %v624
      %v631 = vadd.f32 %v584, %v625
      %v632 = vstv %s75
      %v633 = vmul.f32 %v632, %v613
      %v634 = vmul.f32 %v632, %v614
      %v635 = vmul.f32 %v632, %v615
      %v636 = vmul.f32 %v632, %v616
      %v637 = vmul.f32 %v632, %v617
      %v638 = vmul.f32 %v632, %v618
      %v639 = vadd.f32 %v592, %v633
      %v640 = vadd.f32 %v593, %v634
      %v641 = vadd.f32 %v594, %v635
      %v642 = vadd.f32 %v595, %v636
      %v643 = vadd.f32 %v596, %v637
      %v644 = vadd.f32 %v597, %v638
      %v645 = vstv %s100
      %v646 = vmul.f32 %v645, %v613
      %v647 = vmul.f32 %v645, %v614
      %v648 = vmul.f32 %v645, %v615
      %v649 = vmul.f32 %v645, %v616
      %v650 = vmul.f32 %v645, %v617
      %v651 = vmul.f32 %v645, %v618
      %v652 = vadd.f32 %v605, %v646
      %v653 = vadd.f32 %v606, %v647
      %v654 = vadd.f32 %v607, %v648
      %v655 = vadd.f32 %v608, %v649
      %v656 = vadd.f32 %v609, %v650
      %v657 = vadd.f32 %v610, %v651
      %v658 = vld [vmem:[%s565 + $0x1] sm:$0xff]
      %v659 = vld [vmem:[%s565 + $0x9] sm:$0xff]
      %v660 = vld [vmem:[%s565 + $0x11] sm:$0xff]
      %v661 = vld [vmem:[%s565 + $0x19] sm:$0xff]
      %v662 = vld [vmem:[%s565 + $0x21] sm:$0xff]
      %v663 = vld [vmem:[%s565 + $0x29] sm:$0x7]
      %v664 = vstv %s51
      %v665 = vmul.f32 %v664, %v658
      %v666 = vmul.f32 %v664, %v659
      %v667 = vmul.f32 %v664, %v660
      %v668 = vmul.f32 %v664, %v661
      %v669 = vmul.f32 %v664, %v662
      %v670 = vmul.f32 %v664, %v663
      %v671 = vadd.f32 %v626, %v665
      %v672 = vadd.f32 %v627, %v666
      %v673 = vadd.f32 %v628, %v667
      %v674 = vadd.f32 %v629, %v668
      %v675 = vadd.f32 %v630, %v669
      %v676 = vadd.f32 %v631, %v670
      %v677 = vstv %s76
      %v678 = vmul.f32 %v677, %v658
      %v679 = vmul.f32 %v677, %v659
      %v680 = vmul.f32 %v677, %v660
      %v681 = vmul.f32 %v677, %v661
      %v682 = vmul.f32 %v677, %v662
      %v683 = vmul.f32 %v677, %v663
      %v684 = vadd.f32 %v639, %v678
      %v685 = vadd.f32 %v640, %v679
      %v686 = vadd.f32 %v641, %v680
      %v687 = vadd.f32 %v642, %v681
      %v688 = vadd.f32 %v643, %v682
      %v689 = vadd.f32 %v644, %v683
      %v690 = vstv %s101
      %v691 = vmul.f32 %v690, %v658
      %v692 = vmul.f32 %v690, %v659
      %v693 = vmul.f32 %v690, %v660
      %v694 = vmul.f32 %v690, %v661
      %v695 = vmul.f32 %v690, %v662
      %v696 = vmul.f32 %v690, %v663
      %v697 = vadd.f32 %v652, %v691
      %v698 = vadd.f32 %v653, %v692
      %v699 = vadd.f32 %v654, %v693
      %v700 = vadd.f32 %v655, %v694
      %v701 = vadd.f32 %v656, %v695
      %v702 = vadd.f32 %v657, %v696
      %v703 = vld [vmem:[%s612 + $0x1] sm:$0xff]
      %v704 = vld [vmem:[%s612 + $0x9] sm:$0xff]
      %v705 = vld [vmem:[%s612 + $0x11] sm:$0xff]
      %v706 = vld [vmem:[%s612 + $0x19] sm:$0xff]
      %v707 = vld [vmem:[%s612 + $0x21] sm:$0xff]
      %v708 = vld [vmem:[%s612 + $0x29] sm:$0x7]
      %v709 = vstv %s52
      %v710 = vmul.f32 %v709, %v703
      %v711 = vmul.f32 %v709, %v704
      %v712 = vmul.f32 %v709, %v705
      %v713 = vmul.f32 %v709, %v706
      %v714 = vmul.f32 %v709, %v707
      %v715 = vmul.f32 %v709, %v708
      %v716 = vadd.f32 %v671, %v710
      %v717 = vadd.f32 %v672, %v711
      %v718 = vadd.f32 %v673, %v712
      %v719 = vadd.f32 %v674, %v713
      %v720 = vadd.f32 %v675, %v714
      %v721 = vadd.f32 %v676, %v715
      %v722 = vstv %s77
      %v723 = vmul.f32 %v722, %v703
      %v724 = vmul.f32 %v722, %v704
      %v725 = vmul.f32 %v722, %v705
      %v726 = vmul.f32 %v722, %v706
      %v727 = vmul.f32 %v722, %v707
      %v728 = vmul.f32 %v722, %v708
      %v729 = vadd.f32 %v684, %v723
      %v730 = vadd.f32 %v685, %v724
      %v731 = vadd.f32 %v686, %v725
      %v732 = vadd.f32 %v687, %v726
      %v733 = vadd.f32 %v688, %v727
      %v734 = vadd.f32 %v689, %v728
      %v735 = vstv %s102
      %v736 = vmul.f32 %v735, %v703
      %v737 = vmul.f32 %v735, %v704
      %v738 = vmul.f32 %v735, %v705
      %v739 = vmul.f32 %v735, %v706
      %v740 = vmul.f32 %v735, %v707
      %v741 = vmul.f32 %v735, %v708
      %v742 = vadd.f32 %v697, %v736
      %v743 = vadd.f32 %v698, %v737
      %v744 = vadd.f32 %v699, %v738
      %v745 = vadd.f32 %v700, %v739
      %v746 = vadd.f32 %v701, %v740
      %v747 = vadd.f32 %v702, %v741
      %v748 = vld [vmem:[%s565 + $0x2] sm:$0xff]
      %v749 = vld [vmem:[%s565 + $0xa] sm:$0xff]
      %v750 = vld [vmem:[%s565 + $0x12] sm:$0xff]
      %v751 = vld [vmem:[%s565 + $0x1a] sm:$0xff]
      %v752 = vld [vmem:[%s565 + $0x22] sm:$0xff]
      %v753 = vld [vmem:[%s565 + $0x2a] sm:$0x7]
      %v754 = vstv %s53
      %v755 = vmul.f32 %v754, %v748
      %v756 = vmul.f32 %v754, %v749
      %v757 = vmul.f32 %v754, %v750
      %v758 = vmul.f32 %v754, %v751
      %v759 = vmul.f32 %v754, %v752
      %v760 = vmul.f32 %v754, %v753
      %v761 = vadd.f32 %v716, %v755
      %v762 = vadd.f32 %v717, %v756
      %v763 = vadd.f32 %v718, %v757
      %v764 = vadd.f32 %v719, %v758
      %v765 = vadd.f32 %v720, %v759
      %v766 = vadd.f32 %v721, %v760
      %v767 = vstv %s78
      %v768 = vmul.f32 %v767, %v748
      %v769 = vmul.f32 %v767, %v749
      %v770 = vmul.f32 %v767, %v750
      %v771 = vmul.f32 %v767, %v751
      %v772 = vmul.f32 %v767, %v752
      %v773 = vmul.f32 %v767, %v753
      %v774 = vadd.f32 %v729, %v768
      %v775 = vadd.f32 %v730, %v769
      %v776 = vadd.f32 %v731, %v770
      %v777 = vadd.f32 %v732, %v771
      %v778 = vadd.f32 %v733, %v772
      %v779 = vadd.f32 %v734, %v773
      %v780 = vstv %s103
      %v781 = vmul.f32 %v780, %v748
      %v782 = vmul.f32 %v780, %v749
      %v783 = vmul.f32 %v780, %v750
      %v784 = vmul.f32 %v780, %v751
      %v785 = vmul.f32 %v780, %v752
      %v786 = vmul.f32 %v780, %v753
      %v787 = vadd.f32 %v742, %v781
      %v788 = vadd.f32 %v743, %v782
      %v789 = vadd.f32 %v744, %v783
      %v790 = vadd.f32 %v745, %v784
      %v791 = vadd.f32 %v746, %v785
      %v792 = vadd.f32 %v747, %v786
      %s793 = sadd.s32 %s564, 4320
      %s794 = scalar_lea.vmem %s0, %s793
      %v795 = vld [vmem:[%s794] sm:$0xff]
      %v796 = vld [vmem:[%s794 + $0x8] sm:$0xff]
      %v797 = vld [vmem:[%s794 + $0x10] sm:$0xff]
      %v798 = vld [vmem:[%s794 + $0x18] sm:$0xff]
      %v799 = vld [vmem:[%s794 + $0x20] sm:$0xff]
      %v800 = vld [vmem:[%s794 + $0x28] sm:$0x7]
      %v801 = vstv %s54
      %v802 = vmul.f32 %v801, %v795
      %v803 = vmul.f32 %v801, %v796
      %v804 = vmul.f32 %v801, %v797
      %v805 = vmul.f32 %v801, %v798
      %v806 = vmul.f32 %v801, %v799
      %v807 = vmul.f32 %v801, %v800
      %v808 = vadd.f32 %v761, %v802
      %v809 = vadd.f32 %v762, %v803
      %v810 = vadd.f32 %v763, %v804
      %v811 = vadd.f32 %v764, %v805
      %v812 = vadd.f32 %v765, %v806
      %v813 = vadd.f32 %v766, %v807
      %v814 = vstv %s79
      %v815 = vmul.f32 %v814, %v795
      %v816 = vmul.f32 %v814, %v796
      %v817 = vmul.f32 %v814, %v797
      %v818 = vmul.f32 %v814, %v798
      %v819 = vmul.f32 %v814, %v799
      %v820 = vmul.f32 %v814, %v800
      %v821 = vadd.f32 %v774, %v815
      %v822 = vadd.f32 %v775, %v816
      %v823 = vadd.f32 %v776, %v817
      %v824 = vadd.f32 %v777, %v818
      %v825 = vadd.f32 %v778, %v819
      %v826 = vadd.f32 %v779, %v820
      %v827 = vstv %s104
      %v828 = vmul.f32 %v827, %v795
      %v829 = vmul.f32 %v827, %v796
      %v830 = vmul.f32 %v827, %v797
      %v831 = vmul.f32 %v827, %v798
      %v832 = vmul.f32 %v827, %v799
      %v833 = vmul.f32 %v827, %v800
      %v834 = vadd.f32 %v787, %v828
      %v835 = vadd.f32 %v788, %v829
      %v836 = vadd.f32 %v789, %v830
      %v837 = vadd.f32 %v790, %v831
      %v838 = vadd.f32 %v791, %v832
      %v839 = vadd.f32 %v792, %v833
      %s840 = sadd.s32 %s564, 6480
      %s841 = scalar_lea.vmem %s0, %s840
      %v842 = vld [vmem:[%s841] sm:$0xff]
      %v843 = vld [vmem:[%s841 + $0x8] sm:$0xff]
      %v844 = vld [vmem:[%s841 + $0x10] sm:$0xff]
      %v845 = vld [vmem:[%s841 + $0x18] sm:$0xff]
      %v846 = vld [vmem:[%s841 + $0x20] sm:$0xff]
      %v847 = vld [vmem:[%s841 + $0x28] sm:$0x7]
      %v848 = vstv %s55
      %v849 = vmul.f32 %v848, %v842
      %v850 = vmul.f32 %v848, %v843
      %v851 = vmul.f32 %v848, %v844
      %v852 = vmul.f32 %v848, %v845
      %v853 = vmul.f32 %v848, %v846
      %v854 = vmul.f32 %v848, %v847
      %v855 = vadd.f32 %v808, %v849
      %v856 = vadd.f32 %v809, %v850
      %v857 = vadd.f32 %v810, %v851
      %v858 = vadd.f32 %v811, %v852
      %v859 = vadd.f32 %v812, %v853
      %v860 = vadd.f32 %v813, %v854
      %v861 = vstv %s80
      %v862 = vmul.f32 %v861, %v842
      %v863 = vmul.f32 %v861, %v843
      %v864 = vmul.f32 %v861, %v844
      %v865 = vmul.f32 %v861, %v845
      %v866 = vmul.f32 %v861, %v846
      %v867 = vmul.f32 %v861, %v847
      %v868 = vadd.f32 %v821, %v862
      %v869 = vadd.f32 %v822, %v863
      %v870 = vadd.f32 %v823, %v864
      %v871 = vadd.f32 %v824, %v865
      %v872 = vadd.f32 %v825, %v866
      %v873 = vadd.f32 %v826, %v867
      %v874 = vstv %s105
      %v875 = vmul.f32 %v874, %v842
      %v876 = vmul.f32 %v874, %v843
      %v877 = vmul.f32 %v874, %v844
      %v878 = vmul.f32 %v874, %v845
      %v879 = vmul.f32 %v874, %v846
      %v880 = vmul.f32 %v874, %v847
      %v881 = vadd.f32 %v834, %v875
      %v882 = vadd.f32 %v835, %v876
      %v883 = vadd.f32 %v836, %v877
      %v884 = vadd.f32 %v837, %v878
      %v885 = vadd.f32 %v838, %v879
      %v886 = vadd.f32 %v839, %v880
      %v887 = vld [vmem:[%s794 + $0x1] sm:$0xff]
      %v888 = vld [vmem:[%s794 + $0x9] sm:$0xff]
      %v889 = vld [vmem:[%s794 + $0x11] sm:$0xff]
      %v890 = vld [vmem:[%s794 + $0x19] sm:$0xff]
      %v891 = vld [vmem:[%s794 + $0x21] sm:$0xff]
      %v892 = vld [vmem:[%s794 + $0x29] sm:$0x7]
      %v893 = vstv %s56
      %v894 = vmul.f32 %v893, %v887
      %v895 = vmul.f32 %v893, %v888
      %v896 = vmul.f32 %v893, %v889
      %v897 = vmul.f32 %v893, %v890
      %v898 = vmul.f32 %v893, %v891
      %v899 = vmul.f32 %v893, %v892
      %v900 = vadd.f32 %v855, %v894
      %v901 = vadd.f32 %v856, %v895
      %v902 = vadd.f32 %v857, %v896
      %v903 = vadd.f32 %v858, %v897
      %v904 = vadd.f32 %v859, %v898
      %v905 = vadd.f32 %v860, %v899
      %v906 = vstv %s81
      %v907 = vmul.f32 %v906, %v887
      %v908 = vmul.f32 %v906, %v888
      %v909 = vmul.f32 %v906, %v889
      %v910 = vmul.f32 %v906, %v890
      %v911 = vmul.f32 %v906, %v891
      %v912 = vmul.f32 %v906, %v892
      %v913 = vadd.f32 %v868, %v907
      %v914 = vadd.f32 %v869, %v908
      %v915 = vadd.f32 %v870, %v909
      %v916 = vadd.f32 %v871, %v910
      %v917 = vadd.f32 %v872, %v911
      %v918 = vadd.f32 %v873, %v912
      %v919 = vstv %s106
      %v920 = vmul.f32 %v919, %v887
      %v921 = vmul.f32 %v919, %v888
      %v922 = vmul.f32 %v919, %v889
      %v923 = vmul.f32 %v919, %v890
      %v924 = vmul.f32 %v919, %v891
      %v925 = vmul.f32 %v919, %v892
      %v926 = vadd.f32 %v881, %v920
      %v927 = vadd.f32 %v882, %v921
      %v928 = vadd.f32 %v883, %v922
      %v929 = vadd.f32 %v884, %v923
      %v930 = vadd.f32 %v885, %v924
      %v931 = vadd.f32 %v886, %v925
      %v932 = vld [vmem:[%s841 + $0x1] sm:$0xff]
      %v933 = vld [vmem:[%s841 + $0x9] sm:$0xff]
      %v934 = vld [vmem:[%s841 + $0x11] sm:$0xff]
      %v935 = vld [vmem:[%s841 + $0x19] sm:$0xff]
      %v936 = vld [vmem:[%s841 + $0x21] sm:$0xff]
      %v937 = vld [vmem:[%s841 + $0x29] sm:$0x7]
      %v938 = vstv %s57
      %v939 = vmul.f32 %v938, %v932
      %v940 = vmul.f32 %v938, %v933
      %v941 = vmul.f32 %v938, %v934
      %v942 = vmul.f32 %v938, %v935
      %v943 = vmul.f32 %v938, %v936
      %v944 = vmul.f32 %v938, %v937
      %v945 = vadd.f32 %v900, %v939
      %v946 = vadd.f32 %v901, %v940
      %v947 = vadd.f32 %v902, %v941
      %v948 = vadd.f32 %v903, %v942
      %v949 = vadd.f32 %v904, %v943
      %v950 = vadd.f32 %v905, %v944
      %v951 = vstv %s82
      %v952 = vmul.f32 %v951, %v932
      %v953 = vmul.f32 %v951, %v933
      %v954 = vmul.f32 %v951, %v934
      %v955 = vmul.f32 %v951, %v935
      %v956 = vmul.f32 %v951, %v936
      %v957 = vmul.f32 %v951, %v937
      %v958 = vadd.f32 %v913, %v952
      %v959 = vadd.f32 %v914, %v953
      %v960 = vadd.f32 %v915, %v954
      %v961 = vadd.f32 %v916, %v955
      %v962 = vadd.f32 %v917, %v956
      %v963 = vadd.f32 %v918, %v957
      %v964 = vstv %s107
      %v965 = vmul.f32 %v964, %v932
      %v966 = vmul.f32 %v964, %v933
      %v967 = vmul.f32 %v964, %v934
      %v968 = vmul.f32 %v964, %v935
      %v969 = vmul.f32 %v964, %v936
      %v970 = vmul.f32 %v964, %v937
      %v971 = vadd.f32 %v926, %v965
      %v972 = vadd.f32 %v927, %v966
      %v973 = vadd.f32 %v928, %v967
      %v974 = vadd.f32 %v929, %v968
      %v975 = vadd.f32 %v930, %v969
      %v976 = vadd.f32 %v931, %v970
      %v977 = vld [vmem:[%s794 + $0x2] sm:$0xff]
      %v978 = vld [vmem:[%s794 + $0xa] sm:$0xff]
      %v979 = vld [vmem:[%s794 + $0x12] sm:$0xff]
      %v980 = vld [vmem:[%s794 + $0x1a] sm:$0xff]
      %v981 = vld [vmem:[%s794 + $0x22] sm:$0xff]
      %v982 = vld [vmem:[%s794 + $0x2a] sm:$0x7]
      %v983 = vstv %s58
      %v984 = vmul.f32 %v983, %v977
      %v985 = vmul.f32 %v983, %v978
      %v986 = vmul.f32 %v983, %v979
      %v987 = vmul.f32 %v983, %v980
      %v988 = vmul.f32 %v983, %v981
      %v989 = vmul.f32 %v983, %v982
      %v990 = vadd.f32 %v945, %v984
      %v991 = vadd.f32 %v946, %v985
      %v992 = vadd.f32 %v947, %v986
      %v993 = vadd.f32 %v948, %v987
      %v994 = vadd.f32 %v949, %v988
      %v995 = vadd.f32 %v950, %v989
      %v996 = vstv %s83
      %v997 = vmul.f32 %v996, %v977
      %v998 = vmul.f32 %v996, %v978
      %v999 = vmul.f32 %v996, %v979
      %v1000 = vmul.f32 %v996, %v980
      %v1001 = vmul.f32 %v996, %v981
      %v1002 = vmul.f32 %v996, %v982
      %v1003 = vadd.f32 %v958, %v997
      %v1004 = vadd.f32 %v959, %v998
      %v1005 = vadd.f32 %v960, %v999
      %v1006 = vadd.f32 %v961, %v1000
      %v1007 = vadd.f32 %v962, %v1001
      %v1008 = vadd.f32 %v963, %v1002
      %v1009 = vstv %s108
      %v1010 = vmul.f32 %v1009, %v977
      %v1011 = vmul.f32 %v1009, %v978
      %v1012 = vmul.f32 %v1009, %v979
      %v1013 = vmul.f32 %v1009, %v980
      %v1014 = vmul.f32 %v1009, %v981
      %v1015 = vmul.f32 %v1009, %v982
      %v1016 = vadd.f32 %v971, %v1010
      %v1017 = vadd.f32 %v972, %v1011
      %v1018 = vadd.f32 %v973, %v1012
      %v1019 = vadd.f32 %v974, %v1013
      %v1020 = vadd.f32 %v975, %v1014
      %v1021 = vadd.f32 %v976, %v1015
      %s1022 = sadd.s32 %s118, 2
      %s1023 = smul.u32 %s1022, 48
      %s1024 = scalar_lea.vmem %s0, %s1023
      %v1025 = vld [vmem:[%s1024] sm:$0xff]
      %v1026 = vld [vmem:[%s1024 + $0x8] sm:$0xff]
      %v1027 = vld [vmem:[%s1024 + $0x10] sm:$0xff]
      %v1028 = vld [vmem:[%s1024 + $0x18] sm:$0xff]
      %v1029 = vld [vmem:[%s1024 + $0x20] sm:$0xff]
      %v1030 = vld [vmem:[%s1024 + $0x28] sm:$0x7]
      %v1031 = vstv %s59
      %v1032 = vmul.f32 %v1031, %v1025
      %v1033 = vmul.f32 %v1031, %v1026
      %v1034 = vmul.f32 %v1031, %v1027
      %v1035 = vmul.f32 %v1031, %v1028
      %v1036 = vmul.f32 %v1031, %v1029
      %v1037 = vmul.f32 %v1031, %v1030
      %v1038 = vadd.f32 %v990, %v1032
      %v1039 = vadd.f32 %v991, %v1033
      %v1040 = vadd.f32 %v992, %v1034
      %v1041 = vadd.f32 %v993, %v1035
      %v1042 = vadd.f32 %v994, %v1036
      %v1043 = vadd.f32 %v995, %v1037
      %v1044 = vstv %s84
      %v1045 = vmul.f32 %v1044, %v1025
      %v1046 = vmul.f32 %v1044, %v1026
      %v1047 = vmul.f32 %v1044, %v1027
      %v1048 = vmul.f32 %v1044, %v1028
      %v1049 = vmul.f32 %v1044, %v1029
      %v1050 = vmul.f32 %v1044, %v1030
      %v1051 = vadd.f32 %v1003, %v1045
      %v1052 = vadd.f32 %v1004, %v1046
      %v1053 = vadd.f32 %v1005, %v1047
      %v1054 = vadd.f32 %v1006, %v1048
      %v1055 = vadd.f32 %v1007, %v1049
      %v1056 = vadd.f32 %v1008, %v1050
      %v1057 = vstv %s109
      %v1058 = vmul.f32 %v1057, %v1025
      %v1059 = vmul.f32 %v1057, %v1026
      %v1060 = vmul.f32 %v1057, %v1027
      %v1061 = vmul.f32 %v1057, %v1028
      %v1062 = vmul.f32 %v1057, %v1029
      %v1063 = vmul.f32 %v1057, %v1030
      %v1064 = vadd.f32 %v1016, %v1058
      %v1065 = vadd.f32 %v1017, %v1059
      %v1066 = vadd.f32 %v1018, %v1060
      %v1067 = vadd.f32 %v1019, %v1061
      %v1068 = vadd.f32 %v1020, %v1062
      %v1069 = vadd.f32 %v1021, %v1063
      %s1070 = sadd.s32 %s1023, 2160
      %s1071 = scalar_lea.vmem %s0, %s1070
      %v1072 = vld [vmem:[%s1071] sm:$0xff]
      %v1073 = vld [vmem:[%s1071 + $0x8] sm:$0xff]
      %v1074 = vld [vmem:[%s1071 + $0x10] sm:$0xff]
      %v1075 = vld [vmem:[%s1071 + $0x18] sm:$0xff]
      %v1076 = vld [vmem:[%s1071 + $0x20] sm:$0xff]
      %v1077 = vld [vmem:[%s1071 + $0x28] sm:$0x7]
      %v1078 = vstv %s60
      %v1079 = vmul.f32 %v1078, %v1072
      %v1080 = vmul.f32 %v1078, %v1073
      %v1081 = vmul.f32 %v1078, %v1074
      %v1082 = vmul.f32 %v1078, %v1075
      %v1083 = vmul.f32 %v1078, %v1076
      %v1084 = vmul.f32 %v1078, %v1077
      %v1085 = vadd.f32 %v1038, %v1079
      %v1086 = vadd.f32 %v1039, %v1080
      %v1087 = vadd.f32 %v1040, %v1081
      %v1088 = vadd.f32 %v1041, %v1082
      %v1089 = vadd.f32 %v1042, %v1083
      %v1090 = vadd.f32 %v1043, %v1084
      %v1091 = vstv %s85
      %v1092 = vmul.f32 %v1091, %v1072
      %v1093 = vmul.f32 %v1091, %v1073
      %v1094 = vmul.f32 %v1091, %v1074
      %v1095 = vmul.f32 %v1091, %v1075
      %v1096 = vmul.f32 %v1091, %v1076
      %v1097 = vmul.f32 %v1091, %v1077
      %v1098 = vadd.f32 %v1051, %v1092
      %v1099 = vadd.f32 %v1052, %v1093
      %v1100 = vadd.f32 %v1053, %v1094
      %v1101 = vadd.f32 %v1054, %v1095
      %v1102 = vadd.f32 %v1055, %v1096
      %v1103 = vadd.f32 %v1056, %v1097
      %v1104 = vstv %s110
      %v1105 = vmul.f32 %v1104, %v1072
      %v1106 = vmul.f32 %v1104, %v1073
      %v1107 = vmul.f32 %v1104, %v1074
      %v1108 = vmul.f32 %v1104, %v1075
      %v1109 = vmul.f32 %v1104, %v1076
      %v1110 = vmul.f32 %v1104, %v1077
      %v1111 = vadd.f32 %v1064, %v1105
      %v1112 = vadd.f32 %v1065, %v1106
      %v1113 = vadd.f32 %v1066, %v1107
      %v1114 = vadd.f32 %v1067, %v1108
      %v1115 = vadd.f32 %v1068, %v1109
      %v1116 = vadd.f32 %v1069, %v1110
      %v1117 = vld [vmem:[%s1024 + $0x1] sm:$0xff]
      %v1118 = vld [vmem:[%s1024 + $0x9] sm:$0xff]
      %v1119 = vld [vmem:[%s1024 + $0x11] sm:$0xff]
      %v1120 = vld [vmem:[%s1024 + $0x19] sm:$0xff]
      %v1121 = vld [vmem:[%s1024 + $0x21] sm:$0xff]
      %v1122 = vld [vmem:[%s1024 + $0x29] sm:$0x7]
      %v1123 = vstv %s61
      %v1124 = vmul.f32 %v1123, %v1117
      %v1125 = vmul.f32 %v1123, %v1118
      %v1126 = vmul.f32 %v1123, %v1119
      %v1127 = vmul.f32 %v1123, %v1120
      %v1128 = vmul.f32 %v1123, %v1121
      %v1129 = vmul.f32 %v1123, %v1122
      %v1130 = vadd.f32 %v1085, %v1124
      %v1131 = vadd.f32 %v1086, %v1125
      %v1132 = vadd.f32 %v1087, %v1126
      %v1133 = vadd.f32 %v1088, %v1127
      %v1134 = vadd.f32 %v1089, %v1128
      %v1135 = vadd.f32 %v1090, %v1129
      %v1136 = vstv %s86
      %v1137 = vmul.f32 %v1136, %v1117
      %v1138 = vmul.f32 %v1136, %v1118
      %v1139 = vmul.f32 %v1136, %v1119
      %v1140 = vmul.f32 %v1136, %v1120
      %v1141 = vmul.f32 %v1136, %v1121
      %v1142 = vmul.f32 %v1136, %v1122
      %v1143 = vadd.f32 %v1098, %v1137
      %v1144 = vadd.f32 %v1099, %v1138
      %v1145 = vadd.f32 %v1100, %v1139
      %v1146 = vadd.f32 %v1101, %v1140
      %v1147 = vadd.f32 %v1102, %v1141
      %v1148 = vadd.f32 %v1103, %v1142
      %v1149 = vstv %s111
      %v1150 = vmul.f32 %v1149, %v1117
      %v1151 = vmul.f32 %v1149, %v1118
      %v1152 = vmul.f32 %v1149, %v1119
      %v1153 = vmul.f32 %v1149, %v1120
      %v1154 = vmul.f32 %v1149, %v1121
      %v1155 = vmul.f32 %v1149, %v1122
      %v1156 = vadd.f32 %v1111, %v1150
      %v1157 = vadd.f32 %v1112, %v1151
      %v1158 = vadd.f32 %v1113, %v1152
      %v1159 = vadd.f32 %v1114, %v1153
      %v1160 = vadd.f32 %v1115, %v1154
      %v1161 = vadd.f32 %v1116, %v1155
      %v1162 = vld [vmem:[%s1071 + $0x1] sm:$0xff]
      %v1163 = vld [vmem:[%s1071 + $0x9] sm:$0xff]
      %v1164 = vld [vmem:[%s1071 + $0x11] sm:$0xff]
      %v1165 = vld [vmem:[%s1071 + $0x19] sm:$0xff]
      %v1166 = vld [vmem:[%s1071 + $0x21] sm:$0xff]
      %v1167 = vld [vmem:[%s1071 + $0x29] sm:$0x7]
      %v1168 = vstv %s62
      %v1169 = vmul.f32 %v1168, %v1162
      %v1170 = vmul.f32 %v1168, %v1163
      %v1171 = vmul.f32 %v1168, %v1164
      %v1172 = vmul.f32 %v1168, %v1165
      %v1173 = vmul.f32 %v1168, %v1166
      %v1174 = vmul.f32 %v1168, %v1167
      %v1175 = vadd.f32 %v1130, %v1169
      %v1176 = vadd.f32 %v1131, %v1170
      %v1177 = vadd.f32 %v1132, %v1171
      %v1178 = vadd.f32 %v1133, %v1172
      %v1179 = vadd.f32 %v1134, %v1173
      %v1180 = vadd.f32 %v1135, %v1174
      %v1181 = vstv %s87
      %v1182 = vmul.f32 %v1181, %v1162
      %v1183 = vmul.f32 %v1181, %v1163
      %v1184 = vmul.f32 %v1181, %v1164
      %v1185 = vmul.f32 %v1181, %v1165
      %v1186 = vmul.f32 %v1181, %v1166
      %v1187 = vmul.f32 %v1181, %v1167
      %v1188 = vadd.f32 %v1143, %v1182
      %v1189 = vadd.f32 %v1144, %v1183
      %v1190 = vadd.f32 %v1145, %v1184
      %v1191 = vadd.f32 %v1146, %v1185
      %v1192 = vadd.f32 %v1147, %v1186
      %v1193 = vadd.f32 %v1148, %v1187
      %v1194 = vstv %s112
      %v1195 = vmul.f32 %v1194, %v1162
      %v1196 = vmul.f32 %v1194, %v1163
      %v1197 = vmul.f32 %v1194, %v1164
      %v1198 = vmul.f32 %v1194, %v1165
      %v1199 = vmul.f32 %v1194, %v1166
      %v1200 = vmul.f32 %v1194, %v1167
      %v1201 = vadd.f32 %v1156, %v1195
      %v1202 = vadd.f32 %v1157, %v1196
      %v1203 = vadd.f32 %v1158, %v1197
      %v1204 = vadd.f32 %v1159, %v1198
      %v1205 = vadd.f32 %v1160, %v1199
      %v1206 = vadd.f32 %v1161, %v1200
      %v1207 = vld [vmem:[%s1024 + $0x2] sm:$0xff]
      %v1208 = vld [vmem:[%s1024 + $0xa] sm:$0xff]
      %v1209 = vld [vmem:[%s1024 + $0x12] sm:$0xff]
      %v1210 = vld [vmem:[%s1024 + $0x1a] sm:$0xff]
      %v1211 = vld [vmem:[%s1024 + $0x22] sm:$0xff]
      %v1212 = vld [vmem:[%s1024 + $0x2a] sm:$0x7]
      %v1213 = vstv %s63
      %v1214 = vmul.f32 %v1213, %v1207
      %v1215 = vmul.f32 %v1213, %v1208
      %v1216 = vmul.f32 %v1213, %v1209
      %v1217 = vmul.f32 %v1213, %v1210
      %v1218 = vmul.f32 %v1213, %v1211
      %v1219 = vmul.f32 %v1213, %v1212
      %v1220 = vadd.f32 %v1175, %v1214
      %v1221 = vadd.f32 %v1176, %v1215
      %v1222 = vadd.f32 %v1177, %v1216
      %v1223 = vadd.f32 %v1178, %v1217
      %v1224 = vadd.f32 %v1179, %v1218
      %v1225 = vadd.f32 %v1180, %v1219
      %v1226 = vstv %s88
      %v1227 = vmul.f32 %v1226, %v1207
      %v1228 = vmul.f32 %v1226, %v1208
      %v1229 = vmul.f32 %v1226, %v1209
      %v1230 = vmul.f32 %v1226, %v1210
      %v1231 = vmul.f32 %v1226, %v1211
      %v1232 = vmul.f32 %v1226, %v1212
      %v1233 = vadd.f32 %v1188, %v1227
      %v1234 = vadd.f32 %v1189, %v1228
      %v1235 = vadd.f32 %v1190, %v1229
      %v1236 = vadd.f32 %v1191, %v1230
      %v1237 = vadd.f32 %v1192, %v1231
      %v1238 = vadd.f32 %v1193, %v1232
      %v1239 = vstv %s113
      %v1240 = vmul.f32 %v1239, %v1207
      %v1241 = vmul.f32 %v1239, %v1208
      %v1242 = vmul.f32 %v1239, %v1209
      %v1243 = vmul.f32 %v1239, %v1210
      %v1244 = vmul.f32 %v1239, %v1211
      %v1245 = vmul.f32 %v1239, %v1212
      %v1246 = vadd.f32 %v1201, %v1240
      %v1247 = vadd.f32 %v1202, %v1241
      %v1248 = vadd.f32 %v1203, %v1242
      %v1249 = vadd.f32 %v1204, %v1243
      %v1250 = vadd.f32 %v1205, %v1244
      %v1251 = vadd.f32 %v1206, %v1245
      %v1252 = vmul.f32 %v131, %v154
      %v1253 = vmul.f32 %v131, %v155
      %v1254 = vmul.f32 %v131, %v156
      %v1255 = vmul.f32 %v131, %v157
      %v1256 = vmul.f32 %v131, %v158
      %v1257 = vmul.f32 %v131, %v159
      %v1258 = vmul.f32 %v138, %v154
      %v1259 = vmul.f32 %v138, %v155
      %v1260 = vmul.f32 %v138, %v156
      %v1261 = vmul.f32 %v138, %v157
      %v1262 = vmul.f32 %v138, %v158
      %v1263 = vmul.f32 %v138, %v159
      %v1264 = vmul.f32 %v145, %v154
      %v1265 = vmul.f32 %v145, %v155
      %v1266 = vmul.f32 %v145, %v156
      %v1267 = vmul.f32 %v145, %v157
      %v1268 = vmul.f32 %v145, %v158
      %v1269 = vmul.f32 %v145, %v159
      %v1270 = vmul.f32 %v160, %v199
      %v1271 = vmul.f32 %v160, %v200
      %v1272 = vmul.f32 %v160, %v201
      %v1273 = vmul.f32 %v160, %v202
      %v1274 = vmul.f32 %v160, %v203
      %v1275 = vmul.f32 %v160, %v204
      %v1276 = vadd.f32 %v1252, %v1270
      %v1277 = vadd.f32 %v1253, %v1271
      %v1278 = vadd.f32 %v1254, %v1272
      %v1279 = vadd.f32 %v1255, %v1273
      %v1280 = vadd.f32 %v1256, %v1274
      %v1281 = vadd.f32 %v1257, %v1275
      %v1282 = vmul.f32 %v173, %v199
      %v1283 = vmul.f32 %v173, %v200
      %v1284 = vmul.f32 %v173, %v201
      %v1285 = vmul.f32 %v173, %v202
      %v1286 = vmul.f32 %v173, %v203
      %v1287 = vmul.f32 %v173, %v204
      %v1288 = vadd.f32 %v1258, %v1282
      %v1289 = vadd.f32 %v1259, %v1283
      %v1290 = vadd.f32 %v1260, %v1284
      %v1291 = vadd.f32 %v1261, %v1285
      %v1292 = vadd.f32 %v1262, %v1286
      %v1293 = vadd.f32 %v1263, %v1287
      %v1294 = vmul.f32 %v186, %v199
      %v1295 = vmul.f32 %v186, %v200
      %v1296 = vmul.f32 %v186, %v201
      %v1297 = vmul.f32 %v186, %v202
      %v1298 = vmul.f32 %v186, %v203
      %v1299 = vmul.f32 %v186, %v204
      %v1300 = vadd.f32 %v1264, %v1294
      %v1301 = vadd.f32 %v1265, %v1295
      %v1302 = vadd.f32 %v1266, %v1296
      %v1303 = vadd.f32 %v1267, %v1297
      %v1304 = vadd.f32 %v1268, %v1298
      %v1305 = vadd.f32 %v1269, %v1299
      %v1306 = vmul.f32 %v205, %v244
      %v1307 = vmul.f32 %v205, %v245
      %v1308 = vmul.f32 %v205, %v246
      %v1309 = vmul.f32 %v205, %v247
      %v1310 = vmul.f32 %v205, %v248
      %v1311 = vmul.f32 %v205, %v249
      %v1312 = vadd.f32 %v1276, %v1306
      %v1313 = vadd.f32 %v1277, %v1307
      %v1314 = vadd.f32 %v1278, %v1308
      %v1315 = vadd.f32 %v1279, %v1309
      %v1316 = vadd.f32 %v1280, %v1310
      %v1317 = vadd.f32 %v1281, %v1311
      %v1318 = vmul.f32 %v218, %v244
      %v1319 = vmul.f32 %v218, %v245
      %v1320 = vmul.f32 %v218, %v246
      %v1321 = vmul.f32 %v218, %v247
      %v1322 = vmul.f32 %v218, %v248
      %v1323 = vmul.f32 %v218, %v249
      %v1324 = vadd.f32 %v1288, %v1318
      %v1325 = vadd.f32 %v1289, %v1319
      %v1326 = vadd.f32 %v1290, %v1320
      %v1327 = vadd.f32 %v1291, %v1321
      %v1328 = vadd.f32 %v1292, %v1322
      %v1329 = vadd.f32 %v1293, %v1323
      %v1330 = vmul.f32 %v231, %v244
      %v1331 = vmul.f32 %v231, %v245
      %v1332 = vmul.f32 %v231, %v246
      %v1333 = vmul.f32 %v231, %v247
      %v1334 = vmul.f32 %v231, %v248
      %v1335 = vmul.f32 %v231, %v249
      %v1336 = vadd.f32 %v1300, %v1330
      %v1337 = vadd.f32 %v1301, %v1331
      %v1338 = vadd.f32 %v1302, %v1332
      %v1339 = vadd.f32 %v1303, %v1333
      %v1340 = vadd.f32 %v1304, %v1334
      %v1341 = vadd.f32 %v1305, %v1335
      %v1342 = vmul.f32 %v250, %v289
      %v1343 = vmul.f32 %v250, %v290
      %v1344 = vmul.f32 %v250, %v291
      %v1345 = vmul.f32 %v250, %v292
      %v1346 = vmul.f32 %v250, %v293
      %v1347 = vmul.f32 %v250, %v294
      %v1348 = vadd.f32 %v1312, %v1342
      %v1349 = vadd.f32 %v1313, %v1343
      %v1350 = vadd.f32 %v1314, %v1344
      %v1351 = vadd.f32 %v1315, %v1345
      %v1352 = vadd.f32 %v1316, %v1346
      %v1353 = vadd.f32 %v1317, %v1347
      %v1354 = vmul.f32 %v263, %v289
      %v1355 = vmul.f32 %v263, %v290
      %v1356 = vmul.f32 %v263, %v291
      %v1357 = vmul.f32 %v263, %v292
      %v1358 = vmul.f32 %v263, %v293
      %v1359 = vmul.f32 %v263, %v294
      %v1360 = vadd.f32 %v1324, %v1354
      %v1361 = vadd.f32 %v1325, %v1355
      %v1362 = vadd.f32 %v1326, %v1356
      %v1363 = vadd.f32 %v1327, %v1357
      %v1364 = vadd.f32 %v1328, %v1358
      %v1365 = vadd.f32 %v1329, %v1359
      %v1366 = vmul.f32 %v276, %v289
      %v1367 = vmul.f32 %v276, %v290
      %v1368 = vmul.f32 %v276, %v291
      %v1369 = vmul.f32 %v276, %v292
      %v1370 = vmul.f32 %v276, %v293
      %v1371 = vmul.f32 %v276, %v294
      %v1372 = vadd.f32 %v1336, %v1366
      %v1373 = vadd.f32 %v1337, %v1367
      %v1374 = vadd.f32 %v1338, %v1368
      %v1375 = vadd.f32 %v1339, %v1369
      %v1376 = vadd.f32 %v1340, %v1370
      %v1377 = vadd.f32 %v1341, %v1371
      %v1378 = vld [vmem:[%s153 + $0x2] sm:$0xff]
      %v1379 = vld [vmem:[%s153 + $0xa] sm:$0xff]
      %v1380 = vld [vmem:[%s153 + $0x12] sm:$0xff]
      %v1381 = vld [vmem:[%s153 + $0x1a] sm:$0xff]
      %v1382 = vld [vmem:[%s153 + $0x22] sm:$0xff]
      %v1383 = vld [vmem:[%s153 + $0x2a] sm:$0x7]
      %v1384 = vmul.f32 %v295, %v1378
      %v1385 = vmul.f32 %v295, %v1379
      %v1386 = vmul.f32 %v295, %v1380
      %v1387 = vmul.f32 %v295, %v1381
      %v1388 = vmul.f32 %v295, %v1382
      %v1389 = vmul.f32 %v295, %v1383
      %v1390 = vadd.f32 %v1348, %v1384
      %v1391 = vadd.f32 %v1349, %v1385
      %v1392 = vadd.f32 %v1350, %v1386
      %v1393 = vadd.f32 %v1351, %v1387
      %v1394 = vadd.f32 %v1352, %v1388
      %v1395 = vadd.f32 %v1353, %v1389
      %v1396 = vmul.f32 %v308, %v1378
      %v1397 = vmul.f32 %v308, %v1379
      %v1398 = vmul.f32 %v308, %v1380
      %v1399 = vmul.f32 %v308, %v1381
      %v1400 = vmul.f32 %v308, %v1382
      %v1401 = vmul.f32 %v308, %v1383
      %v1402 = vadd.f32 %v1360, %v1396
      %v1403 = vadd.f32 %v1361, %v1397
      %v1404 = vadd.f32 %v1362, %v1398
      %v1405 = vadd.f32 %v1363, %v1399
      %v1406 = vadd.f32 %v1364, %v1400
      %v1407 = vadd.f32 %v1365, %v1401
      %v1408 = vmul.f32 %v321, %v1378
      %v1409 = vmul.f32 %v321, %v1379
      %v1410 = vmul.f32 %v321, %v1380
      %v1411 = vmul.f32 %v321, %v1381
      %v1412 = vmul.f32 %v321, %v1382
      %v1413 = vmul.f32 %v321, %v1383
      %v1414 = vadd.f32 %v1372, %v1408
      %v1415 = vadd.f32 %v1373, %v1409
      %v1416 = vadd.f32 %v1374, %v1410
      %v1417 = vadd.f32 %v1375, %v1411
      %v1418 = vadd.f32 %v1376, %v1412
      %v1419 = vadd.f32 %v1377, %v1413
      %v1420 = vmul.f32 %v342, %v383
      %v1421 = vmul.f32 %v342, %v384
      %v1422 = vmul.f32 %v342, %v385
      %v1423 = vmul.f32 %v342, %v386
      %v1424 = vmul.f32 %v342, %v387
      %v1425 = vmul.f32 %v342, %v388
      %v1426 = vadd.f32 %v1390, %v1420
      %v1427 = vadd.f32 %v1391, %v1421
      %v1428 = vadd.f32 %v1392, %v1422
      %v1429 = vadd.f32 %v1393, %v1423
      %v1430 = vadd.f32 %v1394, %v1424
      %v1431 = vadd.f32 %v1395, %v1425
      %v1432 = vmul.f32 %v355, %v383
      %v1433 = vmul.f32 %v355, %v384
      %v1434 = vmul.f32 %v355, %v385
      %v1435 = vmul.f32 %v355, %v386
      %v1436 = vmul.f32 %v355, %v387
      %v1437 = vmul.f32 %v355, %v388
      %v1438 = vadd.f32 %v1402, %v1432
      %v1439 = vadd.f32 %v1403, %v1433
      %v1440 = vadd.f32 %v1404, %v1434
      %v1441 = vadd.f32 %v1405, %v1435
      %v1442 = vadd.f32 %v1406, %v1436
      %v1443 = vadd.f32 %v1407, %v1437
      %v1444 = vmul.f32 %v368, %v383
      %v1445 = vmul.f32 %v368, %v384
      %v1446 = vmul.f32 %v368, %v385
      %v1447 = vmul.f32 %v368, %v386
      %v1448 = vmul.f32 %v368, %v387
      %v1449 = vmul.f32 %v368, %v388
      %v1450 = vadd.f32 %v1414, %v1444
      %v1451 = vadd.f32 %v1415, %v1445
      %v1452 = vadd.f32 %v1416, %v1446
      %v1453 = vadd.f32 %v1417, %v1447
      %v1454 = vadd.f32 %v1418, %v1448
      %v1455 = vadd.f32 %v1419, %v1449
      %v1456 = vmul.f32 %v389, %v428
      %v1457 = vmul.f32 %v389, %v429
      %v1458 = vmul.f32 %v389, %v430
      %v1459 = vmul.f32 %v389, %v431
      %v1460 = vmul.f32 %v389, %v432
      %v1461 = vmul.f32 %v389, %v433
      %v1462 = vadd.f32 %v1426, %v1456
      %v1463 = vadd.f32 %v1427, %v1457
      %v1464 = vadd.f32 %v1428, %v1458
      %v1465 = vadd.f32 %v1429, %v1459
      %v1466 = vadd.f32 %v1430, %v1460
      %v1467 = vadd.f32 %v1431, %v1461
      %v1468 = vmul.f32 %v402, %v428
      %v1469 = vmul.f32 %v402, %v429
      %v1470 = vmul.f32 %v402, %v430
      %v1471 = vmul.f32 %v402, %v431
      %v1472 = vmul.f32 %v402, %v432
      %v1473 = vmul.f32 %v402, %v433
      %v1474 = vadd.f32 %v1438, %v1468
      %v1475 = vadd.f32 %v1439, %v1469
      %v1476 = vadd.f32 %v1440, %v1470
      %v1477 = vadd.f32 %v1441, %v1471
      %v1478 = vadd.f32 %v1442, %v1472
      %v1479 = vadd.f32 %v1443, %v1473
      %v1480 = vmul.f32 %v415, %v428
      %v1481 = vmul.f32 %v415, %v429
      %v1482 = vmul.f32 %v415, %v430
      %v1483 = vmul.f32 %v415, %v431
      %v1484 = vmul.f32 %v415, %v432
      %v1485 = vmul.f32 %v415, %v433
      %v1486 = vadd.f32 %v1450, %v1480
      %v1487 = vadd.f32 %v1451, %v1481
      %v1488 = vadd.f32 %v1452, %v1482
      %v1489 = vadd.f32 %v1453, %v1483
      %v1490 = vadd.f32 %v1454, %v1484
      %v1491 = vadd.f32 %v1455, %v1485
      %v1492 = vmul.f32 %v434, %v473
      %v1493 = vmul.f32 %v434, %v474
      %v1494 = vmul.f32 %v434, %v475
      %v1495 = vmul.f32 %v434, %v476
      %v1496 = vmul.f32 %v434, %v477
      %v1497 = vmul.f32 %v434, %v478
      %v1498 = vadd.f32 %v1462, %v1492
      %v1499 = vadd.f32 %v1463, %v1493
      %v1500 = vadd.f32 %v1464, %v1494
      %v1501 = vadd.f32 %v1465, %v1495
      %v1502 = vadd.f32 %v1466, %v1496
      %v1503 = vadd.f32 %v1467, %v1497
      %v1504 = vmul.f32 %v447, %v473
      %v1505 = vmul.f32 %v447, %v474
      %v1506 = vmul.f32 %v447, %v475
      %v1507 = vmul.f32 %v447, %v476
      %v1508 = vmul.f32 %v447, %v477
      %v1509 = vmul.f32 %v447, %v478
      %v1510 = vadd.f32 %v1474, %v1504
      %v1511 = vadd.f32 %v1475, %v1505
      %v1512 = vadd.f32 %v1476, %v1506
      %v1513 = vadd.f32 %v1477, %v1507
      %v1514 = vadd.f32 %v1478, %v1508
      %v1515 = vadd.f32 %v1479, %v1509
      %v1516 = vmul.f32 %v460, %v473
      %v1517 = vmul.f32 %v460, %v474
      %v1518 = vmul.f32 %v460, %v475
      %v1519 = vmul.f32 %v460, %v476
      %v1520 = vmul.f32 %v460, %v477
      %v1521 = vmul.f32 %v460, %v478
      %v1522 = vadd.f32 %v1486, %v1516
      %v1523 = vadd.f32 %v1487, %v1517
      %v1524 = vadd.f32 %v1488, %v1518
      %v1525 = vadd.f32 %v1489, %v1519
      %v1526 = vadd.f32 %v1490, %v1520
      %v1527 = vadd.f32 %v1491, %v1521
      %v1528 = vmul.f32 %v479, %v518
      %v1529 = vmul.f32 %v479, %v519
      %v1530 = vmul.f32 %v479, %v520
      %v1531 = vmul.f32 %v479, %v521
      %v1532 = vmul.f32 %v479, %v522
      %v1533 = vmul.f32 %v479, %v523
      %v1534 = vadd.f32 %v1498, %v1528
      %v1535 = vadd.f32 %v1499, %v1529
      %v1536 = vadd.f32 %v1500, %v1530
      %v1537 = vadd.f32 %v1501, %v1531
      %v1538 = vadd.f32 %v1502, %v1532
      %v1539 = vadd.f32 %v1503, %v1533
      %v1540 = vmul.f32 %v492, %v518
      %v1541 = vmul.f32 %v492, %v519
      %v1542 = vmul.f32 %v492, %v520
      %v1543 = vmul.f32 %v492, %v521
      %v1544 = vmul.f32 %v492, %v522
      %v1545 = vmul.f32 %v492, %v523
      %v1546 = vadd.f32 %v1510, %v1540
      %v1547 = vadd.f32 %v1511, %v1541
      %v1548 = vadd.f32 %v1512, %v1542
      %v1549 = vadd.f32 %v1513, %v1543
      %v1550 = vadd.f32 %v1514, %v1544
      %v1551 = vadd.f32 %v1515, %v1545
      %v1552 = vmul.f32 %v505, %v518
      %v1553 = vmul.f32 %v505, %v519
      %v1554 = vmul.f32 %v505, %v520
      %v1555 = vmul.f32 %v505, %v521
      %v1556 = vmul.f32 %v505, %v522
      %v1557 = vmul.f32 %v505, %v523
      %v1558 = vadd.f32 %v1522, %v1552
      %v1559 = vadd.f32 %v1523, %v1553
      %v1560 = vadd.f32 %v1524, %v1554
      %v1561 = vadd.f32 %v1525, %v1555
      %v1562 = vadd.f32 %v1526, %v1556
      %v1563 = vadd.f32 %v1527, %v1557
      %v1564 = vld [vmem:[%s382 + $0x2] sm:$0xff]
      %v1565 = vld [vmem:[%s382 + $0xa] sm:$0xff]
      %v1566 = vld [vmem:[%s382 + $0x12] sm:$0xff]
      %v1567 = vld [vmem:[%s382 + $0x1a] sm:$0xff]
      %v1568 = vld [vmem:[%s382 + $0x22] sm:$0xff]
      %v1569 = vld [vmem:[%s382 + $0x2a] sm:$0x7]
      %v1570 = vmul.f32 %v524, %v1564
      %v1571 = vmul.f32 %v524, %v1565
      %v1572 = vmul.f32 %v524, %v1566
      %v1573 = vmul.f32 %v524, %v1567
      %v1574 = vmul.f32 %v524, %v1568
      %v1575 = vmul.f32 %v524, %v1569
      %v1576 = vadd.f32 %v1534, %v1570
      %v1577 = vadd.f32 %v1535, %v1571
      %v1578 = vadd.f32 %v1536, %v1572
      %v1579 = vadd.f32 %v1537, %v1573
      %v1580 = vadd.f32 %v1538, %v1574
      %v1581 = vadd.f32 %v1539, %v1575
      %v1582 = vmul.f32 %v537, %v1564
      %v1583 = vmul.f32 %v537, %v1565
      %v1584 = vmul.f32 %v537, %v1566
      %v1585 = vmul.f32 %v537, %v1567
      %v1586 = vmul.f32 %v537, %v1568
      %v1587 = vmul.f32 %v537, %v1569
      %v1588 = vadd.f32 %v1546, %v1582
      %v1589 = vadd.f32 %v1547, %v1583
      %v1590 = vadd.f32 %v1548, %v1584
      %v1591 = vadd.f32 %v1549, %v1585
      %v1592 = vadd.f32 %v1550, %v1586
      %v1593 = vadd.f32 %v1551, %v1587
      %v1594 = vmul.f32 %v550, %v1564
      %v1595 = vmul.f32 %v550, %v1565
      %v1596 = vmul.f32 %v550, %v1566
      %v1597 = vmul.f32 %v550, %v1567
      %v1598 = vmul.f32 %v550, %v1568
      %v1599 = vmul.f32 %v550, %v1569
      %v1600 = vadd.f32 %v1558, %v1594
      %v1601 = vadd.f32 %v1559, %v1595
      %v1602 = vadd.f32 %v1560, %v1596
      %v1603 = vadd.f32 %v1561, %v1597
      %v1604 = vadd.f32 %v1562, %v1598
      %v1605 = vadd.f32 %v1563, %v1599
      %v1606 = vmul.f32 %v572, %v613
      %v1607 = vmul.f32 %v572, %v614
      %v1608 = vmul.f32 %v572, %v615
      %v1609 = vmul.f32 %v572, %v616
      %v1610 = vmul.f32 %v572, %v617
      %v1611 = vmul.f32 %v572, %v618
      %v1612 = vadd.f32 %v1576, %v1606
      %v1613 = vadd.f32 %v1577, %v1607
      %v1614 = vadd.f32 %v1578, %v1608
      %v1615 = vadd.f32 %v1579, %v1609
      %v1616 = vadd.f32 %v1580, %v1610
      %v1617 = vadd.f32 %v1581, %v1611
      %v1618 = vmul.f32 %v585, %v613
      %v1619 = vmul.f32 %v585, %v614
      %v1620 = vmul.f32 %v585, %v615
      %v1621 = vmul.f32 %v585, %v616
      %v1622 = vmul.f32 %v585, %v617
      %v1623 = vmul.f32 %v585, %v618
      %v1624 = vadd.f32 %v1588, %v1618
      %v1625 = vadd.f32 %v1589, %v1619
      %v1626 = vadd.f32 %v1590, %v1620
      %v1627 = vadd.f32 %v1591, %v1621
      %v1628 = vadd.f32 %v1592, %v1622
      %v1629 = vadd.f32 %v1593, %v1623
      %v1630 = vmul.f32 %v598, %v613
      %v1631 = vmul.f32 %v598, %v614
      %v1632 = vmul.f32 %v598, %v615
      %v1633 = vmul.f32 %v598, %v616
      %v1634 = vmul.f32 %v598, %v617
      %v1635 = vmul.f32 %v598, %v618
      %v1636 = vadd.f32 %v1600, %v1630
      %v1637 = vadd.f32 %v1601, %v1631
      %v1638 = vadd.f32 %v1602, %v1632
      %v1639 = vadd.f32 %v1603, %v1633
      %v1640 = vadd.f32 %v1604, %v1634
      %v1641 = vadd.f32 %v1605, %v1635
      %v1642 = vmul.f32 %v619, %v658
      %v1643 = vmul.f32 %v619, %v659
      %v1644 = vmul.f32 %v619, %v660
      %v1645 = vmul.f32 %v619, %v661
      %v1646 = vmul.f32 %v619, %v662
      %v1647 = vmul.f32 %v619, %v663
      %v1648 = vadd.f32 %v1612, %v1642
      %v1649 = vadd.f32 %v1613, %v1643
      %v1650 = vadd.f32 %v1614, %v1644
      %v1651 = vadd.f32 %v1615, %v1645
      %v1652 = vadd.f32 %v1616, %v1646
      %v1653 = vadd.f32 %v1617, %v1647
      %v1654 = vmul.f32 %v632, %v658
      %v1655 = vmul.f32 %v632, %v659
      %v1656 = vmul.f32 %v632, %v660
      %v1657 = vmul.f32 %v632, %v661
      %v1658 = vmul.f32 %v632, %v662
      %v1659 = vmul.f32 %v632, %v663
      %v1660 = vadd.f32 %v1624, %v1654
      %v1661 = vadd.f32 %v1625, %v1655
      %v1662 = vadd.f32 %v1626, %v1656
      %v1663 = vadd.f32 %v1627, %v1657
      %v1664 = vadd.f32 %v1628, %v1658
      %v1665 = vadd.f32 %v1629, %v1659
      %v1666 = vmul.f32 %v645, %v658
      %v1667 = vmul.f32 %v645, %v659
      %v1668 = vmul.f32 %v645, %v660
      %v1669 = vmul.f32 %v645, %v661
      %v1670 = vmul.f32 %v645, %v662
      %v1671 = vmul.f32 %v645, %v663
      %v1672 = vadd.f32 %v1636, %v1666
      %v1673 = vadd.f32 %v1637, %v1667
      %v1674 = vadd.f32 %v1638, %v1668
      %v1675 = vadd.f32 %v1639, %v1669
      %v1676 = vadd.f32 %v1640, %v1670
      %v1677 = vadd.f32 %v1641, %v1671
      %v1678 = vmul.f32 %v664, %v703
      %v1679 = vmul.f32 %v664, %v704
      %v1680 = vmul.f32 %v664, %v705
      %v1681 = vmul.f32 %v664, %v706
      %v1682 = vmul.f32 %v664, %v707
      %v1683 = vmul.f32 %v664, %v708
      %v1684 = vadd.f32 %v1648, %v1678
      %v1685 = vadd.f32 %v1649, %v1679
      %v1686 = vadd.f32 %v1650, %v1680
      %v1687 = vadd.f32 %v1651, %v1681
      %v1688 = vadd.f32 %v1652, %v1682
      %v1689 = vadd.f32 %v1653, %v1683
      %v1690 = vmul.f32 %v677, %v703
      %v1691 = vmul.f32 %v677, %v704
      %v1692 = vmul.f32 %v677, %v705
      %v1693 = vmul.f32 %v677, %v706
      %v1694 = vmul.f32 %v677, %v707
      %v1695 = vmul.f32 %v677, %v708
      %v1696 = vadd.f32 %v1660, %v1690
      %v1697 = vadd.f32 %v1661, %v1691
      %v1698 = vadd.f32 %v1662, %v1692
      %v1699 = vadd.f32 %v1663, %v1693
      %v1700 = vadd.f32 %v1664, %v1694
      %v1701 = vadd.f32 %v1665, %v1695
      %v1702 = vmul.f32 %v690, %v703
      %v1703 = vmul.f32 %v690, %v704
      %v1704 = vmul.f32 %v690, %v705
      %v1705 = vmul.f32 %v690, %v706
      %v1706 = vmul.f32 %v690, %v707
      %v1707 = vmul.f32 %v690, %v708
      %v1708 = vadd.f32 %v1672, %v1702
      %v1709 = vadd.f32 %v1673, %v1703
      %v1710 = vadd.f32 %v1674, %v1704
      %v1711 = vadd.f32 %v1675, %v1705
      %v1712 = vadd.f32 %v1676, %v1706
      %v1713 = vadd.f32 %v1677, %v1707
      %v1714 = vmul.f32 %v709, %v748
      %v1715 = vmul.f32 %v709, %v749
      %v1716 = vmul.f32 %v709, %v750
      %v1717 = vmul.f32 %v709, %v751
      %v1718 = vmul.f32 %v709, %v752
      %v1719 = vmul.f32 %v709, %v753
      %v1720 = vadd.f32 %v1684, %v1714
      %v1721 = vadd.f32 %v1685, %v1715
      %v1722 = vadd.f32 %v1686, %v1716
      %v1723 = vadd.f32 %v1687, %v1717
      %v1724 = vadd.f32 %v1688, %v1718
      %v1725 = vadd.f32 %v1689, %v1719
      %v1726 = vmul.f32 %v722, %v748
      %v1727 = vmul.f32 %v722, %v749
      %v1728 = vmul.f32 %v722, %v750
      %v1729 = vmul.f32 %v722, %v751
      %v1730 = vmul.f32 %v722, %v752
      %v1731 = vmul.f32 %v722, %v753
      %v1732 = vadd.f32 %v1696, %v1726
      %v1733 = vadd.f32 %v1697, %v1727
      %v1734 = vadd.f32 %v1698, %v1728
      %v1735 = vadd.f32 %v1699, %v1729
      %v1736 = vadd.f32 %v1700, %v1730
      %v1737 = vadd.f32 %v1701, %v1731
      %v1738 = vmul.f32 %v735, %v748
      %v1739 = vmul.f32 %v735, %v749
      %v1740 = vmul.f32 %v735, %v750
      %v1741 = vmul.f32 %v735, %v751
      %v1742 = vmul.f32 %v735, %v752
      %v1743 = vmul.f32 %v735, %v753
      %v1744 = vadd.f32 %v1708, %v1738
      %v1745 = vadd.f32 %v1709, %v1739
      %v1746 = vadd.f32 %v1710, %v1740
      %v1747 = vadd.f32 %v1711, %v1741
      %v1748 = vadd.f32 %v1712, %v1742
      %v1749 = vadd.f32 %v1713, %v1743
      %v1750 = vld [vmem:[%s612 + $0x2] sm:$0xff]
      %v1751 = vld [vmem:[%s612 + $0xa] sm:$0xff]
      %v1752 = vld [vmem:[%s612 + $0x12] sm:$0xff]
      %v1753 = vld [vmem:[%s612 + $0x1a] sm:$0xff]
      %v1754 = vld [vmem:[%s612 + $0x22] sm:$0xff]
      %v1755 = vld [vmem:[%s612 + $0x2a] sm:$0x7]
      %v1756 = vmul.f32 %v754, %v1750
      %v1757 = vmul.f32 %v754, %v1751
      %v1758 = vmul.f32 %v754, %v1752
      %v1759 = vmul.f32 %v754, %v1753
      %v1760 = vmul.f32 %v754, %v1754
      %v1761 = vmul.f32 %v754, %v1755
      %v1762 = vadd.f32 %v1720, %v1756
      %v1763 = vadd.f32 %v1721, %v1757
      %v1764 = vadd.f32 %v1722, %v1758
      %v1765 = vadd.f32 %v1723, %v1759
      %v1766 = vadd.f32 %v1724, %v1760
      %v1767 = vadd.f32 %v1725, %v1761
      %v1768 = vmul.f32 %v767, %v1750
      %v1769 = vmul.f32 %v767, %v1751
      %v1770 = vmul.f32 %v767, %v1752
      %v1771 = vmul.f32 %v767, %v1753
      %v1772 = vmul.f32 %v767, %v1754
      %v1773 = vmul.f32 %v767, %v1755
      %v1774 = vadd.f32 %v1732, %v1768
      %v1775 = vadd.f32 %v1733, %v1769
      %v1776 = vadd.f32 %v1734, %v1770
      %v1777 = vadd.f32 %v1735, %v1771
      %v1778 = vadd.f32 %v1736, %v1772
      %v1779 = vadd.f32 %v1737, %v1773
      %v1780 = vmul.f32 %v780, %v1750
      %v1781 = vmul.f32 %v780, %v1751
      %v1782 = vmul.f32 %v780, %v1752
      %v1783 = vmul.f32 %v780, %v1753
      %v1784 = vmul.f32 %v780, %v1754
      %v1785 = vmul.f32 %v780, %v1755
      %v1786 = vadd.f32 %v1744, %v1780
      %v1787 = vadd.f32 %v1745, %v1781
      %v1788 = vadd.f32 %v1746, %v1782
      %v1789 = vadd.f32 %v1747, %v1783
      %v1790 = vadd.f32 %v1748, %v1784
      %v1791 = vadd.f32 %v1749, %v1785
      %v1792 = vmul.f32 %v801, %v842
      %v1793 = vmul.f32 %v801, %v843
      %v1794 = vmul.f32 %v801, %v844
      %v1795 = vmul.f32 %v801, %v845
      %v1796 = vmul.f32 %v801, %v846
      %v1797 = vmul.f32 %v801, %v847
      %v1798 = vadd.f32 %v1762, %v1792
      %v1799 = vadd.f32 %v1763, %v1793
      %v1800 = vadd.f32 %v1764, %v1794
      %v1801 = vadd.f32 %v1765, %v1795
      %v1802 = vadd.f32 %v1766, %v1796
      %v1803 = vadd.f32 %v1767, %v1797
      %v1804 = vmul.f32 %v814, %v842
      %v1805 = vmul.f32 %v814, %v843
      %v1806 = vmul.f32 %v814, %v844
      %v1807 = vmul.f32 %v814, %v845
      %v1808 = vmul.f32 %v814, %v846
      %v1809 = vmul.f32 %v814, %v847
      %v1810 = vadd.f32 %v1774, %v1804
      %v1811 = vadd.f32 %v1775, %v1805
      %v1812 = vadd.f32 %v1776, %v1806
      %v1813 = vadd.f32 %v1777, %v1807
      %v1814 = vadd.f32 %v1778, %v1808
      %v1815 = vadd.f32 %v1779, %v1809
      %v1816 = vmul.f32 %v827, %v842
      %v1817 = vmul.f32 %v827, %v843
      %v1818 = vmul.f32 %v827, %v844
      %v1819 = vmul.f32 %v827, %v845
      %v1820 = vmul.f32 %v827, %v846
      %v1821 = vmul.f32 %v827, %v847
      %v1822 = vadd.f32 %v1786, %v1816
      %v1823 = vadd.f32 %v1787, %v1817
      %v1824 = vadd.f32 %v1788, %v1818
      %v1825 = vadd.f32 %v1789, %v1819
      %v1826 = vadd.f32 %v1790, %v1820
      %v1827 = vadd.f32 %v1791, %v1821
      %v1828 = vmul.f32 %v848, %v887
      %v1829 = vmul.f32 %v848, %v888
      %v1830 = vmul.f32 %v848, %v889
      %v1831 = vmul.f32 %v848, %v890
      %v1832 = vmul.f32 %v848, %v891
      %v1833 = vmul.f32 %v848, %v892
      %v1834 = vadd.f32 %v1798, %v1828
      %v1835 = vadd.f32 %v1799, %v1829
      %v1836 = vadd.f32 %v1800, %v1830
      %v1837 = vadd.f32 %v1801, %v1831
      %v1838 = vadd.f32 %v1802, %v1832
      %v1839 = vadd.f32 %v1803, %v1833
      %v1840 = vmul.f32 %v861, %v887
      %v1841 = vmul.f32 %v861, %v888
      %v1842 = vmul.f32 %v861, %v889
      %v1843 = vmul.f32 %v861, %v890
      %v1844 = vmul.f32 %v861, %v891
      %v1845 = vmul.f32 %v861, %v892
      %v1846 = vadd.f32 %v1810, %v1840
      %v1847 = vadd.f32 %v1811, %v1841
      %v1848 = vadd.f32 %v1812, %v1842
      %v1849 = vadd.f32 %v1813, %v1843
      %v1850 = vadd.f32 %v1814, %v1844
      %v1851 = vadd.f32 %v1815, %v1845
      %v1852 = vmul.f32 %v874, %v887
      %v1853 = vmul.f32 %v874, %v888
      %v1854 = vmul.f32 %v874, %v889
      %v1855 = vmul.f32 %v874, %v890
      %v1856 = vmul.f32 %v874, %v891
      %v1857 = vmul.f32 %v874, %v892
      %v1858 = vadd.f32 %v1822, %v1852
      %v1859 = vadd.f32 %v1823, %v1853
      %v1860 = vadd.f32 %v1824, %v1854
      %v1861 = vadd.f32 %v1825, %v1855
      %v1862 = vadd.f32 %v1826, %v1856
      %v1863 = vadd.f32 %v1827, %v1857
      %v1864 = vmul.f32 %v893, %v932
      %v1865 = vmul.f32 %v893, %v933
      %v1866 = vmul.f32 %v893, %v934
      %v1867 = vmul.f32 %v893, %v935
      %v1868 = vmul.f32 %v893, %v936
      %v1869 = vmul.f32 %v893, %v937
      %v1870 = vadd.f32 %v1834, %v1864
      %v1871 = vadd.f32 %v1835, %v1865
      %v1872 = vadd.f32 %v1836, %v1866
      %v1873 = vadd.f32 %v1837, %v1867
      %v1874 = vadd.f32 %v1838, %v1868
      %v1875 = vadd.f32 %v1839, %v1869
      %v1876 = vmul.f32 %v906, %v932
      %v1877 = vmul.f32 %v906, %v933
      %v1878 = vmul.f32 %v906, %v934
      %v1879 = vmul.f32 %v906, %v935
      %v1880 = vmul.f32 %v906, %v936
      %v1881 = vmul.f32 %v906, %v937
      %v1882 = vadd.f32 %v1846, %v1876
      %v1883 = vadd.f32 %v1847, %v1877
      %v1884 = vadd.f32 %v1848, %v1878
      %v1885 = vadd.f32 %v1849, %v1879
      %v1886 = vadd.f32 %v1850, %v1880
      %v1887 = vadd.f32 %v1851, %v1881
      %v1888 = vmul.f32 %v919, %v932
      %v1889 = vmul.f32 %v919, %v933
      %v1890 = vmul.f32 %v919, %v934
      %v1891 = vmul.f32 %v919, %v935
      %v1892 = vmul.f32 %v919, %v936
      %v1893 = vmul.f32 %v919, %v937
      %v1894 = vadd.f32 %v1858, %v1888
      %v1895 = vadd.f32 %v1859, %v1889
      %v1896 = vadd.f32 %v1860, %v1890
      %v1897 = vadd.f32 %v1861, %v1891
      %v1898 = vadd.f32 %v1862, %v1892
      %v1899 = vadd.f32 %v1863, %v1893
      %v1900 = vmul.f32 %v938, %v977
      %v1901 = vmul.f32 %v938, %v978
      %v1902 = vmul.f32 %v938, %v979
      %v1903 = vmul.f32 %v938, %v980
      %v1904 = vmul.f32 %v938, %v981
      %v1905 = vmul.f32 %v938, %v982
      %v1906 = vadd.f32 %v1870, %v1900
      %v1907 = vadd.f32 %v1871, %v1901
      %v1908 = vadd.f32 %v1872, %v1902
      %v1909 = vadd.f32 %v1873, %v1903
      %v1910 = vadd.f32 %v1874, %v1904
      %v1911 = vadd.f32 %v1875, %v1905
      %v1912 = vmul.f32 %v951, %v977
      %v1913 = vmul.f32 %v951, %v978
      %v1914 = vmul.f32 %v951, %v979
      %v1915 = vmul.f32 %v951, %v980
      %v1916 = vmul.f32 %v951, %v981
      %v1917 = vmul.f32 %v951, %v982
      %v1918 = vadd.f32 %v1882, %v1912
      %v1919 = vadd.f32 %v1883, %v1913
      %v1920 = vadd.f32 %v1884, %v1914
      %v1921 = vadd.f32 %v1885, %v1915
      %v1922 = vadd.f32 %v1886, %v1916
      %v1923 = vadd.f32 %v1887, %v1917
      %v1924 = vmul.f32 %v964, %v977
      %v1925 = vmul.f32 %v964, %v978
      %v1926 = vmul.f32 %v964, %v979
      %v1927 = vmul.f32 %v964, %v980
      %v1928 = vmul.f32 %v964, %v981
      %v1929 = vmul.f32 %v964, %v982
      %v1930 = vadd.f32 %v1894, %v1924
      %v1931 = vadd.f32 %v1895, %v1925
      %v1932 = vadd.f32 %v1896, %v1926
      %v1933 = vadd.f32 %v1897, %v1927
      %v1934 = vadd.f32 %v1898, %v1928
      %v1935 = vadd.f32 %v1899, %v1929
      %v1936 = vld [vmem:[%s841 + $0x2] sm:$0xff]
      %v1937 = vld [vmem:[%s841 + $0xa] sm:$0xff]
      %v1938 = vld [vmem:[%s841 + $0x12] sm:$0xff]
      %v1939 = vld [vmem:[%s841 + $0x1a] sm:$0xff]
      %v1940 = vld [vmem:[%s841 + $0x22] sm:$0xff]
      %v1941 = vld [vmem:[%s841 + $0x2a] sm:$0x7]
      %v1942 = vmul.f32 %v983, %v1936
      %v1943 = vmul.f32 %v983, %v1937
      %v1944 = vmul.f32 %v983, %v1938
      %v1945 = vmul.f32 %v983, %v1939
      %v1946 = vmul.f32 %v983, %v1940
      %v1947 = vmul.f32 %v983, %v1941
      %v1948 = vadd.f32 %v1906, %v1942
      %v1949 = vadd.f32 %v1907, %v1943
      %v1950 = vadd.f32 %v1908, %v1944
      %v1951 = vadd.f32 %v1909, %v1945
      %v1952 = vadd.f32 %v1910, %v1946
      %v1953 = vadd.f32 %v1911, %v1947
      %v1954 = vmul.f32 %v996, %v1936
      %v1955 = vmul.f32 %v996, %v1937
      %v1956 = vmul.f32 %v996, %v1938
      %v1957 = vmul.f32 %v996, %v1939
      %v1958 = vmul.f32 %v996, %v1940
      %v1959 = vmul.f32 %v996, %v1941
      %v1960 = vadd.f32 %v1918, %v1954
      %v1961 = vadd.f32 %v1919, %v1955
      %v1962 = vadd.f32 %v1920, %v1956
      %v1963 = vadd.f32 %v1921, %v1957
      %v1964 = vadd.f32 %v1922, %v1958
      %v1965 = vadd.f32 %v1923, %v1959
      %v1966 = vmul.f32 %v1009, %v1936
      %v1967 = vmul.f32 %v1009, %v1937
      %v1968 = vmul.f32 %v1009, %v1938
      %v1969 = vmul.f32 %v1009, %v1939
      %v1970 = vmul.f32 %v1009, %v1940
      %v1971 = vmul.f32 %v1009, %v1941
      %v1972 = vadd.f32 %v1930, %v1966
      %v1973 = vadd.f32 %v1931, %v1967
      %v1974 = vadd.f32 %v1932, %v1968
      %v1975 = vadd.f32 %v1933, %v1969
      %v1976 = vadd.f32 %v1934, %v1970
      %v1977 = vadd.f32 %v1935, %v1971
      %v1978 = vmul.f32 %v1031, %v1072
      %v1979 = vmul.f32 %v1031, %v1073
      %v1980 = vmul.f32 %v1031, %v1074
      %v1981 = vmul.f32 %v1031, %v1075
      %v1982 = vmul.f32 %v1031, %v1076
      %v1983 = vmul.f32 %v1031, %v1077
      %v1984 = vadd.f32 %v1948, %v1978
      %v1985 = vadd.f32 %v1949, %v1979
      %v1986 = vadd.f32 %v1950, %v1980
      %v1987 = vadd.f32 %v1951, %v1981
      %v1988 = vadd.f32 %v1952, %v1982
      %v1989 = vadd.f32 %v1953, %v1983
      %v1990 = vmul.f32 %v1044, %v1072
      %v1991 = vmul.f32 %v1044, %v1073
      %v1992 = vmul.f32 %v1044, %v1074
      %v1993 = vmul.f32 %v1044, %v1075
      %v1994 = vmul.f32 %v1044, %v1076
      %v1995 = vmul.f32 %v1044, %v1077
      %v1996 = vadd.f32 %v1960, %v1990
      %v1997 = vadd.f32 %v1961, %v1991
      %v1998 = vadd.f32 %v1962, %v1992
      %v1999 = vadd.f32 %v1963, %v1993
      %v2000 = vadd.f32 %v1964, %v1994
      %v2001 = vadd.f32 %v1965, %v1995
      %v2002 = vmul.f32 %v1057, %v1072
      %v2003 = vmul.f32 %v1057, %v1073
      %v2004 = vmul.f32 %v1057, %v1074
      %v2005 = vmul.f32 %v1057, %v1075
      %v2006 = vmul.f32 %v1057, %v1076
      %v2007 = vmul.f32 %v1057, %v1077
      %v2008 = vadd.f32 %v1972, %v2002
      %v2009 = vadd.f32 %v1973, %v2003
      %v2010 = vadd.f32 %v1974, %v2004
      %v2011 = vadd.f32 %v1975, %v2005
      %v2012 = vadd.f32 %v1976, %v2006
      %v2013 = vadd.f32 %v1977, %v2007
      %v2014 = vmul.f32 %v1078, %v1117
      %v2015 = vmul.f32 %v1078, %v1118
      %v2016 = vmul.f32 %v1078, %v1119
      %v2017 = vmul.f32 %v1078, %v1120
      %v2018 = vmul.f32 %v1078, %v1121
      %v2019 = vmul.f32 %v1078, %v1122
      %v2020 = vadd.f32 %v1984, %v2014
      %v2021 = vadd.f32 %v1985, %v2015
      %v2022 = vadd.f32 %v1986, %v2016
      %v2023 = vadd.f32 %v1987, %v2017
      %v2024 = vadd.f32 %v1988, %v2018
      %v2025 = vadd.f32 %v1989, %v2019
      %v2026 = vmul.f32 %v1091, %v1117
      %v2027 = vmul.f32 %v1091, %v1118
      %v2028 = vmul.f32 %v1091, %v1119
      %v2029 = vmul.f32 %v1091, %v1120
      %v2030 = vmul.f32 %v1091, %v1121
      %v2031 = vmul.f32 %v1091, %v1122
      %v2032 = vadd.f32 %v1996, %v2026
      %v2033 = vadd.f32 %v1997, %v2027
      %v2034 = vadd.f32 %v1998, %v2028
      %v2035 = vadd.f32 %v1999, %v2029
      %v2036 = vadd.f32 %v2000, %v2030
      %v2037 = vadd.f32 %v2001, %v2031
      %v2038 = vmul.f32 %v1104, %v1117
      %v2039 = vmul.f32 %v1104, %v1118
      %v2040 = vmul.f32 %v1104, %v1119
      %v2041 = vmul.f32 %v1104, %v1120
      %v2042 = vmul.f32 %v1104, %v1121
      %v2043 = vmul.f32 %v1104, %v1122
      %v2044 = vadd.f32 %v2008, %v2038
      %v2045 = vadd.f32 %v2009, %v2039
      %v2046 = vadd.f32 %v2010, %v2040
      %v2047 = vadd.f32 %v2011, %v2041
      %v2048 = vadd.f32 %v2012, %v2042
      %v2049 = vadd.f32 %v2013, %v2043
      %v2050 = vmul.f32 %v1123, %v1162
      %v2051 = vmul.f32 %v1123, %v1163
      %v2052 = vmul.f32 %v1123, %v1164
      %v2053 = vmul.f32 %v1123, %v1165
      %v2054 = vmul.f32 %v1123, %v1166
      %v2055 = vmul.f32 %v1123, %v1167
      %v2056 = vadd.f32 %v2020, %v2050
      %v2057 = vadd.f32 %v2021, %v2051
      %v2058 = vadd.f32 %v2022, %v2052
      %v2059 = vadd.f32 %v2023, %v2053
      %v2060 = vadd.f32 %v2024, %v2054
      %v2061 = vadd.f32 %v2025, %v2055
      %v2062 = vmul.f32 %v1136, %v1162
      %v2063 = vmul.f32 %v1136, %v1163
      %v2064 = vmul.f32 %v1136, %v1164
      %v2065 = vmul.f32 %v1136, %v1165
      %v2066 = vmul.f32 %v1136, %v1166
      %v2067 = vmul.f32 %v1136, %v1167
      %v2068 = vadd.f32 %v2032, %v2062
      %v2069 = vadd.f32 %v2033, %v2063
      %v2070 = vadd.f32 %v2034, %v2064
      %v2071 = vadd.f32 %v2035, %v2065
      %v2072 = vadd.f32 %v2036, %v2066
      %v2073 = vadd.f32 %v2037, %v2067
      %v2074 = vmul.f32 %v1149, %v1162
      %v2075 = vmul.f32 %v1149, %v1163
      %v2076 = vmul.f32 %v1149, %v1164
      %v2077 = vmul.f32 %v1149, %v1165
      %v2078 = vmul.f32 %v1149, %v1166
      %v2079 = vmul.f32 %v1149, %v1167
      %v2080 = vadd.f32 %v2044, %v2074
      %v2081 = vadd.f32 %v2045, %v2075
      %v2082 = vadd.f32 %v2046, %v2076
      %v2083 = vadd.f32 %v2047, %v2077
      %v2084 = vadd.f32 %v2048, %v2078
      %v2085 = vadd.f32 %v2049, %v2079
      %v2086 = vmul.f32 %v1168, %v1207
      %v2087 = vmul.f32 %v1168, %v1208
      %v2088 = vmul.f32 %v1168, %v1209
      %v2089 = vmul.f32 %v1168, %v1210
      %v2090 = vmul.f32 %v1168, %v1211
      %v2091 = vmul.f32 %v1168, %v1212
      %v2092 = vadd.f32 %v2056, %v2086
      %v2093 = vadd.f32 %v2057, %v2087
      %v2094 = vadd.f32 %v2058, %v2088
      %v2095 = vadd.f32 %v2059, %v2089
      %v2096 = vadd.f32 %v2060, %v2090
      %v2097 = vadd.f32 %v2061, %v2091
      %v2098 = vmul.f32 %v1181, %v1207
      %v2099 = vmul.f32 %v1181, %v1208
      %v2100 = vmul.f32 %v1181, %v1209
      %v2101 = vmul.f32 %v1181, %v1210
      %v2102 = vmul.f32 %v1181, %v1211
      %v2103 = vmul.f32 %v1181, %v1212
      %v2104 = vadd.f32 %v2068, %v2098
      %v2105 = vadd.f32 %v2069, %v2099
      %v2106 = vadd.f32 %v2070, %v2100
      %v2107 = vadd.f32 %v2071, %v2101
      %v2108 = vadd.f32 %v2072, %v2102
      %v2109 = vadd.f32 %v2073, %v2103
      %v2110 = vmul.f32 %v1194, %v1207
      %v2111 = vmul.f32 %v1194, %v1208
      %v2112 = vmul.f32 %v1194, %v1209
      %v2113 = vmul.f32 %v1194, %v1210
      %v2114 = vmul.f32 %v1194, %v1211
      %v2115 = vmul.f32 %v1194, %v1212
      %v2116 = vadd.f32 %v2080, %v2110
      %v2117 = vadd.f32 %v2081, %v2111
      %v2118 = vadd.f32 %v2082, %v2112
      %v2119 = vadd.f32 %v2083, %v2113
      %v2120 = vadd.f32 %v2084, %v2114
      %v2121 = vadd.f32 %v2085, %v2115
      %v2122 = vld [vmem:[%s1071 + $0x2] sm:$0xff]
      %v2123 = vld [vmem:[%s1071 + $0xa] sm:$0xff]
      %v2124 = vld [vmem:[%s1071 + $0x12] sm:$0xff]
      %v2125 = vld [vmem:[%s1071 + $0x1a] sm:$0xff]
      %v2126 = vld [vmem:[%s1071 + $0x22] sm:$0xff]
      %v2127 = vld [vmem:[%s1071 + $0x2a] sm:$0x7]
      %v2128 = vmul.f32 %v1213, %v2122
      %v2129 = vmul.f32 %v1213, %v2123
      %v2130 = vmul.f32 %v1213, %v2124
      %v2131 = vmul.f32 %v1213, %v2125
      %v2132 = vmul.f32 %v1213, %v2126
      %v2133 = vmul.f32 %v1213, %v2127
      %v2134 = vadd.f32 %v2092, %v2128
      %v2135 = vadd.f32 %v2093, %v2129
      %v2136 = vadd.f32 %v2094, %v2130
      %v2137 = vadd.f32 %v2095, %v2131
      %v2138 = vadd.f32 %v2096, %v2132
      %v2139 = vadd.f32 %v2097, %v2133
      %v2140 = vmul.f32 %v1226, %v2122
      %v2141 = vmul.f32 %v1226, %v2123
      %v2142 = vmul.f32 %v1226, %v2124
      %v2143 = vmul.f32 %v1226, %v2125
      %v2144 = vmul.f32 %v1226, %v2126
      %v2145 = vmul.f32 %v1226, %v2127
      %v2146 = vadd.f32 %v2104, %v2140
      %v2147 = vadd.f32 %v2105, %v2141
      %v2148 = vadd.f32 %v2106, %v2142
      %v2149 = vadd.f32 %v2107, %v2143
      %v2150 = vadd.f32 %v2108, %v2144
      %v2151 = vadd.f32 %v2109, %v2145
      %v2152 = vmul.f32 %v1239, %v2122
      %v2153 = vmul.f32 %v1239, %v2123
      %v2154 = vmul.f32 %v1239, %v2124
      %v2155 = vmul.f32 %v1239, %v2125
      %v2156 = vmul.f32 %v1239, %v2126
      %v2157 = vmul.f32 %v1239, %v2127
      %v2158 = vadd.f32 %v2116, %v2152
      %v2159 = vadd.f32 %v2117, %v2153
      %v2160 = vadd.f32 %v2118, %v2154
      %v2161 = vadd.f32 %v2119, %v2155
      %v2162 = vadd.f32 %v2120, %v2156
      %v2163 = vadd.f32 %v2121, %v2157
      %v2164 = vmax.f32 %v1220, %v2134
      %v2165 = vmax.f32 %v1221, %v2135
      %v2166 = vmax.f32 %v1222, %v2136
      %v2167 = vmax.f32 %v1223, %v2137
      %v2168 = vmax.f32 %v1224, %v2138
      %v2169 = vmax.f32 %v1225, %v2139
      %v2170 = vmax.f32 %v1233, %v2146
      %v2171 = vmax.f32 %v1234, %v2147
      %v2172 = vmax.f32 %v1235, %v2148
      %v2173 = vmax.f32 %v1236, %v2149
      %v2174 = vmax.f32 %v1237, %v2150
      %v2175 = vmax.f32 %v1238, %v2151
      %v2176 = vmax.f32 %v1246, %v2158
      %v2177 = vmax.f32 %v1247, %v2159
      %v2178 = vmax.f32 %v1248, %v2160
      %v2179 = vmax.f32 %v1249, %v2161
      %v2180 = vmax.f32 %v1250, %v2162
      %v2181 = vmax.f32 %v1251, %v2163
      %v2182 = vmul.f32 %v131, %v336
      %v2183 = vmul.f32 %v131, %v337
      %v2184 = vmul.f32 %v131, %v338
      %v2185 = vmul.f32 %v131, %v339
      %v2186 = vmul.f32 %v131, %v340
      %v2187 = vmul.f32 %v131, %v341
      %v2188 = vmul.f32 %v138, %v336
      %v2189 = vmul.f32 %v138, %v337
      %v2190 = vmul.f32 %v138, %v338
      %v2191 = vmul.f32 %v138, %v339
      %v2192 = vmul.f32 %v138, %v340
      %v2193 = vmul.f32 %v138, %v341
      %v2194 = vmul.f32 %v145, %v336
      %v2195 = vmul.f32 %v145, %v337
      %v2196 = vmul.f32 %v145, %v338
      %v2197 = vmul.f32 %v145, %v339
      %v2198 = vmul.f32 %v145, %v340
      %v2199 = vmul.f32 %v145, %v341
      %v2200 = vmul.f32 %v160, %v383
      %v2201 = vmul.f32 %v160, %v384
      %v2202 = vmul.f32 %v160, %v385
      %v2203 = vmul.f32 %v160, %v386
      %v2204 = vmul.f32 %v160, %v387
      %v2205 = vmul.f32 %v160, %v388
      %v2206 = vadd.f32 %v2182, %v2200
      %v2207 = vadd.f32 %v2183, %v2201
      %v2208 = vadd.f32 %v2184, %v2202
      %v2209 = vadd.f32 %v2185, %v2203
      %v2210 = vadd.f32 %v2186, %v2204
      %v2211 = vadd.f32 %v2187, %v2205
      %v2212 = vmul.f32 %v173, %v383
      %v2213 = vmul.f32 %v173, %v384
      %v2214 = vmul.f32 %v173, %v385
      %v2215 = vmul.f32 %v173, %v386
      %v2216 = vmul.f32 %v173, %v387
      %v2217 = vmul.f32 %v173, %v388
      %v2218 = vadd.f32 %v2188, %v2212
      %v2219 = vadd.f32 %v2189, %v2213
      %v2220 = vadd.f32 %v2190, %v2214
      %v2221 = vadd.f32 %v2191, %v2215
      %v2222 = vadd.f32 %v2192, %v2216
      %v2223 = vadd.f32 %v2193, %v2217
      %v2224 = vmul.f32 %v186, %v383
      %v2225 = vmul.f32 %v186, %v384
      %v2226 = vmul.f32 %v186, %v385
      %v2227 = vmul.f32 %v186, %v386
      %v2228 = vmul.f32 %v186, %v387
      %v2229 = vmul.f32 %v186, %v388
      %v2230 = vadd.f32 %v2194, %v2224
      %v2231 = vadd.f32 %v2195, %v2225
      %v2232 = vadd.f32 %v2196, %v2226
      %v2233 = vadd.f32 %v2197, %v2227
      %v2234 = vadd.f32 %v2198, %v2228
      %v2235 = vadd.f32 %v2199, %v2229
      %v2236 = vmul.f32 %v205, %v428
      %v2237 = vmul.f32 %v205, %v429
      %v2238 = vmul.f32 %v205, %v430
      %v2239 = vmul.f32 %v205, %v431
      %v2240 = vmul.f32 %v205, %v432
      %v2241 = vmul.f32 %v205, %v433
      %v2242 = vadd.f32 %v2206, %v2236
      %v2243 = vadd.f32 %v2207, %v2237
      %v2244 = vadd.f32 %v2208, %v2238
      %v2245 = vadd.f32 %v2209, %v2239
      %v2246 = vadd.f32 %v2210, %v2240
      %v2247 = vadd.f32 %v2211, %v2241
      %v2248 = vmul.f32 %v218, %v428
      %v2249 = vmul.f32 %v218, %v429
      %v2250 = vmul.f32 %v218, %v430
      %v2251 = vmul.f32 %v218, %v431
      %v2252 = vmul.f32 %v218, %v432
      %v2253 = vmul.f32 %v218, %v433
      %v2254 = vadd.f32 %v2218, %v2248
      %v2255 = vadd.f32 %v2219, %v2249
      %v2256 = vadd.f32 %v2220, %v2250
      %v2257 = vadd.f32 %v2221, %v2251
      %v2258 = vadd.f32 %v2222, %v2252
      %v2259 = vadd.f32 %v2223, %v2253
      %v2260 = vmul.f32 %v231, %v428
      %v2261 = vmul.f32 %v231, %v429
      %v2262 = vmul.f32 %v231, %v430
      %v2263 = vmul.f32 %v231, %v431
      %v2264 = vmul.f32 %v231, %v432
      %v2265 = vmul.f32 %v231, %v433
      %v2266 = vadd.f32 %v2230, %v2260
      %v2267 = vadd.f32 %v2231, %v2261
      %v2268 = vadd.f32 %v2232, %v2262
      %v2269 = vadd.f32 %v2233, %v2263
      %v2270 = vadd.f32 %v2234, %v2264
      %v2271 = vadd.f32 %v2235, %v2265
      %v2272 = vmul.f32 %v250, %v473
      %v2273 = vmul.f32 %v250, %v474
      %v2274 = vmul.f32 %v250, %v475
      %v2275 = vmul.f32 %v250, %v476
      %v2276 = vmul.f32 %v250, %v477
      %v2277 = vmul.f32 %v250, %v478
      %v2278 = vadd.f32 %v2242, %v2272
      %v2279 = vadd.f32 %v2243, %v2273
      %v2280 = vadd.f32 %v2244, %v2274
      %v2281 = vadd.f32 %v2245, %v2275
      %v2282 = vadd.f32 %v2246, %v2276
      %v2283 = vadd.f32 %v2247, %v2277
      %v2284 = vmul.f32 %v263, %v473
      %v2285 = vmul.f32 %v263, %v474
      %v2286 = vmul.f32 %v263, %v475
      %v2287 = vmul.f32 %v263, %v476
      %v2288 = vmul.f32 %v263, %v477
      %v2289 = vmul.f32 %v263, %v478
      %v2290 = vadd.f32 %v2254, %v2284
      %v2291 = vadd.f32 %v2255, %v2285
      %v2292 = vadd.f32 %v2256, %v2286
      %v2293 = vadd.f32 %v2257, %v2287
      %v2294 = vadd.f32 %v2258, %v2288
      %v2295 = vadd.f32 %v2259, %v2289
      %v2296 = vmul.f32 %v276, %v473
      %v2297 = vmul.f32 %v276, %v474
      %v2298 = vmul.f32 %v276, %v475
      %v2299 = vmul.f32 %v276, %v476
      %v2300 = vmul.f32 %v276, %v477
      %v2301 = vmul.f32 %v276, %v478
      %v2302 = vadd.f32 %v2266, %v2296
      %v2303 = vadd.f32 %v2267, %v2297
      %v2304 = vadd.f32 %v2268, %v2298
      %v2305 = vadd.f32 %v2269, %v2299
      %v2306 = vadd.f32 %v2270, %v2300
      %v2307 = vadd.f32 %v2271, %v2301
      %v2308 = vmul.f32 %v295, %v518
      %v2309 = vmul.f32 %v295, %v519
      %v2310 = vmul.f32 %v295, %v520
      %v2311 = vmul.f32 %v295, %v521
      %v2312 = vmul.f32 %v295, %v522
      %v2313 = vmul.f32 %v295, %v523
      %v2314 = vadd.f32 %v2278, %v2308
      %v2315 = vadd.f32 %v2279, %v2309
      %v2316 = vadd.f32 %v2280, %v2310
      %v2317 = vadd.f32 %v2281, %v2311
      %v2318 = vadd.f32 %v2282, %v2312
      %v2319 = vadd.f32 %v2283, %v2313
      %v2320 = vmul.f32 %v308, %v518
      %v2321 = vmul.f32 %v308, %v519
      %v2322 = vmul.f32 %v308, %v520
      %v2323 = vmul.f32 %v308, %v521
      %v2324 = vmul.f32 %v308, %v522
      %v2325 = vmul.f32 %v308, %v523
      %v2326 = vadd.f32 %v2290, %v2320
      %v2327 = vadd.f32 %v2291, %v2321
      %v2328 = vadd.f32 %v2292, %v2322
      %v2329 = vadd.f32 %v2293, %v2323
      %v2330 = vadd.f32 %v2294, %v2324
      %v2331 = vadd.f32 %v2295, %v2325
      %v2332 = vmul.f32 %v321, %v518
      %v2333 = vmul.f32 %v321, %v519
      %v2334 = vmul.f32 %v321, %v520
      %v2335 = vmul.f32 %v321, %v521
      %v2336 = vmul.f32 %v321, %v522
      %v2337 = vmul.f32 %v321, %v523
      %v2338 = vadd.f32 %v2302, %v2332
      %v2339 = vadd.f32 %v2303, %v2333
      %v2340 = vadd.f32 %v2304, %v2334
      %v2341 = vadd.f32 %v2305, %v2335
      %v2342 = vadd.f32 %v2306, %v2336
      %v2343 = vadd.f32 %v2307, %v2337
      %v2344 = vmul.f32 %v342, %v566
      %v2345 = vmul.f32 %v342, %v567
      %v2346 = vmul.f32 %v342, %v568
      %v2347 = vmul.f32 %v342, %v569
      %v2348 = vmul.f32 %v342, %v570
      %v2349 = vmul.f32 %v342, %v571
      %v2350 = vadd.f32 %v2314, %v2344
      %v2351 = vadd.f32 %v2315, %v2345
      %v2352 = vadd.f32 %v2316, %v2346
      %v2353 = vadd.f32 %v2317, %v2347
      %v2354 = vadd.f32 %v2318, %v2348
      %v2355 = vadd.f32 %v2319, %v2349
      %v2356 = vmul.f32 %v355, %v566
      %v2357 = vmul.f32 %v355, %v567
      %v2358 = vmul.f32 %v355, %v568
      %v2359 = vmul.f32 %v355, %v569
      %v2360 = vmul.f32 %v355, %v570
      %v2361 = vmul.f32 %v355, %v571
      %v2362 = vadd.f32 %v2326, %v2356
      %v2363 = vadd.f32 %v2327, %v2357
      %v2364 = vadd.f32 %v2328, %v2358
      %v2365 = vadd.f32 %v2329, %v2359
      %v2366 = vadd.f32 %v2330, %v2360
      %v2367 = vadd.f32 %v2331, %v2361
      %v2368 = vmul.f32 %v368, %v566
      %v2369 = vmul.f32 %v368, %v567
      %v2370 = vmul.f32 %v368, %v568
      %v2371 = vmul.f32 %v368, %v569
      %v2372 = vmul.f32 %v368, %v570
      %v2373 = vmul.f32 %v368, %v571
      %v2374 = vadd.f32 %v2338, %v2368
      %v2375 = vadd.f32 %v2339, %v2369
      %v2376 = vadd.f32 %v2340, %v2370
      %v2377 = vadd.f32 %v2341, %v2371
      %v2378 = vadd.f32 %v2342, %v2372
      %v2379 = vadd.f32 %v2343, %v2373
      %v2380 = vmul.f32 %v389, %v613
      %v2381 = vmul.f32 %v389, %v614
      %v2382 = vmul.f32 %v389, %v615
      %v2383 = vmul.f32 %v389, %v616
      %v2384 = vmul.f32 %v389, %v617
      %v2385 = vmul.f32 %v389, %v618
      %v2386 = vadd.f32 %v2350, %v2380
      %v2387 = vadd.f32 %v2351, %v2381
      %v2388 = vadd.f32 %v2352, %v2382
      %v2389 = vadd.f32 %v2353, %v2383
      %v2390 = vadd.f32 %v2354, %v2384
      %v2391 = vadd.f32 %v2355, %v2385
      %v2392 = vmul.f32 %v402, %v613
      %v2393 = vmul.f32 %v402, %v614
      %v2394 = vmul.f32 %v402, %v615
      %v2395 = vmul.f32 %v402, %v616
      %v2396 = vmul.f32 %v402, %v617
      %v2397 = vmul.f32 %v402, %v618
      %v2398 = vadd.f32 %v2362, %v2392
      %v2399 = vadd.f32 %v2363, %v2393
      %v2400 = vadd.f32 %v2364, %v2394
      %v2401 = vadd.f32 %v2365, %v2395
      %v2402 = vadd.f32 %v2366, %v2396
      %v2403 = vadd.f32 %v2367, %v2397
      %v2404 = vmul.f32 %v415, %v613
      %v2405 = vmul.f32 %v415, %v614
      %v2406 = vmul.f32 %v415, %v615
      %v2407 = vmul.f32 %v415, %v616
      %v2408 = vmul.f32 %v415, %v617
      %v2409 = vmul.f32 %v415, %v618
      %v2410 = vadd.f32 %v2374, %v2404
      %v2411 = vadd.f32 %v2375, %v2405
      %v2412 = vadd.f32 %v2376, %v2406
      %v2413 = vadd.f32 %v2377, %v2407
      %v2414 = vadd.f32 %v2378, %v2408
      %v2415 = vadd.f32 %v2379, %v2409
      %v2416 = vmul.f32 %v434, %v658
      %v2417 = vmul.f32 %v434, %v659
      %v2418 = vmul.f32 %v434, %v660
      %v2419 = vmul.f32 %v434, %v661
      %v2420 = vmul.f32 %v434, %v662
      %v2421 = vmul.f32 %v434, %v663
      %v2422 = vadd.f32 %v2386, %v2416
      %v2423 = vadd.f32 %v2387, %v2417
      %v2424 = vadd.f32 %v2388, %v2418
      %v2425 = vadd.f32 %v2389, %v2419
      %v2426 = vadd.f32 %v2390, %v2420
      %v2427 = vadd.f32 %v2391, %v2421
      %v2428 = vmul.f32 %v447, %v658
      %v2429 = vmul.f32 %v447, %v659
      %v2430 = vmul.f32 %v447, %v660
      %v2431 = vmul.f32 %v447, %v661
      %v2432 = vmul.f32 %v447, %v662
      %v2433 = vmul.f32 %v447, %v663
      %v2434 = vadd.f32 %v2398, %v2428
      %v2435 = vadd.f32 %v2399, %v2429
      %v2436 = vadd.f32 %v2400, %v2430
      %v2437 = vadd.f32 %v2401, %v2431
      %v2438 = vadd.f32 %v2402, %v2432
      %v2439 = vadd.f32 %v2403, %v2433
      %v2440 = vmul.f32 %v460, %v658
      %v2441 = vmul.f32 %v460, %v659
      %v2442 = vmul.f32 %v460, %v660
      %v2443 = vmul.f32 %v460, %v661
      %v2444 = vmul.f32 %v460, %v662
      %v2445 = vmul.f32 %v460, %v663
      %v2446 = vadd.f32 %v2410, %v2440
      %v2447 = vadd.f32 %v2411, %v2441
      %v2448 = vadd.f32 %v2412, %v2442
      %v2449 = vadd.f32 %v2413, %v2443
      %v2450 = vadd.f32 %v2414, %v2444
      %v2451 = vadd.f32 %v2415, %v2445
      %v2452 = vmul.f32 %v479, %v703
      %v2453 = vmul.f32 %v479, %v704
      %v2454 = vmul.f32 %v479, %v705
      %v2455 = vmul.f32 %v479, %v706
      %v2456 = vmul.f32 %v479, %v707
      %v2457 = vmul.f32 %v479, %v708
      %v2458 = vadd.f32 %v2422, %v2452
      %v2459 = vadd.f32 %v2423, %v2453
      %v2460 = vadd.f32 %v2424, %v2454
      %v2461 = vadd.f32 %v2425, %v2455
      %v2462 = vadd.f32 %v2426, %v2456
      %v2463 = vadd.f32 %v2427, %v2457
      %v2464 = vmul.f32 %v492, %v703
      %v2465 = vmul.f32 %v492, %v704
      %v2466 = vmul.f32 %v492, %v705
      %v2467 = vmul.f32 %v492, %v706
      %v2468 = vmul.f32 %v492, %v707
      %v2469 = vmul.f32 %v492, %v708
      %v2470 = vadd.f32 %v2434, %v2464
      %v2471 = vadd.f32 %v2435, %v2465
      %v2472 = vadd.f32 %v2436, %v2466
      %v2473 = vadd.f32 %v2437, %v2467
      %v2474 = vadd.f32 %v2438, %v2468
      %v2475 = vadd.f32 %v2439, %v2469
      %v2476 = vmul.f32 %v505, %v703
      %v2477 = vmul.f32 %v505, %v704
      %v2478 = vmul.f32 %v505, %v705
      %v2479 = vmul.f32 %v505, %v706
      %v2480 = vmul.f32 %v505, %v707
      %v2481 = vmul.f32 %v505, %v708
      %v2482 = vadd.f32 %v2446, %v2476
      %v2483 = vadd.f32 %v2447, %v2477
      %v2484 = vadd.f32 %v2448, %v2478
      %v2485 = vadd.f32 %v2449, %v2479
      %v2486 = vadd.f32 %v2450, %v2480
      %v2487 = vadd.f32 %v2451, %v2481
      %v2488 = vmul.f32 %v524, %v748
      %v2489 = vmul.f32 %v524, %v749
      %v2490 = vmul.f32 %v524, %v750
      %v2491 = vmul.f32 %v524, %v751
      %v2492 = vmul.f32 %v524, %v752
      %v2493 = vmul.f32 %v524, %v753
      %v2494 = vadd.f32 %v2458, %v2488
      %v2495 = vadd.f32 %v2459, %v2489
      %v2496 = vadd.f32 %v2460, %v2490
      %v2497 = vadd.f32 %v2461, %v2491
      %v2498 = vadd.f32 %v2462, %v2492
      %v2499 = vadd.f32 %v2463, %v2493
      %v2500 = vmul.f32 %v537, %v748
      %v2501 = vmul.f32 %v537, %v749
      %v2502 = vmul.f32 %v537, %v750
      %v2503 = vmul.f32 %v537, %v751
      %v2504 = vmul.f32 %v537, %v752
      %v2505 = vmul.f32 %v537, %v753
      %v2506 = vadd.f32 %v2470, %v2500
      %v2507 = vadd.f32 %v2471, %v2501
      %v2508 = vadd.f32 %v2472, %v2502
      %v2509 = vadd.f32 %v2473, %v2503
      %v2510 = vadd.f32 %v2474, %v2504
      %v2511 = vadd.f32 %v2475, %v2505
      %v2512 = vmul.f32 %v550, %v748
      %v2513 = vmul.f32 %v550, %v749
      %v2514 = vmul.f32 %v550, %v750
      %v2515 = vmul.f32 %v550, %v751
      %v2516 = vmul.f32 %v550, %v752
      %v2517 = vmul.f32 %v550, %v753
      %v2518 = vadd.f32 %v2482, %v2512
      %v2519 = vadd.f32 %v2483, %v2513
      %v2520 = vadd.f32 %v2484, %v2514
      %v2521 = vadd.f32 %v2485, %v2515
      %v2522 = vadd.f32 %v2486, %v2516
      %v2523 = vadd.f32 %v2487, %v2517
      %v2524 = vmul.f32 %v572, %v795
      %v2525 = vmul.f32 %v572, %v796
      %v2526 = vmul.f32 %v572, %v797
      %v2527 = vmul.f32 %v572, %v798
      %v2528 = vmul.f32 %v572, %v799
      %v2529 = vmul.f32 %v572, %v800
      %v2530 = vadd.f32 %v2494, %v2524
      %v2531 = vadd.f32 %v2495, %v2525
      %v2532 = vadd.f32 %v2496, %v2526
      %v2533 = vadd.f32 %v2497, %v2527
      %v2534 = vadd.f32 %v2498, %v2528
      %v2535 = vadd.f32 %v2499, %v2529
      %v2536 = vmul.f32 %v585, %v795
      %v2537 = vmul.f32 %v585, %v796
      %v2538 = vmul.f32 %v585, %v797
      %v2539 = vmul.f32 %v585, %v798
      %v2540 = vmul.f32 %v585, %v799
      %v2541 = vmul.f32 %v585, %v800
      %v2542 = vadd.f32 %v2506, %v2536
      %v2543 = vadd.f32 %v2507, %v2537
      %v2544 = vadd.f32 %v2508, %v2538
      %v2545 = vadd.f32 %v2509, %v2539
      %v2546 = vadd.f32 %v2510, %v2540
      %v2547 = vadd.f32 %v2511, %v2541
      %v2548 = vmul.f32 %v598, %v795
      %v2549 = vmul.f32 %v598, %v796
      %v2550 = vmul.f32 %v598, %v797
      %v2551 = vmul.f32 %v598, %v798
      %v2552 = vmul.f32 %v598, %v799
      %v2553 = vmul.f32 %v598, %v800
      %v2554 = vadd.f32 %v2518, %v2548
      %v2555 = vadd.f32 %v2519, %v2549
      %v2556 = vadd.f32 %v2520, %v2550
      %v2557 = vadd.f32 %v2521, %v2551
      %v2558 = vadd.f32 %v2522, %v2552
      %v2559 = vadd.f32 %v2523, %v2553
      %v2560 = vmul.f32 %v619, %v842
      %v2561 = vmul.f32 %v619, %v843
      %v2562 = vmul.f32 %v619, %v844
      %v2563 = vmul.f32 %v619, %v845
      %v2564 = vmul.f32 %v619, %v846
      %v2565 = vmul.f32 %v619, %v847
      %v2566 = vadd.f32 %v2530, %v2560
      %v2567 = vadd.f32 %v2531, %v2561
      %v2568 = vadd.f32 %v2532, %v2562
      %v2569 = vadd.f32 %v2533, %v2563
      %v2570 = vadd.f32 %v2534, %v2564
      %v2571 = vadd.f32 %v2535, %v2565
      %v2572 = vmul.f32 %v632, %v842
      %v2573 = vmul.f32 %v632, %v843
      %v2574 = vmul.f32 %v632, %v844
      %v2575 = vmul.f32 %v632, %v845
      %v2576 = vmul.f32 %v632, %v846
      %v2577 = vmul.f32 %v632, %v847
      %v2578 = vadd.f32 %v2542, %v2572
      %v2579 = vadd.f32 %v2543, %v2573
      %v2580 = vadd.f32 %v2544, %v2574
      %v2581 = vadd.f32 %v2545, %v2575
      %v2582 = vadd.f32 %v2546, %v2576
      %v2583 = vadd.f32 %v2547, %v2577
      %v2584 = vmul.f32 %v645, %v842
      %v2585 = vmul.f32 %v645, %v843
      %v2586 = vmul.f32 %v645, %v844
      %v2587 = vmul.f32 %v645, %v845
      %v2588 = vmul.f32 %v645, %v846
      %v2589 = vmul.f32 %v645, %v847
      %v2590 = vadd.f32 %v2554, %v2584
      %v2591 = vadd.f32 %v2555, %v2585
      %v2592 = vadd.f32 %v2556, %v2586
      %v2593 = vadd.f32 %v2557, %v2587
      %v2594 = vadd.f32 %v2558, %v2588
      %v2595 = vadd.f32 %v2559, %v2589
      %v2596 = vmul.f32 %v664, %v887
      %v2597 = vmul.f32 %v664, %v888
      %v2598 = vmul.f32 %v664, %v889
      %v2599 = vmul.f32 %v664, %v890
      %v2600 = vmul.f32 %v664, %v891
      %v2601 = vmul.f32 %v664, %v892
      %v2602 = vadd.f32 %v2566, %v2596
      %v2603 = vadd.f32 %v2567, %v2597
      %v2604 = vadd.f32 %v2568, %v2598
      %v2605 = vadd.f32 %v2569, %v2599
      %v2606 = vadd.f32 %v2570, %v2600
      %v2607 = vadd.f32 %v2571, %v2601
      %v2608 = vmul.f32 %v677, %v887
      %v2609 = vmul.f32 %v677, %v888
      %v2610 = vmul.f32 %v677, %v889
      %v2611 = vmul.f32 %v677, %v890
      %v2612 = vmul.f32 %v677, %v891
      %v2613 = vmul.f32 %v677, %v892
      %v2614 = vadd.f32 %v2578, %v2608
      %v2615 = vadd.f32 %v2579, %v2609
      %v2616 = vadd.f32 %v2580, %v2610
      %v2617 = vadd.f32 %v2581, %v2611
      %v2618 = vadd.f32 %v2582, %v2612
      %v2619 = vadd.f32 %v2583, %v2613
      %v2620 = vmul.f32 %v690, %v887
      %v2621 = vmul.f32 %v690, %v888
      %v2622 = vmul.f32 %v690, %v889
      %v2623 = vmul.f32 %v690, %v890
      %v2624 = vmul.f32 %v690, %v891
      %v2625 = vmul.f32 %v690, %v892
      %v2626 = vadd.f32 %v2590, %v2620
      %v2627 = vadd.f32 %v2591, %v2621
      %v2628 = vadd.f32 %v2592, %v2622
      %v2629 = vadd.f32 %v2593, %v2623
      %v2630 = vadd.f32 %v2594, %v2624
      %v2631 = vadd.f32 %v2595, %v2625
      %v2632 = vmul.f32 %v709, %v932
      %v2633 = vmul.f32 %v709, %v933
      %v2634 = vmul.f32 %v709, %v934
      %v2635 = vmul.f32 %v709, %v935
      %v2636 = vmul.f32 %v709, %v936
      %v2637 = vmul.f32 %v709, %v937
      %v2638 = vadd.f32 %v2602, %v2632
      %v2639 = vadd.f32 %v2603, %v2633
      %v2640 = vadd.f32 %v2604, %v2634
      %v2641 = vadd.f32 %v2605, %v2635
      %v2642 = vadd.f32 %v2606, %v2636
      %v2643 = vadd.f32 %v2607, %v2637
      %v2644 = vmul.f32 %v722, %v932
      %v2645 = vmul.f32 %v722, %v933
      %v2646 = vmul.f32 %v722, %v934
      %v2647 = vmul.f32 %v722, %v935
      %v2648 = vmul.f32 %v722, %v936
      %v2649 = vmul.f32 %v722, %v937
      %v2650 = vadd.f32 %v2614, %v2644
      %v2651 = vadd.f32 %v2615, %v2645
      %v2652 = vadd.f32 %v2616, %v2646
      %v2653 = vadd.f32 %v2617, %v2647
      %v2654 = vadd.f32 %v2618, %v2648
      %v2655 = vadd.f32 %v2619, %v2649
      %v2656 = vmul.f32 %v735, %v932
      %v2657 = vmul.f32 %v735, %v933
      %v2658 = vmul.f32 %v735, %v934
      %v2659 = vmul.f32 %v735, %v935
      %v2660 = vmul.f32 %v735, %v936
      %v2661 = vmul.f32 %v735, %v937
      %v2662 = vadd.f32 %v2626, %v2656
      %v2663 = vadd.f32 %v2627, %v2657
      %v2664 = vadd.f32 %v2628, %v2658
      %v2665 = vadd.f32 %v2629, %v2659
      %v2666 = vadd.f32 %v2630, %v2660
      %v2667 = vadd.f32 %v2631, %v2661
      %v2668 = vmul.f32 %v754, %v977
      %v2669 = vmul.f32 %v754, %v978
      %v2670 = vmul.f32 %v754, %v979
      %v2671 = vmul.f32 %v754, %v980
      %v2672 = vmul.f32 %v754, %v981
      %v2673 = vmul.f32 %v754, %v982
      %v2674 = vadd.f32 %v2638, %v2668
      %v2675 = vadd.f32 %v2639, %v2669
      %v2676 = vadd.f32 %v2640, %v2670
      %v2677 = vadd.f32 %v2641, %v2671
      %v2678 = vadd.f32 %v2642, %v2672
      %v2679 = vadd.f32 %v2643, %v2673
      %v2680 = vmul.f32 %v767, %v977
      %v2681 = vmul.f32 %v767, %v978
      %v2682 = vmul.f32 %v767, %v979
      %v2683 = vmul.f32 %v767, %v980
      %v2684 = vmul.f32 %v767, %v981
      %v2685 = vmul.f32 %v767, %v982
      %v2686 = vadd.f32 %v2650, %v2680
      %v2687 = vadd.f32 %v2651, %v2681
      %v2688 = vadd.f32 %v2652, %v2682
      %v2689 = vadd.f32 %v2653, %v2683
      %v2690 = vadd.f32 %v2654, %v2684
      %v2691 = vadd.f32 %v2655, %v2685
      %v2692 = vmul.f32 %v780, %v977
      %v2693 = vmul.f32 %v780, %v978
      %v2694 = vmul.f32 %v780, %v979
      %v2695 = vmul.f32 %v780, %v980
      %v2696 = vmul.f32 %v780, %v981
      %v2697 = vmul.f32 %v780, %v982
      %v2698 = vadd.f32 %v2662, %v2692
      %v2699 = vadd.f32 %v2663, %v2693
      %v2700 = vadd.f32 %v2664, %v2694
      %v2701 = vadd.f32 %v2665, %v2695
      %v2702 = vadd.f32 %v2666, %v2696
      %v2703 = vadd.f32 %v2667, %v2697
      %v2704 = vmul.f32 %v801, %v1025
      %v2705 = vmul.f32 %v801, %v1026
      %v2706 = vmul.f32 %v801, %v1027
      %v2707 = vmul.f32 %v801, %v1028
      %v2708 = vmul.f32 %v801, %v1029
      %v2709 = vmul.f32 %v801, %v1030
      %v2710 = vadd.f32 %v2674, %v2704
      %v2711 = vadd.f32 %v2675, %v2705
      %v2712 = vadd.f32 %v2676, %v2706
      %v2713 = vadd.f32 %v2677, %v2707
      %v2714 = vadd.f32 %v2678, %v2708
      %v2715 = vadd.f32 %v2679, %v2709
      %v2716 = vmul.f32 %v814, %v1025
      %v2717 = vmul.f32 %v814, %v1026
      %v2718 = vmul.f32 %v814, %v1027
      %v2719 = vmul.f32 %v814, %v1028
      %v2720 = vmul.f32 %v814, %v1029
      %v2721 = vmul.f32 %v814, %v1030
      %v2722 = vadd.f32 %v2686, %v2716
      %v2723 = vadd.f32 %v2687, %v2717
      %v2724 = vadd.f32 %v2688, %v2718
      %v2725 = vadd.f32 %v2689, %v2719
      %v2726 = vadd.f32 %v2690, %v2720
      %v2727 = vadd.f32 %v2691, %v2721
      %v2728 = vmul.f32 %v827, %v1025
      %v2729 = vmul.f32 %v827, %v1026
      %v2730 = vmul.f32 %v827, %v1027
      %v2731 = vmul.f32 %v827, %v1028
      %v2732 = vmul.f32 %v827, %v1029
      %v2733 = vmul.f32 %v827, %v1030
      %v2734 = vadd.f32 %v2698, %v2728
      %v2735 = vadd.f32 %v2699, %v2729
      %v2736 = vadd.f32 %v2700, %v2730
      %v2737 = vadd.f32 %v2701, %v2731
      %v2738 = vadd.f32 %v2702, %v2732
      %v2739 = vadd.f32 %v2703, %v2733
      %v2740 = vmul.f32 %v848, %v1072
      %v2741 = vmul.f32 %v848, %v1073
      %v2742 = vmul.f32 %v848, %v1074
      %v2743 = vmul.f32 %v848, %v1075
      %v2744 = vmul.f32 %v848, %v1076
      %v2745 = vmul.f32 %v848, %v1077
      %v2746 = vadd.f32 %v2710, %v2740
      %v2747 = vadd.f32 %v2711, %v2741
      %v2748 = vadd.f32 %v2712, %v2742
      %v2749 = vadd.f32 %v2713, %v2743
      %v2750 = vadd.f32 %v2714, %v2744
      %v2751 = vadd.f32 %v2715, %v2745
      %v2752 = vmul.f32 %v861, %v1072
      %v2753 = vmul.f32 %v861, %v1073
      %v2754 = vmul.f32 %v861, %v1074
      %v2755 = vmul.f32 %v861, %v1075
      %v2756 = vmul.f32 %v861, %v1076
      %v2757 = vmul.f32 %v861, %v1077
      %v2758 = vadd.f32 %v2722, %v2752
      %v2759 = vadd.f32 %v2723, %v2753
      %v2760 = vadd.f32 %v2724, %v2754
      %v2761 = vadd.f32 %v2725, %v2755
      %v2762 = vadd.f32 %v2726, %v2756
      %v2763 = vadd.f32 %v2727, %v2757
      %v2764 = vmul.f32 %v874, %v1072
      %v2765 = vmul.f32 %v874, %v1073
      %v2766 = vmul.f32 %v874, %v1074
      %v2767 = vmul.f32 %v874, %v1075
      %v2768 = vmul.f32 %v874, %v1076
      %v2769 = vmul.f32 %v874, %v1077
      %v2770 = vadd.f32 %v2734, %v2764
      %v2771 = vadd.f32 %v2735, %v2765
      %v2772 = vadd.f32 %v2736, %v2766
      %v2773 = vadd.f32 %v2737, %v2767
      %v2774 = vadd.f32 %v2738, %v2768
      %v2775 = vadd.f32 %v2739, %v2769
      %v2776 = vmul.f32 %v893, %v1117
      %v2777 = vmul.f32 %v893, %v1118
      %v2778 = vmul.f32 %v893, %v1119
      %v2779 = vmul.f32 %v893, %v1120
      %v2780 = vmul.f32 %v893, %v1121
      %v2781 = vmul.f32 %v893, %v1122
      %v2782 = vadd.f32 %v2746, %v2776
      %v2783 = vadd.f32 %v2747, %v2777
      %v2784 = vadd.f32 %v2748, %v2778
      %v2785 = vadd.f32 %v2749, %v2779
      %v2786 = vadd.f32 %v2750, %v2780
      %v2787 = vadd.f32 %v2751, %v2781
      %v2788 = vmul.f32 %v906, %v1117
      %v2789 = vmul.f32 %v906, %v1118
      %v2790 = vmul.f32 %v906, %v1119
      %v2791 = vmul.f32 %v906, %v1120
      %v2792 = vmul.f32 %v906, %v1121
      %v2793 = vmul.f32 %v906, %v1122
      %v2794 = vadd.f32 %v2758, %v2788
      %v2795 = vadd.f32 %v2759, %v2789
      %v2796 = vadd.f32 %v2760, %v2790
      %v2797 = vadd.f32 %v2761, %v2791
      %v2798 = vadd.f32 %v2762, %v2792
      %v2799 = vadd.f32 %v2763, %v2793
      %v2800 = vmul.f32 %v919, %v1117
      %v2801 = vmul.f32 %v919, %v1118
      %v2802 = vmul.f32 %v919, %v1119
      %v2803 = vmul.f32 %v919, %v1120
      %v2804 = vmul.f32 %v919, %v1121
      %v2805 = vmul.f32 %v919, %v1122
      %v2806 = vadd.f32 %v2770, %v2800
      %v2807 = vadd.f32 %v2771, %v2801
      %v2808 = vadd.f32 %v2772, %v2802
      %v2809 = vadd.f32 %v2773, %v2803
      %v2810 = vadd.f32 %v2774, %v2804
      %v2811 = vadd.f32 %v2775, %v2805
      %v2812 = vmul.f32 %v938, %v1162
      %v2813 = vmul.f32 %v938, %v1163
      %v2814 = vmul.f32 %v938, %v1164
      %v2815 = vmul.f32 %v938, %v1165
      %v2816 = vmul.f32 %v938, %v1166
      %v2817 = vmul.f32 %v938, %v1167
      %v2818 = vadd.f32 %v2782, %v2812
      %v2819 = vadd.f32 %v2783, %v2813
      %v2820 = vadd.f32 %v2784, %v2814
      %v2821 = vadd.f32 %v2785, %v2815
      %v2822 = vadd.f32 %v2786, %v2816
      %v2823 = vadd.f32 %v2787, %v2817
      %v2824 = vmul.f32 %v951, %v1162
      %v2825 = vmul.f32 %v951, %v1163
      %v2826 = vmul.f32 %v951, %v1164
      %v2827 = vmul.f32 %v951, %v1165
      %v2828 = vmul.f32 %v951, %v1166
      %v2829 = vmul.f32 %v951, %v1167
      %v2830 = vadd.f32 %v2794, %v2824
      %v2831 = vadd.f32 %v2795, %v2825
      %v2832 = vadd.f32 %v2796, %v2826
      %v2833 = vadd.f32 %v2797, %v2827
      %v2834 = vadd.f32 %v2798, %v2828
      %v2835 = vadd.f32 %v2799, %v2829
      %v2836 = vmul.f32 %v964, %v1162
      %v2837 = vmul.f32 %v964, %v1163
      %v2838 = vmul.f32 %v964, %v1164
      %v2839 = vmul.f32 %v964, %v1165
      %v2840 = vmul.f32 %v964, %v1166
      %v2841 = vmul.f32 %v964, %v1167
      %v2842 = vadd.f32 %v2806, %v2836
      %v2843 = vadd.f32 %v2807, %v2837
      %v2844 = vadd.f32 %v2808, %v2838
      %v2845 = vadd.f32 %v2809, %v2839
      %v2846 = vadd.f32 %v2810, %v2840
      %v2847 = vadd.f32 %v2811, %v2841
      %v2848 = vmul.f32 %v983, %v1207
      %v2849 = vmul.f32 %v983, %v1208
      %v2850 = vmul.f32 %v983, %v1209
      %v2851 = vmul.f32 %v983, %v1210
      %v2852 = vmul.f32 %v983, %v1211
      %v2853 = vmul.f32 %v983, %v1212
      %v2854 = vadd.f32 %v2818, %v2848
      %v2855 = vadd.f32 %v2819, %v2849
      %v2856 = vadd.f32 %v2820, %v2850
      %v2857 = vadd.f32 %v2821, %v2851
      %v2858 = vadd.f32 %v2822, %v2852
      %v2859 = vadd.f32 %v2823, %v2853
      %v2860 = vmul.f32 %v996, %v1207
      %v2861 = vmul.f32 %v996, %v1208
      %v2862 = vmul.f32 %v996, %v1209
      %v2863 = vmul.f32 %v996, %v1210
      %v2864 = vmul.f32 %v996, %v1211
      %v2865 = vmul.f32 %v996, %v1212
      %v2866 = vadd.f32 %v2830, %v2860
      %v2867 = vadd.f32 %v2831, %v2861
      %v2868 = vadd.f32 %v2832, %v2862
      %v2869 = vadd.f32 %v2833, %v2863
      %v2870 = vadd.f32 %v2834, %v2864
      %v2871 = vadd.f32 %v2835, %v2865
      %v2872 = vmul.f32 %v1009, %v1207
      %v2873 = vmul.f32 %v1009, %v1208
      %v2874 = vmul.f32 %v1009, %v1209
      %v2875 = vmul.f32 %v1009, %v1210
      %v2876 = vmul.f32 %v1009, %v1211
      %v2877 = vmul.f32 %v1009, %v1212
      %v2878 = vadd.f32 %v2842, %v2872
      %v2879 = vadd.f32 %v2843, %v2873
      %v2880 = vadd.f32 %v2844, %v2874
      %v2881 = vadd.f32 %v2845, %v2875
      %v2882 = vadd.f32 %v2846, %v2876
      %v2883 = vadd.f32 %v2847, %v2877
      %s2884 = sadd.s32 %s1023, 4320
      %s2885 = scalar_lea.vmem %s0, %s2884
      %v2886 = vld [vmem:[%s2885] sm:$0xff]
      %v2887 = vld [vmem:[%s2885 + $0x8] sm:$0xff]
      %v2888 = vld [vmem:[%s2885 + $0x10] sm:$0xff]
      %v2889 = vld [vmem:[%s2885 + $0x18] sm:$0xff]
      %v2890 = vld [vmem:[%s2885 + $0x20] sm:$0xff]
      %v2891 = vld [vmem:[%s2885 + $0x28] sm:$0x7]
      %v2892 = vmul.f32 %v1031, %v2886
      %v2893 = vmul.f32 %v1031, %v2887
      %v2894 = vmul.f32 %v1031, %v2888
      %v2895 = vmul.f32 %v1031, %v2889
      %v2896 = vmul.f32 %v1031, %v2890
      %v2897 = vmul.f32 %v1031, %v2891
      %v2898 = vadd.f32 %v2854, %v2892
      %v2899 = vadd.f32 %v2855, %v2893
      %v2900 = vadd.f32 %v2856, %v2894
      %v2901 = vadd.f32 %v2857, %v2895
      %v2902 = vadd.f32 %v2858, %v2896
      %v2903 = vadd.f32 %v2859, %v2897
      %v2904 = vmul.f32 %v1044, %v2886
      %v2905 = vmul.f32 %v1044, %v2887
      %v2906 = vmul.f32 %v1044, %v2888
      %v2907 = vmul.f32 %v1044, %v2889
      %v2908 = vmul.f32 %v1044, %v2890
      %v2909 = vmul.f32 %v1044, %v2891
      %v2910 = vadd.f32 %v2866, %v2904
      %v2911 = vadd.f32 %v2867, %v2905
      %v2912 = vadd.f32 %v2868, %v2906
      %v2913 = vadd.f32 %v2869, %v2907
      %v2914 = vadd.f32 %v2870, %v2908
      %v2915 = vadd.f32 %v2871, %v2909
      %v2916 = vmul.f32 %v1057, %v2886
      %v2917 = vmul.f32 %v1057, %v2887
      %v2918 = vmul.f32 %v1057, %v2888
      %v2919 = vmul.f32 %v1057, %v2889
      %v2920 = vmul.f32 %v1057, %v2890
      %v2921 = vmul.f32 %v1057, %v2891
      %v2922 = vadd.f32 %v2878, %v2916
      %v2923 = vadd.f32 %v2879, %v2917
      %v2924 = vadd.f32 %v2880, %v2918
      %v2925 = vadd.f32 %v2881, %v2919
      %v2926 = vadd.f32 %v2882, %v2920
      %v2927 = vadd.f32 %v2883, %v2921
      %s2928 = sadd.s32 %s1023, 6480
      %s2929 = scalar_lea.vmem %s0, %s2928
      %v2930 = vld [vmem:[%s2929] sm:$0xff]
      %v2931 = vld [vmem:[%s2929 + $0x8] sm:$0xff]
      %v2932 = vld [vmem:[%s2929 + $0x10] sm:$0xff]
      %v2933 = vld [vmem:[%s2929 + $0x18] sm:$0xff]
      %v2934 = vld [vmem:[%s2929 + $0x20] sm:$0xff]
      %v2935 = vld [vmem:[%s2929 + $0x28] sm:$0x7]
      %v2936 = vmul.f32 %v1078, %v2930
      %v2937 = vmul.f32 %v1078, %v2931
      %v2938 = vmul.f32 %v1078, %v2932
      %v2939 = vmul.f32 %v1078, %v2933
      %v2940 = vmul.f32 %v1078, %v2934
      %v2941 = vmul.f32 %v1078, %v2935
      %v2942 = vadd.f32 %v2898, %v2936
      %v2943 = vadd.f32 %v2899, %v2937
      %v2944 = vadd.f32 %v2900, %v2938
      %v2945 = vadd.f32 %v2901, %v2939
      %v2946 = vadd.f32 %v2902, %v2940
      %v2947 = vadd.f32 %v2903, %v2941
      %v2948 = vmul.f32 %v1091, %v2930
      %v2949 = vmul.f32 %v1091, %v2931
      %v2950 = vmul.f32 %v1091, %v2932
      %v2951 = vmul.f32 %v1091, %v2933
      %v2952 = vmul.f32 %v1091, %v2934
      %v2953 = vmul.f32 %v1091, %v2935
      %v2954 = vadd.f32 %v2910, %v2948
      %v2955 = vadd.f32 %v2911, %v2949
      %v2956 = vadd.f32 %v2912, %v2950
      %v2957 = vadd.f32 %v2913, %v2951
      %v2958 = vadd.f32 %v2914, %v2952
      %v2959 = vadd.f32 %v2915, %v2953
      %v2960 = vmul.f32 %v1104, %v2930
      %v2961 = vmul.f32 %v1104, %v2931
      %v2962 = vmul.f32 %v1104, %v2932
      %v2963 = vmul.f32 %v1104, %v2933
      %v2964 = vmul.f32 %v1104, %v2934
      %v2965 = vmul.f32 %v1104, %v2935
      %v2966 = vadd.f32 %v2922, %v2960
      %v2967 = vadd.f32 %v2923, %v2961
      %v2968 = vadd.f32 %v2924, %v2962
      %v2969 = vadd.f32 %v2925, %v2963
      %v2970 = vadd.f32 %v2926, %v2964
      %v2971 = vadd.f32 %v2927, %v2965
      %v2972 = vld [vmem:[%s2885 + $0x1] sm:$0xff]
      %v2973 = vld [vmem:[%s2885 + $0x9] sm:$0xff]
      %v2974 = vld [vmem:[%s2885 + $0x11] sm:$0xff]
      %v2975 = vld [vmem:[%s2885 + $0x19] sm:$0xff]
      %v2976 = vld [vmem:[%s2885 + $0x21] sm:$0xff]
      %v2977 = vld [vmem:[%s2885 + $0x29] sm:$0x7]
      %v2978 = vmul.f32 %v1123, %v2972
      %v2979 = vmul.f32 %v1123, %v2973
      %v2980 = vmul.f32 %v1123, %v2974
      %v2981 = vmul.f32 %v1123, %v2975
      %v2982 = vmul.f32 %v1123, %v2976
      %v2983 = vmul.f32 %v1123, %v2977
      %v2984 = vadd.f32 %v2942, %v2978
      %v2985 = vadd.f32 %v2943, %v2979
      %v2986 = vadd.f32 %v2944, %v2980
      %v2987 = vadd.f32 %v2945, %v2981
      %v2988 = vadd.f32 %v2946, %v2982
      %v2989 = vadd.f32 %v2947, %v2983
      %v2990 = vmul.f32 %v1136, %v2972
      %v2991 = vmul.f32 %v1136, %v2973
      %v2992 = vmul.f32 %v1136, %v2974
      %v2993 = vmul.f32 %v1136, %v2975
      %v2994 = vmul.f32 %v1136, %v2976
      %v2995 = vmul.f32 %v1136, %v2977
      %v2996 = vadd.f32 %v2954, %v2990
      %v2997 = vadd.f32 %v2955, %v2991
      %v2998 = vadd.f32 %v2956, %v2992
      %v2999 = vadd.f32 %v2957, %v2993
      %v3000 = vadd.f32 %v2958, %v2994
      %v3001 = vadd.f32 %v2959, %v2995
      %v3002 = vmul.f32 %v1149, %v2972
      %v3003 = vmul.f32 %v1149, %v2973
      %v3004 = vmul.f32 %v1149, %v2974
      %v3005 = vmul.f32 %v1149, %v2975
      %v3006 = vmul.f32 %v1149, %v2976
      %v3007 = vmul.f32 %v1149, %v2977
      %v3008 = vadd.f32 %v2966, %v3002
      %v3009 = vadd.f32 %v2967, %v3003
      %v3010 = vadd.f32 %v2968, %v3004
      %v3011 = vadd.f32 %v2969, %v3005
      %v3012 = vadd.f32 %v2970, %v3006
      %v3013 = vadd.f32 %v2971, %v3007
      %v3014 = vld [vmem:[%s2929 + $0x1] sm:$0xff]
      %v3015 = vld [vmem:[%s2929 + $0x9] sm:$0xff]
      %v3016 = vld [vmem:[%s2929 + $0x11] sm:$0xff]
      %v3017 = vld [vmem:[%s2929 + $0x19] sm:$0xff]
      %v3018 = vld [vmem:[%s2929 + $0x21] sm:$0xff]
      %v3019 = vld [vmem:[%s2929 + $0x29] sm:$0x7]
      %v3020 = vmul.f32 %v1168, %v3014
      %v3021 = vmul.f32 %v1168, %v3015
      %v3022 = vmul.f32 %v1168, %v3016
      %v3023 = vmul.f32 %v1168, %v3017
      %v3024 = vmul.f32 %v1168, %v3018
      %v3025 = vmul.f32 %v1168, %v3019
      %v3026 = vadd.f32 %v2984, %v3020
      %v3027 = vadd.f32 %v2985, %v3021
      %v3028 = vadd.f32 %v2986, %v3022
      %v3029 = vadd.f32 %v2987, %v3023
      %v3030 = vadd.f32 %v2988, %v3024
      %v3031 = vadd.f32 %v2989, %v3025
      %v3032 = vmul.f32 %v1181, %v3014
      %v3033 = vmul.f32 %v1181, %v3015
      %v3034 = vmul.f32 %v1181, %v3016
      %v3035 = vmul.f32 %v1181, %v3017
      %v3036 = vmul.f32 %v1181, %v3018
      %v3037 = vmul.f32 %v1181, %v3019
      %v3038 = vadd.f32 %v2996, %v3032
      %v3039 = vadd.f32 %v2997, %v3033
      %v3040 = vadd.f32 %v2998, %v3034
      %v3041 = vadd.f32 %v2999, %v3035
      %v3042 = vadd.f32 %v3000, %v3036
      %v3043 = vadd.f32 %v3001, %v3037
      %v3044 = vmul.f32 %v1194, %v3014
      %v3045 = vmul.f32 %v1194, %v3015
      %v3046 = vmul.f32 %v1194, %v3016
      %v3047 = vmul.f32 %v1194, %v3017
      %v3048 = vmul.f32 %v1194, %v3018
      %v3049 = vmul.f32 %v1194, %v3019
      %v3050 = vadd.f32 %v3008, %v3044
      %v3051 = vadd.f32 %v3009, %v3045
      %v3052 = vadd.f32 %v3010, %v3046
      %v3053 = vadd.f32 %v3011, %v3047
      %v3054 = vadd.f32 %v3012, %v3048
      %v3055 = vadd.f32 %v3013, %v3049
      %v3056 = vld [vmem:[%s2885 + $0x2] sm:$0xff]
      %v3057 = vld [vmem:[%s2885 + $0xa] sm:$0xff]
      %v3058 = vld [vmem:[%s2885 + $0x12] sm:$0xff]
      %v3059 = vld [vmem:[%s2885 + $0x1a] sm:$0xff]
      %v3060 = vld [vmem:[%s2885 + $0x22] sm:$0xff]
      %v3061 = vld [vmem:[%s2885 + $0x2a] sm:$0x7]
      %v3062 = vmul.f32 %v1213, %v3056
      %v3063 = vmul.f32 %v1213, %v3057
      %v3064 = vmul.f32 %v1213, %v3058
      %v3065 = vmul.f32 %v1213, %v3059
      %v3066 = vmul.f32 %v1213, %v3060
      %v3067 = vmul.f32 %v1213, %v3061
      %v3068 = vadd.f32 %v3026, %v3062
      %v3069 = vadd.f32 %v3027, %v3063
      %v3070 = vadd.f32 %v3028, %v3064
      %v3071 = vadd.f32 %v3029, %v3065
      %v3072 = vadd.f32 %v3030, %v3066
      %v3073 = vadd.f32 %v3031, %v3067
      %v3074 = vmul.f32 %v1226, %v3056
      %v3075 = vmul.f32 %v1226, %v3057
      %v3076 = vmul.f32 %v1226, %v3058
      %v3077 = vmul.f32 %v1226, %v3059
      %v3078 = vmul.f32 %v1226, %v3060
      %v3079 = vmul.f32 %v1226, %v3061
      %v3080 = vadd.f32 %v3038, %v3074
      %v3081 = vadd.f32 %v3039, %v3075
      %v3082 = vadd.f32 %v3040, %v3076
      %v3083 = vadd.f32 %v3041, %v3077
      %v3084 = vadd.f32 %v3042, %v3078
      %v3085 = vadd.f32 %v3043, %v3079
      %v3086 = vmul.f32 %v1239, %v3056
      %v3087 = vmul.f32 %v1239, %v3057
      %v3088 = vmul.f32 %v1239, %v3058
      %v3089 = vmul.f32 %v1239, %v3059
      %v3090 = vmul.f32 %v1239, %v3060
      %v3091 = vmul.f32 %v1239, %v3061
      %v3092 = vadd.f32 %v3050, %v3086
      %v3093 = vadd.f32 %v3051, %v3087
      %v3094 = vadd.f32 %v3052, %v3088
      %v3095 = vadd.f32 %v3053, %v3089
      %v3096 = vadd.f32 %v3054, %v3090
      %v3097 = vadd.f32 %v3055, %v3091
      %v3098 = vmax.f32 %v2164, %v3068
      %v3099 = vmax.f32 %v2165, %v3069
      %v3100 = vmax.f32 %v2166, %v3070
      %v3101 = vmax.f32 %v2167, %v3071
      %v3102 = vmax.f32 %v2168, %v3072
      %v3103 = vmax.f32 %v2169, %v3073
      %v3104 = vmax.f32 %v2170, %v3080
      %v3105 = vmax.f32 %v2171, %v3081
      %v3106 = vmax.f32 %v2172, %v3082
      %v3107 = vmax.f32 %v2173, %v3083
      %v3108 = vmax.f32 %v2174, %v3084
      %v3109 = vmax.f32 %v2175, %v3085
      %v3110 = vmax.f32 %v2176, %v3092
      %v3111 = vmax.f32 %v2177, %v3093
      %v3112 = vmax.f32 %v2178, %v3094
      %v3113 = vmax.f32 %v2179, %v3095
      %v3114 = vmax.f32 %v2180, %v3096
      %v3115 = vmax.f32 %v2181, %v3097
      %v3116 = vmul.f32 %v131, %v383
      %v3117 = vmul.f32 %v131, %v384
      %v3118 = vmul.f32 %v131, %v385
      %v3119 = vmul.f32 %v131, %v386
      %v3120 = vmul.f32 %v131, %v387
      %v3121 = vmul.f32 %v131, %v388
      %v3122 = vmul.f32 %v138, %v383
      %v3123 = vmul.f32 %v138, %v384
      %v3124 = vmul.f32 %v138, %v385
      %v3125 = vmul.f32 %v138, %v386
      %v3126 = vmul.f32 %v138, %v387
      %v3127 = vmul.f32 %v138, %v388
      %v3128 = vmul.f32 %v145, %v383
      %v3129 = vmul.f32 %v145, %v384
      %v3130 = vmul.f32 %v145, %v385
      %v3131 = vmul.f32 %v145, %v386
      %v3132 = vmul.f32 %v145, %v387
      %v3133 = vmul.f32 %v145, %v388
      %v3134 = vmul.f32 %v160, %v428
      %v3135 = vmul.f32 %v160, %v429
      %v3136 = vmul.f32 %v160, %v430
      %v3137 = vmul.f32 %v160, %v431
      %v3138 = vmul.f32 %v160, %v432
      %v3139 = vmul.f32 %v160, %v433
      %v3140 = vadd.f32 %v3116, %v3134
      %v3141 = vadd.f32 %v3117, %v3135
      %v3142 = vadd.f32 %v3118, %v3136
      %v3143 = vadd.f32 %v3119, %v3137
      %v3144 = vadd.f32 %v3120, %v3138
      %v3145 = vadd.f32 %v3121, %v3139
      %v3146 = vmul.f32 %v173, %v428
      %v3147 = vmul.f32 %v173, %v429
      %v3148 = vmul.f32 %v173, %v430
      %v3149 = vmul.f32 %v173, %v431
      %v3150 = vmul.f32 %v173, %v432
      %v3151 = vmul.f32 %v173, %v433
      %v3152 = vadd.f32 %v3122, %v3146
      %v3153 = vadd.f32 %v3123, %v3147
      %v3154 = vadd.f32 %v3124, %v3148
      %v3155 = vadd.f32 %v3125, %v3149
      %v3156 = vadd.f32 %v3126, %v3150
      %v3157 = vadd.f32 %v3127, %v3151
      %v3158 = vmul.f32 %v186, %v428
      %v3159 = vmul.f32 %v186, %v429
      %v3160 = vmul.f32 %v186, %v430
      %v3161 = vmul.f32 %v186, %v431
      %v3162 = vmul.f32 %v186, %v432
      %v3163 = vmul.f32 %v186, %v433
      %v3164 = vadd.f32 %v3128, %v3158
      %v3165 = vadd.f32 %v3129, %v3159
      %v3166 = vadd.f32 %v3130, %v3160
      %v3167 = vadd.f32 %v3131, %v3161
      %v3168 = vadd.f32 %v3132, %v3162
      %v3169 = vadd.f32 %v3133, %v3163
      %v3170 = vmul.f32 %v205, %v473
      %v3171 = vmul.f32 %v205, %v474
      %v3172 = vmul.f32 %v205, %v475
      %v3173 = vmul.f32 %v205, %v476
      %v3174 = vmul.f32 %v205, %v477
      %v3175 = vmul.f32 %v205, %v478
      %v3176 = vadd.f32 %v3140, %v3170
      %v3177 = vadd.f32 %v3141, %v3171
      %v3178 = vadd.f32 %v3142, %v3172
      %v3179 = vadd.f32 %v3143, %v3173
      %v3180 = vadd.f32 %v3144, %v3174
      %v3181 = vadd.f32 %v3145, %v3175
      %v3182 = vmul.f32 %v218, %v473
      %v3183 = vmul.f32 %v218, %v474
      %v3184 = vmul.f32 %v218, %v475
      %v3185 = vmul.f32 %v218, %v476
      %v3186 = vmul.f32 %v218, %v477
      %v3187 = vmul.f32 %v218, %v478
      %v3188 = vadd.f32 %v3152, %v3182
      %v3189 = vadd.f32 %v3153, %v3183
      %v3190 = vadd.f32 %v3154, %v3184
      %v3191 = vadd.f32 %v3155, %v3185
      %v3192 = vadd.f32 %v3156, %v3186
      %v3193 = vadd.f32 %v3157, %v3187
      %v3194 = vmul.f32 %v231, %v473
      %v3195 = vmul.f32 %v231, %v474
      %v3196 = vmul.f32 %v231, %v475
      %v3197 = vmul.f32 %v231, %v476
      %v3198 = vmul.f32 %v231, %v477
      %v3199 = vmul.f32 %v231, %v478
      %v3200 = vadd.f32 %v3164, %v3194
      %v3201 = vadd.f32 %v3165, %v3195
      %v3202 = vadd.f32 %v3166, %v3196
      %v3203 = vadd.f32 %v3167, %v3197
      %v3204 = vadd.f32 %v3168, %v3198
      %v3205 = vadd.f32 %v3169, %v3199
      %v3206 = vmul.f32 %v250, %v518
      %v3207 = vmul.f32 %v250, %v519
      %v3208 = vmul.f32 %v250, %v520
      %v3209 = vmul.f32 %v250, %v521
      %v3210 = vmul.f32 %v250, %v522
      %v3211 = vmul.f32 %v250, %v523
      %v3212 = vadd.f32 %v3176, %v3206
      %v3213 = vadd.f32 %v3177, %v3207
      %v3214 = vadd.f32 %v3178, %v3208
      %v3215 = vadd.f32 %v3179, %v3209
      %v3216 = vadd.f32 %v3180, %v3210
      %v3217 = vadd.f32 %v3181, %v3211
      %v3218 = vmul.f32 %v263, %v518
      %v3219 = vmul.f32 %v263, %v519
      %v3220 = vmul.f32 %v263, %v520
      %v3221 = vmul.f32 %v263, %v521
      %v3222 = vmul.f32 %v263, %v522
      %v3223 = vmul.f32 %v263, %v523
      %v3224 = vadd.f32 %v3188, %v3218
      %v3225 = vadd.f32 %v3189, %v3219
      %v3226 = vadd.f32 %v3190, %v3220
      %v3227 = vadd.f32 %v3191, %v3221
      %v3228 = vadd.f32 %v3192, %v3222
      %v3229 = vadd.f32 %v3193, %v3223
      %v3230 = vmul.f32 %v276, %v518
      %v3231 = vmul.f32 %v276, %v519
      %v3232 = vmul.f32 %v276, %v520
      %v3233 = vmul.f32 %v276, %v521
      %v3234 = vmul.f32 %v276, %v522
      %v3235 = vmul.f32 %v276, %v523
      %v3236 = vadd.f32 %v3200, %v3230
      %v3237 = vadd.f32 %v3201, %v3231
      %v3238 = vadd.f32 %v3202, %v3232
      %v3239 = vadd.f32 %v3203, %v3233
      %v3240 = vadd.f32 %v3204, %v3234
      %v3241 = vadd.f32 %v3205, %v3235
      %v3242 = vmul.f32 %v295, %v1564
      %v3243 = vmul.f32 %v295, %v1565
      %v3244 = vmul.f32 %v295, %v1566
      %v3245 = vmul.f32 %v295, %v1567
      %v3246 = vmul.f32 %v295, %v1568
      %v3247 = vmul.f32 %v295, %v1569
      %v3248 = vadd.f32 %v3212, %v3242
      %v3249 = vadd.f32 %v3213, %v3243
      %v3250 = vadd.f32 %v3214, %v3244
      %v3251 = vadd.f32 %v3215, %v3245
      %v3252 = vadd.f32 %v3216, %v3246
      %v3253 = vadd.f32 %v3217, %v3247
      %v3254 = vmul.f32 %v308, %v1564
      %v3255 = vmul.f32 %v308, %v1565
      %v3256 = vmul.f32 %v308, %v1566
      %v3257 = vmul.f32 %v308, %v1567
      %v3258 = vmul.f32 %v308, %v1568
      %v3259 = vmul.f32 %v308, %v1569
      %v3260 = vadd.f32 %v3224, %v3254
      %v3261 = vadd.f32 %v3225, %v3255
      %v3262 = vadd.f32 %v3226, %v3256
      %v3263 = vadd.f32 %v3227, %v3257
      %v3264 = vadd.f32 %v3228, %v3258
      %v3265 = vadd.f32 %v3229, %v3259
      %v3266 = vmul.f32 %v321, %v1564
      %v3267 = vmul.f32 %v321, %v1565
      %v3268 = vmul.f32 %v321, %v1566
      %v3269 = vmul.f32 %v321, %v1567
      %v3270 = vmul.f32 %v321, %v1568
      %v3271 = vmul.f32 %v321, %v1569
      %v3272 = vadd.f32 %v3236, %v3266
      %v3273 = vadd.f32 %v3237, %v3267
      %v3274 = vadd.f32 %v3238, %v3268
      %v3275 = vadd.f32 %v3239, %v3269
      %v3276 = vadd.f32 %v3240, %v3270
      %v3277 = vadd.f32 %v3241, %v3271
      %v3278 = vmul.f32 %v342, %v613
      %v3279 = vmul.f32 %v342, %v614
      %v3280 = vmul.f32 %v342, %v615
      %v3281 = vmul.f32 %v342, %v616
      %v3282 = vmul.f32 %v342, %v617
      %v3283 = vmul.f32 %v342, %v618
      %v3284 = vadd.f32 %v3248, %v3278
      %v3285 = vadd.f32 %v3249, %v3279
      %v3286 = vadd.f32 %v3250, %v3280
      %v3287 = vadd.f32 %v3251, %v3281
      %v3288 = vadd.f32 %v3252, %v3282
      %v3289 = vadd.f32 %v3253, %v3283
      %v3290 = vmul.f32 %v355, %v613
      %v3291 = vmul.f32 %v355, %v614
      %v3292 = vmul.f32 %v355, %v615
      %v3293 = vmul.f32 %v355, %v616
      %v3294 = vmul.f32 %v355, %v617
      %v3295 = vmul.f32 %v355, %v618
      %v3296 = vadd.f32 %v3260, %v3290
      %v3297 = vadd.f32 %v3261, %v3291
      %v3298 = vadd.f32 %v3262, %v3292
      %v3299 = vadd.f32 %v3263, %v3293
      %v3300 = vadd.f32 %v3264, %v3294
      %v3301 = vadd.f32 %v3265, %v3295
      %v3302 = vmul.f32 %v368, %v613
      %v3303 = vmul.f32 %v368, %v614
      %v3304 = vmul.f32 %v368, %v615
      %v3305 = vmul.f32 %v368, %v616
      %v3306 = vmul.f32 %v368, %v617
      %v3307 = vmul.f32 %v368, %v618
      %v3308 = vadd.f32 %v3272, %v3302
      %v3309 = vadd.f32 %v3273, %v3303
      %v3310 = vadd.f32 %v3274, %v3304
      %v3311 = vadd.f32 %v3275, %v3305
      %v3312 = vadd.f32 %v3276, %v3306
      %v3313 = vadd.f32 %v3277, %v3307
      %v3314 = vmul.f32 %v389, %v658
      %v3315 = vmul.f32 %v389, %v659
      %v3316 = vmul.f32 %v389, %v660
      %v3317 = vmul.f32 %v389, %v661
      %v3318 = vmul.f32 %v389, %v662
      %v3319 = vmul.f32 %v389, %v663
      %v3320 = vadd.f32 %v3284, %v3314
      %v3321 = vadd.f32 %v3285, %v3315
      %v3322 = vadd.f32 %v3286, %v3316
      %v3323 = vadd.f32 %v3287, %v3317
      %v3324 = vadd.f32 %v3288, %v3318
      %v3325 = vadd.f32 %v3289, %v3319
      %v3326 = vmul.f32 %v402, %v658
      %v3327 = vmul.f32 %v402, %v659
      %v3328 = vmul.f32 %v402, %v660
      %v3329 = vmul.f32 %v402, %v661
      %v3330 = vmul.f32 %v402, %v662
      %v3331 = vmul.f32 %v402, %v663
      %v3332 = vadd.f32 %v3296, %v3326
      %v3333 = vadd.f32 %v3297, %v3327
      %v3334 = vadd.f32 %v3298, %v3328
      %v3335 = vadd.f32 %v3299, %v3329
      %v3336 = vadd.f32 %v3300, %v3330
      %v3337 = vadd.f32 %v3301, %v3331
      %v3338 = vmul.f32 %v415, %v658
      %v3339 = vmul.f32 %v415, %v659
      %v3340 = vmul.f32 %v415, %v660
      %v3341 = vmul.f32 %v415, %v661
      %v3342 = vmul.f32 %v415, %v662
      %v3343 = vmul.f32 %v415, %v663
      %v3344 = vadd.f32 %v3308, %v3338
      %v3345 = vadd.f32 %v3309, %v3339
      %v3346 = vadd.f32 %v3310, %v3340
      %v3347 = vadd.f32 %v3311, %v3341
      %v3348 = vadd.f32 %v3312, %v3342
      %v3349 = vadd.f32 %v3313, %v3343
      %v3350 = vmul.f32 %v434, %v703
      %v3351 = vmul.f32 %v434, %v704
      %v3352 = vmul.f32 %v434, %v705
      %v3353 = vmul.f32 %v434, %v706
      %v3354 = vmul.f32 %v434, %v707
      %v3355 = vmul.f32 %v434, %v708
      %v3356 = vadd.f32 %v3320, %v3350
      %v3357 = vadd.f32 %v3321, %v3351
      %v3358 = vadd.f32 %v3322, %v3352
      %v3359 = vadd.f32 %v3323, %v3353
      %v3360 = vadd.f32 %v3324, %v3354
      %v3361 = vadd.f32 %v3325, %v3355
      %v3362 = vmul.f32 %v447, %v703
      %v3363 = vmul.f32 %v447, %v704
      %v3364 = vmul.f32 %v447, %v705
      %v3365 = vmul.f32 %v447, %v706
      %v3366 = vmul.f32 %v447, %v707
      %v3367 = vmul.f32 %v447, %v708
      %v3368 = vadd.f32 %v3332, %v3362
      %v3369 = vadd.f32 %v3333, %v3363
      %v3370 = vadd.f32 %v3334, %v3364
      %v3371 = vadd.f32 %v3335, %v3365
      %v3372 = vadd.f32 %v3336, %v3366
      %v3373 = vadd.f32 %v3337, %v3367
      %v3374 = vmul.f32 %v460, %v703
      %v3375 = vmul.f32 %v460, %v704
      %v3376 = vmul.f32 %v460, %v705
      %v3377 = vmul.f32 %v460, %v706
      %v3378 = vmul.f32 %v460, %v707
      %v3379 = vmul.f32 %v460, %v708
      %v3380 = vadd.f32 %v3344, %v3374
      %v3381 = vadd.f32 %v3345, %v3375
      %v3382 = vadd.f32 %v3346, %v3376
      %v3383 = vadd.f32 %v3347, %v3377
      %v3384 = vadd.f32 %v3348, %v3378
      %v3385 = vadd.f32 %v3349, %v3379
      %v3386 = vmul.f32 %v479, %v748
      %v3387 = vmul.f32 %v479, %v749
      %v3388 = vmul.f32 %v479, %v750
      %v3389 = vmul.f32 %v479, %v751
      %v3390 = vmul.f32 %v479, %v752
      %v3391 = vmul.f32 %v479, %v753
      %v3392 = vadd.f32 %v3356, %v3386
      %v3393 = vadd.f32 %v3357, %v3387
      %v3394 = vadd.f32 %v3358, %v3388
      %v3395 = vadd.f32 %v3359, %v3389
      %v3396 = vadd.f32 %v3360, %v3390
      %v3397 = vadd.f32 %v3361, %v3391
      %v3398 = vmul.f32 %v492, %v748
      %v3399 = vmul.f32 %v492, %v749
      %v3400 = vmul.f32 %v492, %v750
      %v3401 = vmul.f32 %v492, %v751
      %v3402 = vmul.f32 %v492, %v752
      %v3403 = vmul.f32 %v492, %v753
      %v3404 = vadd.f32 %v3368, %v3398
      %v3405 = vadd.f32 %v3369, %v3399
      %v3406 = vadd.f32 %v3370, %v3400
      %v3407 = vadd.f32 %v3371, %v3401
      %v3408 = vadd.f32 %v3372, %v3402
      %v3409 = vadd.f32 %v3373, %v3403
      %v3410 = vmul.f32 %v505, %v748
      %v3411 = vmul.f32 %v505, %v749
      %v3412 = vmul.f32 %v505, %v750
      %v3413 = vmul.f32 %v505, %v751
      %v3414 = vmul.f32 %v505, %v752
      %v3415 = vmul.f32 %v505, %v753
      %v3416 = vadd.f32 %v3380, %v3410
      %v3417 = vadd.f32 %v3381, %v3411
      %v3418 = vadd.f32 %v3382, %v3412
      %v3419 = vadd.f32 %v3383, %v3413
      %v3420 = vadd.f32 %v3384, %v3414
      %v3421 = vadd.f32 %v3385, %v3415
      %v3422 = vmul.f32 %v524, %v1750
      %v3423 = vmul.f32 %v524, %v1751
      %v3424 = vmul.f32 %v524, %v1752
      %v3425 = vmul.f32 %v524, %v1753
      %v3426 = vmul.f32 %v524, %v1754
      %v3427 = vmul.f32 %v524, %v1755
      %v3428 = vadd.f32 %v3392, %v3422
      %v3429 = vadd.f32 %v3393, %v3423
      %v3430 = vadd.f32 %v3394, %v3424
      %v3431 = vadd.f32 %v3395, %v3425
      %v3432 = vadd.f32 %v3396, %v3426
      %v3433 = vadd.f32 %v3397, %v3427
      %v3434 = vmul.f32 %v537, %v1750
      %v3435 = vmul.f32 %v537, %v1751
      %v3436 = vmul.f32 %v537, %v1752
      %v3437 = vmul.f32 %v537, %v1753
      %v3438 = vmul.f32 %v537, %v1754
      %v3439 = vmul.f32 %v537, %v1755
      %v3440 = vadd.f32 %v3404, %v3434
      %v3441 = vadd.f32 %v3405, %v3435
      %v3442 = vadd.f32 %v3406, %v3436
      %v3443 = vadd.f32 %v3407, %v3437
      %v3444 = vadd.f32 %v3408, %v3438
      %v3445 = vadd.f32 %v3409, %v3439
      %v3446 = vmul.f32 %v550, %v1750
      %v3447 = vmul.f32 %v550, %v1751
      %v3448 = vmul.f32 %v550, %v1752
      %v3449 = vmul.f32 %v550, %v1753
      %v3450 = vmul.f32 %v550, %v1754
      %v3451 = vmul.f32 %v550, %v1755
      %v3452 = vadd.f32 %v3416, %v3446
      %v3453 = vadd.f32 %v3417, %v3447
      %v3454 = vadd.f32 %v3418, %v3448
      %v3455 = vadd.f32 %v3419, %v3449
      %v3456 = vadd.f32 %v3420, %v3450
      %v3457 = vadd.f32 %v3421, %v3451
      %v3458 = vmul.f32 %v572, %v842
      %v3459 = vmul.f32 %v572, %v843
      %v3460 = vmul.f32 %v572, %v844
      %v3461 = vmul.f32 %v572, %v845
      %v3462 = vmul.f32 %v572, %v846
      %v3463 = vmul.f32 %v572, %v847
      %v3464 = vadd.f32 %v3428, %v3458
      %v3465 = vadd.f32 %v3429, %v3459
      %v3466 = vadd.f32 %v3430, %v3460
      %v3467 = vadd.f32 %v3431, %v3461
      %v3468 = vadd.f32 %v3432, %v3462
      %v3469 = vadd.f32 %v3433, %v3463
      %v3470 = vmul.f32 %v585, %v842
      %v3471 = vmul.f32 %v585, %v843
      %v3472 = vmul.f32 %v585, %v844
      %v3473 = vmul.f32 %v585, %v845
      %v3474 = vmul.f32 %v585, %v846
      %v3475 = vmul.f32 %v585, %v847
      %v3476 = vadd.f32 %v3440, %v3470
      %v3477 = vadd.f32 %v3441, %v3471
      %v3478 = vadd.f32 %v3442, %v3472
      %v3479 = vadd.f32 %v3443, %v3473
      %v3480 = vadd.f32 %v3444, %v3474
      %v3481 = vadd.f32 %v3445, %v3475
      %v3482 = vmul.f32 %v598, %v842
      %v3483 = vmul.f32 %v598, %v843
      %v3484 = vmul.f32 %v598, %v844
      %v3485 = vmul.f32 %v598, %v845
      %v3486 = vmul.f32 %v598, %v846
      %v3487 = vmul.f32 %v598, %v847
      %v3488 = vadd.f32 %v3452, %v3482
      %v3489 = vadd.f32 %v3453, %v3483
      %v3490 = vadd.f32 %v3454, %v3484
      %v3491 = vadd.f32 %v3455, %v3485
      %v3492 = vadd.f32 %v3456, %v3486
      %v3493 = vadd.f32 %v3457, %v3487
      %v3494 = vmul.f32 %v619, %v887
      %v3495 = vmul.f32 %v619, %v888
      %v3496 = vmul.f32 %v619, %v889
      %v3497 = vmul.f32 %v619, %v890
      %v3498 = vmul.f32 %v619, %v891
      %v3499 = vmul.f32 %v619, %v892
      %v3500 = vadd.f32 %v3464, %v3494
      %v3501 = vadd.f32 %v3465, %v3495
      %v3502 = vadd.f32 %v3466, %v3496
      %v3503 = vadd.f32 %v3467, %v3497
      %v3504 = vadd.f32 %v3468, %v3498
      %v3505 = vadd.f32 %v3469, %v3499
      %v3506 = vmul.f32 %v632, %v887
      %v3507 = vmul.f32 %v632, %v888
      %v3508 = vmul.f32 %v632, %v889
      %v3509 = vmul.f32 %v632, %v890
      %v3510 = vmul.f32 %v632, %v891
      %v3511 = vmul.f32 %v632, %v892
      %v3512 = vadd.f32 %v3476, %v3506
      %v3513 = vadd.f32 %v3477, %v3507
      %v3514 = vadd.f32 %v3478, %v3508
      %v3515 = vadd.f32 %v3479, %v3509
      %v3516 = vadd.f32 %v3480, %v3510
      %v3517 = vadd.f32 %v3481, %v3511
      %v3518 = vmul.f32 %v645, %v887
      %v3519 = vmul.f32 %v645, %v888
      %v3520 = vmul.f32 %v645, %v889
      %v3521 = vmul.f32 %v645, %v890
      %v3522 = vmul.f32 %v645, %v891
      %v3523 = vmul.f32 %v645, %v892
      %v3524 = vadd.f32 %v3488, %v3518
      %v3525 = vadd.f32 %v3489, %v3519
      %v3526 = vadd.f32 %v3490, %v3520
      %v3527 = vadd.f32 %v3491, %v3521
      %v3528 = vadd.f32 %v3492, %v3522
      %v3529 = vadd.f32 %v3493, %v3523
      %v3530 = vmul.f32 %v664, %v932
      %v3531 = vmul.f32 %v664, %v933
      %v3532 = vmul.f32 %v664, %v934
      %v3533 = vmul.f32 %v664, %v935
      %v3534 = vmul.f32 %v664, %v936
      %v3535 = vmul.f32 %v664, %v937
      %v3536 = vadd.f32 %v3500, %v3530
      %v3537 = vadd.f32 %v3501, %v3531
      %v3538 = vadd.f32 %v3502, %v3532
      %v3539 = vadd.f32 %v3503, %v3533
      %v3540 = vadd.f32 %v3504, %v3534
      %v3541 = vadd.f32 %v3505, %v3535
      %v3542 = vmul.f32 %v677, %v932
      %v3543 = vmul.f32 %v677, %v933
      %v3544 = vmul.f32 %v677, %v934
      %v3545 = vmul.f32 %v677, %v935
      %v3546 = vmul.f32 %v677, %v936
      %v3547 = vmul.f32 %v677, %v937
      %v3548 = vadd.f32 %v3512, %v3542
      %v3549 = vadd.f32 %v3513, %v3543
      %v3550 = vadd.f32 %v3514, %v3544
      %v3551 = vadd.f32 %v3515, %v3545
      %v3552 = vadd.f32 %v3516, %v3546
      %v3553 = vadd.f32 %v3517, %v3547
      %v3554 = vmul.f32 %v690, %v932
      %v3555 = vmul.f32 %v690, %v933
      %v3556 = vmul.f32 %v690, %v934
      %v3557 = vmul.f32 %v690, %v935
      %v3558 = vmul.f32 %v690, %v936
      %v3559 = vmul.f32 %v690, %v937
      %v3560 = vadd.f32 %v3524, %v3554
      %v3561 = vadd.f32 %v3525, %v3555
      %v3562 = vadd.f32 %v3526, %v3556
      %v3563 = vadd.f32 %v3527, %v3557
      %v3564 = vadd.f32 %v3528, %v3558
      %v3565 = vadd.f32 %v3529, %v3559
      %v3566 = vmul.f32 %v709, %v977
      %v3567 = vmul.f32 %v709, %v978
      %v3568 = vmul.f32 %v709, %v979
      %v3569 = vmul.f32 %v709, %v980
      %v3570 = vmul.f32 %v709, %v981
      %v3571 = vmul.f32 %v709, %v982
      %v3572 = vadd.f32 %v3536, %v3566
      %v3573 = vadd.f32 %v3537, %v3567
      %v3574 = vadd.f32 %v3538, %v3568
      %v3575 = vadd.f32 %v3539, %v3569
      %v3576 = vadd.f32 %v3540, %v3570
      %v3577 = vadd.f32 %v3541, %v3571
      %v3578 = vmul.f32 %v722, %v977
      %v3579 = vmul.f32 %v722, %v978
      %v3580 = vmul.f32 %v722, %v979
      %v3581 = vmul.f32 %v722, %v980
      %v3582 = vmul.f32 %v722, %v981
      %v3583 = vmul.f32 %v722, %v982
      %v3584 = vadd.f32 %v3548, %v3578
      %v3585 = vadd.f32 %v3549, %v3579
      %v3586 = vadd.f32 %v3550, %v3580
      %v3587 = vadd.f32 %v3551, %v3581
      %v3588 = vadd.f32 %v3552, %v3582
      %v3589 = vadd.f32 %v3553, %v3583
      %v3590 = vmul.f32 %v735, %v977
      %v3591 = vmul.f32 %v735, %v978
      %v3592 = vmul.f32 %v735, %v979
      %v3593 = vmul.f32 %v735, %v980
      %v3594 = vmul.f32 %v735, %v981
      %v3595 = vmul.f32 %v735, %v982
      %v3596 = vadd.f32 %v3560, %v3590
      %v3597 = vadd.f32 %v3561, %v3591
      %v3598 = vadd.f32 %v3562, %v3592
      %v3599 = vadd.f32 %v3563, %v3593
      %v3600 = vadd.f32 %v3564, %v3594
      %v3601 = vadd.f32 %v3565, %v3595
      %v3602 = vmul.f32 %v754, %v1936
      %v3603 = vmul.f32 %v754, %v1937
      %v3604 = vmul.f32 %v754, %v1938
      %v3605 = vmul.f32 %v754, %v1939
      %v3606 = vmul.f32 %v754, %v1940
      %v3607 = vmul.f32 %v754, %v1941
      %v3608 = vadd.f32 %v3572, %v3602
      %v3609 = vadd.f32 %v3573, %v3603
      %v3610 = vadd.f32 %v3574, %v3604
      %v3611 = vadd.f32 %v3575, %v3605
      %v3612 = vadd.f32 %v3576, %v3606
      %v3613 = vadd.f32 %v3577, %v3607
      %v3614 = vmul.f32 %v767, %v1936
      %v3615 = vmul.f32 %v767, %v1937
      %v3616 = vmul.f32 %v767, %v1938
      %v3617 = vmul.f32 %v767, %v1939
      %v3618 = vmul.f32 %v767, %v1940
      %v3619 = vmul.f32 %v767, %v1941
      %v3620 = vadd.f32 %v3584, %v3614
      %v3621 = vadd.f32 %v3585, %v3615
      %v3622 = vadd.f32 %v3586, %v3616
      %v3623 = vadd.f32 %v3587, %v3617
      %v3624 = vadd.f32 %v3588, %v3618
      %v3625 = vadd.f32 %v3589, %v3619
      %v3626 = vmul.f32 %v780, %v1936
      %v3627 = vmul.f32 %v780, %v1937
      %v3628 = vmul.f32 %v780, %v1938
      %v3629 = vmul.f32 %v780, %v1939
      %v3630 = vmul.f32 %v780, %v1940
      %v3631 = vmul.f32 %v780, %v1941
      %v3632 = vadd.f32 %v3596, %v3626
      %v3633 = vadd.f32 %v3597, %v3627
      %v3634 = vadd.f32 %v3598, %v3628
      %v3635 = vadd.f32 %v3599, %v3629
      %v3636 = vadd.f32 %v3600, %v3630
      %v3637 = vadd.f32 %v3601, %v3631
      %v3638 = vmul.f32 %v801, %v1072
      %v3639 = vmul.f32 %v801, %v1073
      %v3640 = vmul.f32 %v801, %v1074
      %v3641 = vmul.f32 %v801, %v1075
      %v3642 = vmul.f32 %v801, %v1076
      %v3643 = vmul.f32 %v801, %v1077
      %v3644 = vadd.f32 %v3608, %v3638
      %v3645 = vadd.f32 %v3609, %v3639
      %v3646 = vadd.f32 %v3610, %v3640
      %v3647 = vadd.f32 %v3611, %v3641
      %v3648 = vadd.f32 %v3612, %v3642
      %v3649 = vadd.f32 %v3613, %v3643
      %v3650 = vmul.f32 %v814, %v1072
      %v3651 = vmul.f32 %v814, %v1073
      %v3652 = vmul.f32 %v814, %v1074
      %v3653 = vmul.f32 %v814, %v1075
      %v3654 = vmul.f32 %v814, %v1076
      %v3655 = vmul.f32 %v814, %v1077
      %v3656 = vadd.f32 %v3620, %v3650
      %v3657 = vadd.f32 %v3621, %v3651
      %v3658 = vadd.f32 %v3622, %v3652
      %v3659 = vadd.f32 %v3623, %v3653
      %v3660 = vadd.f32 %v3624, %v3654
      %v3661 = vadd.f32 %v3625, %v3655
      %v3662 = vmul.f32 %v827, %v1072
      %v3663 = vmul.f32 %v827, %v1073
      %v3664 = vmul.f32 %v827, %v1074
      %v3665 = vmul.f32 %v827, %v1075
      %v3666 = vmul.f32 %v827, %v1076
      %v3667 = vmul.f32 %v827, %v1077
      %v3668 = vadd.f32 %v3632, %v3662
      %v3669 = vadd.f32 %v3633, %v3663
      %v3670 = vadd.f32 %v3634, %v3664
      %v3671 = vadd.f32 %v3635, %v3665
      %v3672 = vadd.f32 %v3636, %v3666
      %v3673 = vadd.f32 %v3637, %v3667
      %v3674 = vmul.f32 %v848, %v1117
      %v3675 = vmul.f32 %v848, %v1118
      %v3676 = vmul.f32 %v848, %v1119
      %v3677 = vmul.f32 %v848, %v1120
      %v3678 = vmul.f32 %v848, %v1121
      %v3679 = vmul.f32 %v848, %v1122
      %v3680 = vadd.f32 %v3644, %v3674
      %v3681 = vadd.f32 %v3645, %v3675
      %v3682 = vadd.f32 %v3646, %v3676
      %v3683 = vadd.f32 %v3647, %v3677
      %v3684 = vadd.f32 %v3648, %v3678
      %v3685 = vadd.f32 %v3649, %v3679
      %v3686 = vmul.f32 %v861, %v1117
      %v3687 = vmul.f32 %v861, %v1118
      %v3688 = vmul.f32 %v861, %v1119
      %v3689 = vmul.f32 %v861, %v1120
      %v3690 = vmul.f32 %v861, %v1121
      %v3691 = vmul.f32 %v861, %v1122
      %v3692 = vadd.f32 %v3656, %v3686
      %v3693 = vadd.f32 %v3657, %v3687
      %v3694 = vadd.f32 %v3658, %v3688
      %v3695 = vadd.f32 %v3659, %v3689
      %v3696 = vadd.f32 %v3660, %v3690
      %v3697 = vadd.f32 %v3661, %v3691
      %v3698 = vmul.f32 %v874, %v1117
      %v3699 = vmul.f32 %v874, %v1118
      %v3700 = vmul.f32 %v874, %v1119
      %v3701 = vmul.f32 %v874, %v1120
      %v3702 = vmul.f32 %v874, %v1121
      %v3703 = vmul.f32 %v874, %v1122
      %v3704 = vadd.f32 %v3668, %v3698
      %v3705 = vadd.f32 %v3669, %v3699
      %v3706 = vadd.f32 %v3670, %v3700
      %v3707 = vadd.f32 %v3671, %v3701
      %v3708 = vadd.f32 %v3672, %v3702
      %v3709 = vadd.f32 %v3673, %v3703
      %v3710 = vmul.f32 %v893, %v1162
      %v3711 = vmul.f32 %v893, %v1163
      %v3712 = vmul.f32 %v893, %v1164
      %v3713 = vmul.f32 %v893, %v1165
      %v3714 = vmul.f32 %v893, %v1166
      %v3715 = vmul.f32 %v893, %v1167
      %v3716 = vadd.f32 %v3680, %v3710
      %v3717 = vadd.f32 %v3681, %v3711
      %v3718 = vadd.f32 %v3682, %v3712
      %v3719 = vadd.f32 %v3683, %v3713
      %v3720 = vadd.f32 %v3684, %v3714
      %v3721 = vadd.f32 %v3685, %v3715
      %v3722 = vmul.f32 %v906, %v1162
      %v3723 = vmul.f32 %v906, %v1163
      %v3724 = vmul.f32 %v906, %v1164
      %v3725 = vmul.f32 %v906, %v1165
      %v3726 = vmul.f32 %v906, %v1166
      %v3727 = vmul.f32 %v906, %v1167
      %v3728 = vadd.f32 %v3692, %v3722
      %v3729 = vadd.f32 %v3693, %v3723
      %v3730 = vadd.f32 %v3694, %v3724
      %v3731 = vadd.f32 %v3695, %v3725
      %v3732 = vadd.f32 %v3696, %v3726
      %v3733 = vadd.f32 %v3697, %v3727
      %v3734 = vmul.f32 %v919, %v1162
      %v3735 = vmul.f32 %v919, %v1163
      %v3736 = vmul.f32 %v919, %v1164
      %v3737 = vmul.f32 %v919, %v1165
      %v3738 = vmul.f32 %v919, %v1166
      %v3739 = vmul.f32 %v919, %v1167
      %v3740 = vadd.f32 %v3704, %v3734
      %v3741 = vadd.f32 %v3705, %v3735
      %v3742 = vadd.f32 %v3706, %v3736
      %v3743 = vadd.f32 %v3707, %v3737
      %v3744 = vadd.f32 %v3708, %v3738
      %v3745 = vadd.f32 %v3709, %v3739
      %v3746 = vmul.f32 %v938, %v1207
      %v3747 = vmul.f32 %v938, %v1208
      %v3748 = vmul.f32 %v938, %v1209
      %v3749 = vmul.f32 %v938, %v1210
      %v3750 = vmul.f32 %v938, %v1211
      %v3751 = vmul.f32 %v938, %v1212
      %v3752 = vadd.f32 %v3716, %v3746
      %v3753 = vadd.f32 %v3717, %v3747
      %v3754 = vadd.f32 %v3718, %v3748
      %v3755 = vadd.f32 %v3719, %v3749
      %v3756 = vadd.f32 %v3720, %v3750
      %v3757 = vadd.f32 %v3721, %v3751
      %v3758 = vmul.f32 %v951, %v1207
      %v3759 = vmul.f32 %v951, %v1208
      %v3760 = vmul.f32 %v951, %v1209
      %v3761 = vmul.f32 %v951, %v1210
      %v3762 = vmul.f32 %v951, %v1211
      %v3763 = vmul.f32 %v951, %v1212
      %v3764 = vadd.f32 %v3728, %v3758
      %v3765 = vadd.f32 %v3729, %v3759
      %v3766 = vadd.f32 %v3730, %v3760
      %v3767 = vadd.f32 %v3731, %v3761
      %v3768 = vadd.f32 %v3732, %v3762
      %v3769 = vadd.f32 %v3733, %v3763
      %v3770 = vmul.f32 %v964, %v1207
      %v3771 = vmul.f32 %v964, %v1208
      %v3772 = vmul.f32 %v964, %v1209
      %v3773 = vmul.f32 %v964, %v1210
      %v3774 = vmul.f32 %v964, %v1211
      %v3775 = vmul.f32 %v964, %v1212
      %v3776 = vadd.f32 %v3740, %v3770
      %v3777 = vadd.f32 %v3741, %v3771
      %v3778 = vadd.f32 %v3742, %v3772
      %v3779 = vadd.f32 %v3743, %v3773
      %v3780 = vadd.f32 %v3744, %v3774
      %v3781 = vadd.f32 %v3745, %v3775
      %v3782 = vmul.f32 %v983, %v2122
      %v3783 = vmul.f32 %v983, %v2123
      %v3784 = vmul.f32 %v983, %v2124
      %v3785 = vmul.f32 %v983, %v2125
      %v3786 = vmul.f32 %v983, %v2126
      %v3787 = vmul.f32 %v983, %v2127
      %v3788 = vadd.f32 %v3752, %v3782
      %v3789 = vadd.f32 %v3753, %v3783
      %v3790 = vadd.f32 %v3754, %v3784
      %v3791 = vadd.f32 %v3755, %v3785
      %v3792 = vadd.f32 %v3756, %v3786
      %v3793 = vadd.f32 %v3757, %v3787
      %v3794 = vmul.f32 %v996, %v2122
      %v3795 = vmul.f32 %v996, %v2123
      %v3796 = vmul.f32 %v996, %v2124
      %v3797 = vmul.f32 %v996, %v2125
      %v3798 = vmul.f32 %v996, %v2126
      %v3799 = vmul.f32 %v996, %v2127
      %v3800 = vadd.f32 %v3764, %v3794
      %v3801 = vadd.f32 %v3765, %v3795
      %v3802 = vadd.f32 %v3766, %v3796
      %v3803 = vadd.f32 %v3767, %v3797
      %v3804 = vadd.f32 %v3768, %v3798
      %v3805 = vadd.f32 %v3769, %v3799
      %v3806 = vmul.f32 %v1009, %v2122
      %v3807 = vmul.f32 %v1009, %v2123
      %v3808 = vmul.f32 %v1009, %v2124
      %v3809 = vmul.f32 %v1009, %v2125
      %v3810 = vmul.f32 %v1009, %v2126
      %v3811 = vmul.f32 %v1009, %v2127
      %v3812 = vadd.f32 %v3776, %v3806
      %v3813 = vadd.f32 %v3777, %v3807
      %v3814 = vadd.f32 %v3778, %v3808
      %v3815 = vadd.f32 %v3779, %v3809
      %v3816 = vadd.f32 %v3780, %v3810
      %v3817 = vadd.f32 %v3781, %v3811
      %v3818 = vmul.f32 %v1031, %v2930
      %v3819 = vmul.f32 %v1031, %v2931
      %v3820 = vmul.f32 %v1031, %v2932
      %v3821 = vmul.f32 %v1031, %v2933
      %v3822 = vmul.f32 %v1031, %v2934
      %v3823 = vmul.f32 %v1031, %v2935
      %v3824 = vadd.f32 %v3788, %v3818
      %v3825 = vadd.f32 %v3789, %v3819
      %v3826 = vadd.f32 %v3790, %v3820
      %v3827 = vadd.f32 %v3791, %v3821
      %v3828 = vadd.f32 %v3792, %v3822
      %v3829 = vadd.f32 %v3793, %v3823
      %v3830 = vmul.f32 %v1044, %v2930
      %v3831 = vmul.f32 %v1044, %v2931
      %v3832 = vmul.f32 %v1044, %v2932
      %v3833 = vmul.f32 %v1044, %v2933
      %v3834 = vmul.f32 %v1044, %v2934
      %v3835 = vmul.f32 %v1044, %v2935
      %v3836 = vadd.f32 %v3800, %v3830
      %v3837 = vadd.f32 %v3801, %v3831
      %v3838 = vadd.f32 %v3802, %v3832
      %v3839 = vadd.f32 %v3803, %v3833
      %v3840 = vadd.f32 %v3804, %v3834
      %v3841 = vadd.f32 %v3805, %v3835
      %v3842 = vmul.f32 %v1057, %v2930
      %v3843 = vmul.f32 %v1057, %v2931
      %v3844 = vmul.f32 %v1057, %v2932
      %v3845 = vmul.f32 %v1057, %v2933
      %v3846 = vmul.f32 %v1057, %v2934
      %v3847 = vmul.f32 %v1057, %v2935
      %v3848 = vadd.f32 %v3812, %v3842
      %v3849 = vadd.f32 %v3813, %v3843
      %v3850 = vadd.f32 %v3814, %v3844
      %v3851 = vadd.f32 %v3815, %v3845
      %v3852 = vadd.f32 %v3816, %v3846
      %v3853 = vadd.f32 %v3817, %v3847
      %v3854 = vmul.f32 %v1078, %v2972
      %v3855 = vmul.f32 %v1078, %v2973
      %v3856 = vmul.f32 %v1078, %v2974
      %v3857 = vmul.f32 %v1078, %v2975
      %v3858 = vmul.f32 %v1078, %v2976
      %v3859 = vmul.f32 %v1078, %v2977
      %v3860 = vadd.f32 %v3824, %v3854
      %v3861 = vadd.f32 %v3825, %v3855
      %v3862 = vadd.f32 %v3826, %v3856
      %v3863 = vadd.f32 %v3827, %v3857
      %v3864 = vadd.f32 %v3828, %v3858
      %v3865 = vadd.f32 %v3829, %v3859
      %v3866 = vmul.f32 %v1091, %v2972
      %v3867 = vmul.f32 %v1091, %v2973
      %v3868 = vmul.f32 %v1091, %v2974
      %v3869 = vmul.f32 %v1091, %v2975
      %v3870 = vmul.f32 %v1091, %v2976
      %v3871 = vmul.f32 %v1091, %v2977
      %v3872 = vadd.f32 %v3836, %v3866
      %v3873 = vadd.f32 %v3837, %v3867
      %v3874 = vadd.f32 %v3838, %v3868
      %v3875 = vadd.f32 %v3839, %v3869
      %v3876 = vadd.f32 %v3840, %v3870
      %v3877 = vadd.f32 %v3841, %v3871
      %v3878 = vmul.f32 %v1104, %v2972
      %v3879 = vmul.f32 %v1104, %v2973
      %v3880 = vmul.f32 %v1104, %v2974
      %v3881 = vmul.f32 %v1104, %v2975
      %v3882 = vmul.f32 %v1104, %v2976
      %v3883 = vmul.f32 %v1104, %v2977
      %v3884 = vadd.f32 %v3848, %v3878
      %v3885 = vadd.f32 %v3849, %v3879
      %v3886 = vadd.f32 %v3850, %v3880
      %v3887 = vadd.f32 %v3851, %v3881
      %v3888 = vadd.f32 %v3852, %v3882
      %v3889 = vadd.f32 %v3853, %v3883
      %v3890 = vmul.f32 %v1123, %v3014
      %v3891 = vmul.f32 %v1123, %v3015
      %v3892 = vmul.f32 %v1123, %v3016
      %v3893 = vmul.f32 %v1123, %v3017
      %v3894 = vmul.f32 %v1123, %v3018
      %v3895 = vmul.f32 %v1123, %v3019
      %v3896 = vadd.f32 %v3860, %v3890
      %v3897 = vadd.f32 %v3861, %v3891
      %v3898 = vadd.f32 %v3862, %v3892
      %v3899 = vadd.f32 %v3863, %v3893
      %v3900 = vadd.f32 %v3864, %v3894
      %v3901 = vadd.f32 %v3865, %v3895
      %v3902 = vmul.f32 %v1136, %v3014
      %v3903 = vmul.f32 %v1136, %v3015
      %v3904 = vmul.f32 %v1136, %v3016
      %v3905 = vmul.f32 %v1136, %v3017
      %v3906 = vmul.f32 %v1136, %v3018
      %v3907 = vmul.f32 %v1136, %v3019
      %v3908 = vadd.f32 %v3872, %v3902
      %v3909 = vadd.f32 %v3873, %v3903
      %v3910 = vadd.f32 %v3874, %v3904
      %v3911 = vadd.f32 %v3875, %v3905
      %v3912 = vadd.f32 %v3876, %v3906
      %v3913 = vadd.f32 %v3877, %v3907
      %v3914 = vmul.f32 %v1149, %v3014
      %v3915 = vmul.f32 %v1149, %v3015
      %v3916 = vmul.f32 %v1149, %v3016
      %v3917 = vmul.f32 %v1149, %v3017
      %v3918 = vmul.f32 %v1149, %v3018
      %v3919 = vmul.f32 %v1149, %v3019
      %v3920 = vadd.f32 %v3884, %v3914
      %v3921 = vadd.f32 %v3885, %v3915
      %v3922 = vadd.f32 %v3886, %v3916
      %v3923 = vadd.f32 %v3887, %v3917
      %v3924 = vadd.f32 %v3888, %v3918
      %v3925 = vadd.f32 %v3889, %v3919
      %v3926 = vmul.f32 %v1168, %v3056
      %v3927 = vmul.f32 %v1168, %v3057
      %v3928 = vmul.f32 %v1168, %v3058
      %v3929 = vmul.f32 %v1168, %v3059
      %v3930 = vmul.f32 %v1168, %v3060
      %v3931 = vmul.f32 %v1168, %v3061
      %v3932 = vadd.f32 %v3896, %v3926
      %v3933 = vadd.f32 %v3897, %v3927
      %v3934 = vadd.f32 %v3898, %v3928
      %v3935 = vadd.f32 %v3899, %v3929
      %v3936 = vadd.f32 %v3900, %v3930
      %v3937 = vadd.f32 %v3901, %v3931
      %v3938 = vmul.f32 %v1181, %v3056
      %v3939 = vmul.f32 %v1181, %v3057
      %v3940 = vmul.f32 %v1181, %v3058
      %v3941 = vmul.f32 %v1181, %v3059
      %v3942 = vmul.f32 %v1181, %v3060
      %v3943 = vmul.f32 %v1181, %v3061
      %v3944 = vadd.f32 %v3908, %v3938
      %v3945 = vadd.f32 %v3909, %v3939
      %v3946 = vadd.f32 %v3910, %v3940
      %v3947 = vadd.f32 %v3911, %v3941
      %v3948 = vadd.f32 %v3912, %v3942
      %v3949 = vadd.f32 %v3913, %v3943
      %v3950 = vmul.f32 %v1194, %v3056
      %v3951 = vmul.f32 %v1194, %v3057
      %v3952 = vmul.f32 %v1194, %v3058
      %v3953 = vmul.f32 %v1194, %v3059
      %v3954 = vmul.f32 %v1194, %v3060
      %v3955 = vmul.f32 %v1194, %v3061
      %v3956 = vadd.f32 %v3920, %v3950
      %v3957 = vadd.f32 %v3921, %v3951
      %v3958 = vadd.f32 %v3922, %v3952
      %v3959 = vadd.f32 %v3923, %v3953
      %v3960 = vadd.f32 %v3924, %v3954
      %v3961 = vadd.f32 %v3925, %v3955
      %v3962 = vld [vmem:[%s2929 + $0x2] sm:$0xff]
      %v3963 = vld [vmem:[%s2929 + $0xa] sm:$0xff]
      %v3964 = vld [vmem:[%s2929 + $0x12] sm:$0xff]
      %v3965 = vld [vmem:[%s2929 + $0x1a] sm:$0xff]
      %v3966 = vld [vmem:[%s2929 + $0x22] sm:$0xff]
      %v3967 = vld [vmem:[%s2929 + $0x2a] sm:$0x7]
      %v3968 = vmul.f32 %v1213, %v3962
      %v3969 = vmul.f32 %v1213, %v3963
      %v3970 = vmul.f32 %v1213, %v3964
      %v3971 = vmul.f32 %v1213, %v3965
      %v3972 = vmul.f32 %v1213, %v3966
      %v3973 = vmul.f32 %v1213, %v3967
      %v3974 = vadd.f32 %v3932, %v3968
      %v3975 = vadd.f32 %v3933, %v3969
      %v3976 = vadd.f32 %v3934, %v3970
      %v3977 = vadd.f32 %v3935, %v3971
      %v3978 = vadd.f32 %v3936, %v3972
      %v3979 = vadd.f32 %v3937, %v3973
      %v3980 = vmul.f32 %v1226, %v3962
      %v3981 = vmul.f32 %v1226, %v3963
      %v3982 = vmul.f32 %v1226, %v3964
      %v3983 = vmul.f32 %v1226, %v3965
      %v3984 = vmul.f32 %v1226, %v3966
      %v3985 = vmul.f32 %v1226, %v3967
      %v3986 = vadd.f32 %v3944, %v3980
      %v3987 = vadd.f32 %v3945, %v3981
      %v3988 = vadd.f32 %v3946, %v3982
      %v3989 = vadd.f32 %v3947, %v3983
      %v3990 = vadd.f32 %v3948, %v3984
      %v3991 = vadd.f32 %v3949, %v3985
      %v3992 = vmul.f32 %v1239, %v3962
      %v3993 = vmul.f32 %v1239, %v3963
      %v3994 = vmul.f32 %v1239, %v3964
      %v3995 = vmul.f32 %v1239, %v3965
      %v3996 = vmul.f32 %v1239, %v3966
      %v3997 = vmul.f32 %v1239, %v3967
      %v3998 = vadd.f32 %v3956, %v3992
      %v3999 = vadd.f32 %v3957, %v3993
      %v4000 = vadd.f32 %v3958, %v3994
      %v4001 = vadd.f32 %v3959, %v3995
      %v4002 = vadd.f32 %v3960, %v3996
      %v4003 = vadd.f32 %v3961, %v3997
      %v4004 = vmax.f32 %v3098, %v3974
      %v4005 = vmax.f32 %v3099, %v3975
      %v4006 = vmax.f32 %v3100, %v3976
      %v4007 = vmax.f32 %v3101, %v3977
      %v4008 = vmax.f32 %v3102, %v3978
      %v4009 = vmax.f32 %v3103, %v3979
      %v4010 = vmax.f32 %v3104, %v3986
      %v4011 = vmax.f32 %v3105, %v3987
      %v4012 = vmax.f32 %v3106, %v3988
      %v4013 = vmax.f32 %v3107, %v3989
      %v4014 = vmax.f32 %v3108, %v3990
      %v4015 = vmax.f32 %v3109, %v3991
      %v4016 = vmax.f32 %v3110, %v3998
      %v4017 = vmax.f32 %v3111, %v3999
      %v4018 = vmax.f32 %v3112, %v4000
      %v4019 = vmax.f32 %v3113, %v4001
      %v4020 = vmax.f32 %v3114, %v4002
      %v4021 = vmax.f32 %v3115, %v4003
      %v4022 = vstv %s114
      %v4023 = vadd.f32 %v4004, %v4022
      %v4024 = vadd.f32 %v4005, %v4022
      %v4025 = vadd.f32 %v4006, %v4022
      %v4026 = vadd.f32 %v4007, %v4022
      %v4027 = vadd.f32 %v4008, %v4022
      %v4028 = vadd.f32 %v4009, %v4022
      %v4029 = vmax.f32 %v4023, 0.0
      %v4030 = vmax.f32 %v4024, 0.0
      %v4031 = vmax.f32 %v4025, 0.0
      %v4032 = vmax.f32 %v4026, 0.0
      %v4033 = vmax.f32 %v4027, 0.0
      %v4034 = vmax.f32 %v4028, 0.0
      %s4035 = scalar_lea.vmem %s3, %s123
      %vm4036 = vcmask 15360
      %4037 = vst.msk [vmem:[%s4035] sm:$0xff] %vm4036, %v4029
      %4038 = vst.msk [vmem:[%s4035 + $0x8] sm:$0xff] %vm4036, %v4030
      %4039 = vst.msk [vmem:[%s4035 + $0x10] sm:$0xff] %vm4036, %v4031
      %4040 = vst.msk [vmem:[%s4035 + $0x18] sm:$0xff] %vm4036, %v4032
      %4041 = vst.msk [vmem:[%s4035 + $0x20] sm:$0xff] %vm4036, %v4033
      %vm4042 = vcmask 10240
      %4043 = vst.msk [vmem:[%s4035 + $0x28] sm:$0x7] %vm4042, %v4034
      %v4044 = vstv %s115
      %v4045 = vadd.f32 %v4010, %v4044
      %v4046 = vadd.f32 %v4011, %v4044
      %v4047 = vadd.f32 %v4012, %v4044
      %v4048 = vadd.f32 %v4013, %v4044
      %v4049 = vadd.f32 %v4014, %v4044
      %v4050 = vadd.f32 %v4015, %v4044
      %v4051 = vmax.f32 %v4045, 0.0
      %v4052 = vmax.f32 %v4046, 0.0
      %v4053 = vmax.f32 %v4047, 0.0
      %v4054 = vmax.f32 %v4048, 0.0
      %v4055 = vmax.f32 %v4049, 0.0
      %v4056 = vmax.f32 %v4050, 0.0
      %s4057 = sadd.s32 %s123, 2064
      %s4058 = scalar_lea.vmem %s3, %s4057
      %4059 = vst.msk [vmem:[%s4058] sm:$0xff] %vm4036, %v4051
      %4060 = vst.msk [vmem:[%s4058 + $0x8] sm:$0xff] %vm4036, %v4052
      %4061 = vst.msk [vmem:[%s4058 + $0x10] sm:$0xff] %vm4036, %v4053
      %4062 = vst.msk [vmem:[%s4058 + $0x18] sm:$0xff] %vm4036, %v4054
      %4063 = vst.msk [vmem:[%s4058 + $0x20] sm:$0xff] %vm4036, %v4055
      %4064 = vst.msk [vmem:[%s4058 + $0x28] sm:$0x7] %vm4042, %v4056
      %v4065 = vstv %s116
      %v4066 = vadd.f32 %v4016, %v4065
      %v4067 = vadd.f32 %v4017, %v4065
      %v4068 = vadd.f32 %v4018, %v4065
      %v4069 = vadd.f32 %v4019, %v4065
      %v4070 = vadd.f32 %v4020, %v4065
      %v4071 = vadd.f32 %v4021, %v4065
      %v4072 = vmax.f32 %v4066, 0.0
      %v4073 = vmax.f32 %v4067, 0.0
      %v4074 = vmax.f32 %v4068, 0.0
      %v4075 = vmax.f32 %v4069, 0.0
      %v4076 = vmax.f32 %v4070, 0.0
      %v4077 = vmax.f32 %v4071, 0.0
      %s4078 = sadd.s32 %s123, 4128
      %s4079 = scalar_lea.vmem %s3, %s4078
      %4080 = vst.msk [vmem:[%s4079] sm:$0xff] %vm4036, %v4072
      %4081 = vst.msk [vmem:[%s4079 + $0x8] sm:$0xff] %vm4036, %v4073
      %4082 = vst.msk [vmem:[%s4079 + $0x10] sm:$0xff] %vm4036, %v4074
      %4083 = vst.msk [vmem:[%s4079 + $0x18] sm:$0xff] %vm4036, %v4075
      %4084 = vst.msk [vmem:[%s4079 + $0x20] sm:$0xff] %vm4036, %v4076
      %4085 = vst.msk [vmem:[%s4079 + $0x28] sm:$0x7] %vm4042, %v4077
    $region26: #{tpu_custom_call.1} parent=1 // loop_footer
      %s122 = sadd.s32 1, %s118
    $region27: #{tpu_custom_call.1} parent=1 // loop_footer_branch
      %117 = sbr.rel target = $region23
    $region28: #{tpu_custom_call.1} parent=1 // loop_exit
      _
    // Predicated region
    $region29: #{tpu_custom_call.1} parent=1 // pred_check
      _
    $region30: #{tpu_custom_call.1} parent=1 // pred_check_branch
      %4087 = sbr.rel (0) target = $region32
    $region31: #{tpu_custom_call.1} parent=1 // pred_region
      _
    $region32: #{tpu_custom_call.1} parent=1 // pred_fallthru
      _
    // Predicated region
    $region33: #{tpu_custom_call.1} parent=1 // pred_check
      _
    $region34: #{tpu_custom_call.1} parent=1 // pred_check_branch
      %4089 = sbr.rel (0) target = $region36
    $region35: #{tpu_custom_call.1} parent=1 // pred_region
      _
    $region36: #{tpu_custom_call.1} parent=1 // pred_fallthru
      _
    %4090 = vsyncpa [#allocation3], 1
    %4091 = vsyncpa [#allocation5], 1

</llo_original>
